<compile_context>
chip_gen: v7x
topology: tpu7x:2x2x1
jax: 0.10.0
libtpu: 0.0.40
codegen_flags: <defaults>
</compile_context>

<pallas_src>
import jax
import jax.numpy as jnp
from jax.experimental import pallas as pl
from jax.experimental.pallas import tpu as pltpu


# ------------------------------ Pallas kernel -------------------------------

def _residual_block_kernel(x_ref, w1_ref, b1_ref, w2_ref, b2_ref, out_ref,
                           xpad_s, hpad_s):
    """Fused ResidualBlock forward for one batch element (NHWC).

    x_ref  : (1, H, W, C)     unpadded input tile (also used as the identity)
    w1_ref : (9*C, C)         conv1 weights, im2col row order (kh,kw,ci),
                              BN1 scale pre-folded
    b1_ref : (1, C)           folded BN1 bias
    w2_ref : (9*C, C)         conv2 weights, BN2 scale pre-folded
    b2_ref : (1, C)           folded BN2 bias
    out_ref: (1, H, W, C)
    xpad_s : VMEM (H+2, W+2, C) scratch — zero-padded input
    hpad_s : VMEM (H+2, W+2, C) scratch — zero-padded intermediate h
    """
    _, H, W, C = out_ref.shape

    def im2col(xp):
        # xp: (H+2, W+2, C) value.  Build the (H*W, 9*C) patch matrix:
        # the (H, W, C) -> (H*W, C) reshape is layout-trivial (last dim kept,
        # W a multiple of 8 sublanes); the concat runs along the lane axis.
        cols = []
        for kh in range(3):
            for kw in range(3):
                cols.append(xp[kh:kh + H, kw:kw + W, :].reshape(H * W, C))
        return jnp.concatenate(cols, axis=-1)            # (H*W, 9*C)

    x = x_ref[0]                                          # (H, W, C)

    # ---- in-kernel zero padding of the input (no host-side jnp.pad) ----
    # Zero every iteration so each megacore grid point is self-contained.
    xpad_s[...] = jnp.zeros_like(xpad_s)
    xpad_s[1:H + 1, 1:W + 1, :] = x

    # ---- conv1 as ONE im2col MXU matmul + folded BN1 bias + ReLU ----
    p1 = im2col(xpad_s[...])                              # (H*W, 9*C)
    h = jnp.dot(p1, w1_ref[...], preferred_element_type=jnp.float32)
    h = jnp.maximum(h + b1_ref[...], 0.0)                 # (H*W, C)

    # ---- intermediate stays in VMEM; pad it in place for conv2 ----
    hpad_s[...] = jnp.zeros_like(hpad_s)
    hpad_s[1:H + 1, 1:W + 1, :] = h.reshape(H, W, C)

    # ---- conv2 + folded BN2 bias + residual add + final ReLU ----
    p2 = im2col(hpad_s[...])                              # (H*W, 9*C)
    y = jnp.dot(p2, w2_ref[...], preferred_element_type=jnp.float32)
    y = y + b2_ref[...] + x.reshape(H * W, C)             # out += identity
    y = jnp.maximum(y, 0.0)

    out_ref[0] = y.reshape(H, W, C).astype(out_ref.dtype)


# ------------------------------ pallas_call glue -----------------------------

def _fold_bn_into_weights(w, gamma, beta, mean, var, eps=1e-5):
    """Fold BN scale into conv weights; return im2col weight + bias."""
    scale = gamma / jnp.sqrt(var + eps)                   # (Cout,)
    bias = beta - mean * scale                            # (Cout,)
    kh, kw, cin, cout = w.shape
    w_folded = (w * scale).reshape(kh * kw * cin, cout)   # rows = (kh, kw, ci)
    return w_folded, bias.reshape(1, cout)


def residual_block(x_nchw, params):
    """ResidualBlock forward (stride=1, downsample=None). NCHW in / NCHW out."""
    N, C, H, W = x_nchw.shape
    assert params['w1'].shape == (3, 3, C, C), "kernel assumes Cin == Cout, 3x3"
    assert params['w2'].shape == (3, 3, C, C)

    x = jnp.transpose(x_nchw, (0, 2, 3, 1))               # NCHW -> NHWC

    w1, b1 = _fold_bn_into_weights(params['w1'], params['gamma1'],
                                   params['beta1'], params['mean1'],
                                   params['var1'])
    w2, b2 = _fold_bn_into_weights(params['w2'], params['gamma2'],
                                   params['beta2'], params['mean2'],
                                   params['var2'])

    out = pl.pallas_call(
        _residual_block_kernel,
        out_shape=jax.ShapeDtypeStruct((N, H, W, C), jnp.float32),
        grid=(N,),
        in_specs=[
            pl.BlockSpec((1, H, W, C), lambda n: (n, 0, 0, 0)),   # x (+identity)
            pl.BlockSpec((9 * C, C), lambda n: (0, 0)),           # w1 (BN folded)
            pl.BlockSpec((1, C), lambda n: (0, 0)),               # b1
            pl.BlockSpec((9 * C, C), lambda n: (0, 0)),           # w2 (BN folded)
            pl.BlockSpec((1, C), lambda n: (0, 0)),               # b2
        ],
        out_specs=pl.BlockSpec((1, H, W, C), lambda n: (n, 0, 0, 0)),
        scratch_shapes=[
            pltpu.VMEM((H + 2, W + 2, C), jnp.float32),           # padded x
            pltpu.VMEM((H + 2, W + 2, C), jnp.float32),           # padded h
        ],
        compiler_params=pltpu.CompilerParams(
            dimension_semantics=("parallel",)),
    )(x, w1, b1, w2, b2)

    return jnp.transpose(out, (0, 3, 1, 2))               # NHWC -> NCHW


# --------------------------------- reference ---------------------------------

def _reference(x_nchw, params, eps=1e-5):
    x = jnp.transpose(x_nchw, (0, 2, 3, 1))
    dn = ('NHWC', 'HWIO', 'NHWC')

    def conv(v, w):
        return jax.lax.conv_general_dilated(v, w, (1, 1), 'SAME',
                                            dimension_numbers=dn)

    def bn(v, g, b, m, s):
        return (v - m) / jnp.sqrt(s + eps) * g + b

    h = conv(x, params['w1'])
    h = bn(h, params['gamma1'], params['beta1'], params['mean1'], params['var1'])
    h = jnp.maximum(h, 0.0)
    h = conv(h, params['w2'])
    h = bn(h, params['gamma2'], params['beta2'], params['mean2'], params['var2'])
    h = jnp.maximum(h + x, 0.0)
    return jnp.transpose(h, (0, 3, 1, 2))


# ----------------------------------- main ------------------------------------

if __name__ == "__main__":
    N, C, H, W = 2, 4, 16, 16                             # in_ch == out_ch, stride=1
    key = jax.random.PRNGKey(0)
    ks = jax.random.split(key, 11)

    x = jax.random.normal(ks[0], (N, C, H, W), jnp.float32)

    params = {
        # conv weights stored HWIO (3,3,Cin,Cout); correlation, matches nn.Conv2d
        'w1': 0.1 * jax.random.normal(ks[1], (3, 3, C, C), jnp.float32),
        'w2': 0.1 * jax.random.normal(ks[2], (3, 3, C, C), jnp.float32),
        # BatchNorm2d params + running stats (deterministic synthetic init)
        'gamma1': 1.0 + 0.1 * jax.random.normal(ks[3], (C,), jnp.float32),
        'beta1': 0.1 * jax.random.normal(ks[4], (C,), jnp.float32),
        'mean1': 0.1 * jax.random.normal(ks[5], (C,), jnp.float32),
        'var1': jax.random.uniform(ks[6], (C,), jnp.float32, 0.5, 1.5),
        'gamma2': 1.0 + 0.1 * jax.random.normal(ks[7], (C,), jnp.float32),
        'beta2': 0.1 * jax.random.normal(ks[8], (C,), jnp.float32),
        'mean2': 0.1 * jax.random.normal(ks[9], (C,), jnp.float32),
        'var2': jax.random.uniform(ks[10], (C,), jnp.float32, 0.5, 1.5),
    }

    out = jax.block_until_ready(residual_block(x, params))
    ref = jax.block_until_ready(_reference(x, params))

    assert out.shape == (N, C, H, W)
    assert jnp.allclose(out, ref, atol=1e-3, rtol=1e-3), \
        f"max abs err {jnp.max(jnp.abs(out - ref))}"

    print("KERNEL_OK")
</pallas_src>

<mosaic_0001>
module attributes {stable_mosaic.version = 11 : i64} {
  func.func @_residual_block_kernel(%arg0: i32, %arg1: memref<1x16x16x4xf32, #tpu.memory_space<vmem>>, %arg2: memref<36x4xf32, #tpu.memory_space<vmem>>, %arg3: memref<1x4xf32, #tpu.memory_space<vmem>>, %arg4: memref<36x4xf32, #tpu.memory_space<vmem>>, %arg5: memref<1x4xf32, #tpu.memory_space<vmem>>, %arg6: memref<1x16x16x4xf32, #tpu.memory_space<vmem>>, %arg7: memref<18x18x4xf32, #tpu.memory_space<vmem>>, %arg8: memref<18x18x4xf32, #tpu.memory_space<vmem>>) attributes {dimension_semantics = [#tpu.dimension_semantics<parallel>], iteration_bounds = array<i64: 2>, scalar_prefetch = 0 : i64, scratch_operands = 2 : i64, tpu.core_type = #tpu.core_type<tc>, window_params = [{transform_indices = @transform_0, window_bounds = array<i64: 1, 16, 16, 4>}, {pipeline_mode = #tpu.pipeline_mode<synchronous>, transform_indices = @transform_1, window_bounds = array<i64: 36, 4>}, {pipeline_mode = #tpu.pipeline_mode<synchronous>, transform_indices = @transform_2, window_bounds = array<i64: 1, 4>}, {pipeline_mode = #tpu.pipeline_mode<synchronous>, transform_indices = @transform_3, window_bounds = array<i64: 36, 4>}, {pipeline_mode = #tpu.pipeline_mode<synchronous>, transform_indices = @transform_4, window_bounds = array<i64: 1, 4>}, {transform_indices = @transform_5, window_bounds = array<i64: 1, 16, 16, 4>}]} {
    %c0 = arith.constant 0 : index
    %c0_0 = arith.constant 0 : index
    %c0_1 = arith.constant 0 : index
    %c0_2 = arith.constant 0 : index
    %0 = vector.load %arg1[%c0, %c0_0, %c0_1, %c0_2] : memref<1x16x16x4xf32, #tpu.memory_space<vmem>>, vector<1x16x16x4xf32>
    %1 = vector.shape_cast %0 : vector<1x16x16x4xf32> to vector<16x16x4xf32>
    %cst = arith.constant 0.000000e+00 : f32
    %2 = vector.broadcast %cst : f32 to vector<18x18x4xf32>
    %c0_3 = arith.constant 0 : index
    %c0_4 = arith.constant 0 : index
    %c0_5 = arith.constant 0 : index
    %3 = vector.load %arg7[%c0_3, %c0_4, %c0_5] : memref<18x18x4xf32, #tpu.memory_space<vmem>>, vector<18x18x4xf32>
    tpu.vector_store %arg7[%c0_3, %c0_4, %c0_5], %2 {strides = array<i32>} : memref<18x18x4xf32, #tpu.memory_space<vmem>>, vector<18x18x4xf32>,
    %c1 = arith.constant 1 : index
    %c1_6 = arith.constant 1 : index
    %c0_7 = arith.constant 0 : index
    %4 = vector.load %arg7[%c1, %c1_6, %c0_7] : memref<18x18x4xf32, #tpu.memory_space<vmem>>, vector<16x16x4xf32>
    tpu.vector_store %arg7[%c1, %c1_6, %c0_7], %1 {strides = array<i32>} : memref<18x18x4xf32, #tpu.memory_space<vmem>>, vector<16x16x4xf32>,
    %c0_8 = arith.constant 0 : index
    %c0_9 = arith.constant 0 : index
    %c0_10 = arith.constant 0 : index
    %5 = vector.load %arg7[%c0_8, %c0_9, %c0_10] : memref<18x18x4xf32, #tpu.memory_space<vmem>>, vector<18x18x4xf32>
    %6 = vector.extract_strided_slice %5 {offsets = [0, 0, 0], sizes = [16, 16, 4], strides = [1, 1, 1]} : vector<18x18x4xf32> to vector<16x16x4xf32>
    %7 = vector.shape_cast %6 : vector<16x16x4xf32> to vector<256x4xf32>
    %8 = vector.extract_strided_slice %5 {offsets = [0, 1, 0], sizes = [16, 16, 4], strides = [1, 1, 1]} : vector<18x18x4xf32> to vector<16x16x4xf32>
    %9 = vector.shape_cast %8 : vector<16x16x4xf32> to vector<256x4xf32>
    %10 = vector.extract_strided_slice %5 {offsets = [0, 2, 0], sizes = [16, 16, 4], strides = [1, 1, 1]} : vector<18x18x4xf32> to vector<16x16x4xf32>
    %11 = vector.shape_cast %10 : vector<16x16x4xf32> to vector<256x4xf32>
    %12 = vector.extract_strided_slice %5 {offsets = [1, 0, 0], sizes = [16, 16, 4], strides = [1, 1, 1]} : vector<18x18x4xf32> to vector<16x16x4xf32>
    %13 = vector.shape_cast %12 : vector<16x16x4xf32> to vector<256x4xf32>
    %14 = vector.extract_strided_slice %5 {offsets = [1, 1, 0], sizes = [16, 16, 4], strides = [1, 1, 1]} : vector<18x18x4xf32> to vector<16x16x4xf32>
    %15 = vector.shape_cast %14 : vector<16x16x4xf32> to vector<256x4xf32>
    %16 = vector.extract_strided_slice %5 {offsets = [1, 2, 0], sizes = [16, 16, 4], strides = [1, 1, 1]} : vector<18x18x4xf32> to vector<16x16x4xf32>
    %17 = vector.shape_cast %16 : vector<16x16x4xf32> to vector<256x4xf32>
    %18 = vector.extract_strided_slice %5 {offsets = [2, 0, 0], sizes = [16, 16, 4], strides = [1, 1, 1]} : vector<18x18x4xf32> to vector<16x16x4xf32>
    %19 = vector.shape_cast %18 : vector<16x16x4xf32> to vector<256x4xf32>
    %20 = vector.extract_strided_slice %5 {offsets = [2, 1, 0], sizes = [16, 16, 4], strides = [1, 1, 1]} : vector<18x18x4xf32> to vector<16x16x4xf32>
    %21 = vector.shape_cast %20 : vector<16x16x4xf32> to vector<256x4xf32>
    %22 = vector.extract_strided_slice %5 {offsets = [2, 2, 0], sizes = [16, 16, 4], strides = [1, 1, 1]} : vector<18x18x4xf32> to vector<16x16x4xf32>
    %23 = vector.shape_cast %22 : vector<16x16x4xf32> to vector<256x4xf32>
    %24 = tpu.concatenate %7, %9, %11, %13, %15, %17, %19, %21, %23 in 1 : vector<256x4xf32>, vector<256x4xf32>, vector<256x4xf32>, vector<256x4xf32>, vector<256x4xf32>, vector<256x4xf32>, vector<256x4xf32>, vector<256x4xf32>, vector<256x4xf32> -> vector<256x36xf32>
    %c0_11 = arith.constant 0 : index
    %c0_12 = arith.constant 0 : index
    %25 = vector.load %arg2[%c0_11, %c0_12] : memref<36x4xf32, #tpu.memory_space<vmem>>, vector<36x4xf32>
    %cst_13 = arith.constant dense<0.000000e+00> : vector<256x4xf32>
    %26 = tpu.matmul %24, %25, %cst_13 {dimension_numbers = #tpu.dot_dimension_numbers<[1], [0], [0], [1], [0, 0, 1, 1], [], []>} : vector<256x36xf32>, vector<36x4xf32>, vector<256x4xf32> -> vector<256x4xf32>
    %c0_14 = arith.constant 0 : index
    %c0_15 = arith.constant 0 : index
    %27 = vector.load %arg3[%c0_14, %c0_15] : memref<1x4xf32, #tpu.memory_space<vmem>>, vector<1x4xf32>
    %28 = vector.broadcast %27 : vector<1x4xf32> to vector<256x4xf32>
    %29 = arith.addf %26, %28 : vector<256x4xf32>
    %cst_16 = arith.constant 0.000000e+00 : f32
    %30 = vector.broadcast %cst_16 : f32 to vector<256x4xf32>
    %31 = arith.maximumf %29, %30 : vector<256x4xf32>
    %cst_17 = arith.constant 0.000000e+00 : f32
    %32 = vector.broadcast %cst_17 : f32 to vector<18x18x4xf32>
    %c0_18 = arith.constant 0 : index
    %c0_19 = arith.constant 0 : index
    %c0_20 = arith.constant 0 : index
    %33 = vector.load %arg8[%c0_18, %c0_19, %c0_20] : memref<18x18x4xf32, #tpu.memory_space<vmem>>, vector<18x18x4xf32>
    tpu.vector_store %arg8[%c0_18, %c0_19, %c0_20], %32 {strides = array<i32>} : memref<18x18x4xf32, #tpu.memory_space<vmem>>, vector<18x18x4xf32>,
    %34 = vector.shape_cast %31 : vector<256x4xf32> to vector<16x16x4xf32>
    %c1_21 = arith.constant 1 : index
    %c1_22 = arith.constant 1 : index
    %c0_23 = arith.constant 0 : index
    %35 = vector.load %arg8[%c1_21, %c1_22, %c0_23] : memref<18x18x4xf32, #tpu.memory_space<vmem>>, vector<16x16x4xf32>
    tpu.vector_store %arg8[%c1_21, %c1_22, %c0_23], %34 {strides = array<i32>} : memref<18x18x4xf32, #tpu.memory_space<vmem>>, vector<16x16x4xf32>,
    %c0_24 = arith.constant 0 : index
    %c0_25 = arith.constant 0 : index
    %c0_26 = arith.constant 0 : index
    %36 = vector.load %arg8[%c0_24, %c0_25, %c0_26] : memref<18x18x4xf32, #tpu.memory_space<vmem>>, vector<18x18x4xf32>
    %37 = vector.extract_strided_slice %36 {offsets = [0, 0, 0], sizes = [16, 16, 4], strides = [1, 1, 1]} : vector<18x18x4xf32> to vector<16x16x4xf32>
    %38 = vector.shape_cast %37 : vector<16x16x4xf32> to vector<256x4xf32>
    %39 = vector.extract_strided_slice %36 {offsets = [0, 1, 0], sizes = [16, 16, 4], strides = [1, 1, 1]} : vector<18x18x4xf32> to vector<16x16x4xf32>
    %40 = vector.shape_cast %39 : vector<16x16x4xf32> to vector<256x4xf32>
    %41 = vector.extract_strided_slice %36 {offsets = [0, 2, 0], sizes = [16, 16, 4], strides = [1, 1, 1]} : vector<18x18x4xf32> to vector<16x16x4xf32>
    %42 = vector.shape_cast %41 : vector<16x16x4xf32> to vector<256x4xf32>
    %43 = vector.extract_strided_slice %36 {offsets = [1, 0, 0], sizes = [16, 16, 4], strides = [1, 1, 1]} : vector<18x18x4xf32> to vector<16x16x4xf32>
    %44 = vector.shape_cast %43 : vector<16x16x4xf32> to vector<256x4xf32>
    %45 = vector.extract_strided_slice %36 {offsets = [1, 1, 0], sizes = [16, 16, 4], strides = [1, 1, 1]} : vector<18x18x4xf32> to vector<16x16x4xf32>
    %46 = vector.shape_cast %45 : vector<16x16x4xf32> to vector<256x4xf32>
    %47 = vector.extract_strided_slice %36 {offsets = [1, 2, 0], sizes = [16, 16, 4], strides = [1, 1, 1]} : vector<18x18x4xf32> to vector<16x16x4xf32>
    %48 = vector.shape_cast %47 : vector<16x16x4xf32> to vector<256x4xf32>
    %49 = vector.extract_strided_slice %36 {offsets = [2, 0, 0], sizes = [16, 16, 4], strides = [1, 1, 1]} : vector<18x18x4xf32> to vector<16x16x4xf32>
    %50 = vector.shape_cast %49 : vector<16x16x4xf32> to vector<256x4xf32>
    %51 = vector.extract_strided_slice %36 {offsets = [2, 1, 0], sizes = [16, 16, 4], strides = [1, 1, 1]} : vector<18x18x4xf32> to vector<16x16x4xf32>
    %52 = vector.shape_cast %51 : vector<16x16x4xf32> to vector<256x4xf32>
    %53 = vector.extract_strided_slice %36 {offsets = [2, 2, 0], sizes = [16, 16, 4], strides = [1, 1, 1]} : vector<18x18x4xf32> to vector<16x16x4xf32>
    %54 = vector.shape_cast %53 : vector<16x16x4xf32> to vector<256x4xf32>
    %55 = tpu.concatenate %38, %40, %42, %44, %46, %48, %50, %52, %54 in 1 : vector<256x4xf32>, vector<256x4xf32>, vector<256x4xf32>, vector<256x4xf32>, vector<256x4xf32>, vector<256x4xf32>, vector<256x4xf32>, vector<256x4xf32>, vector<256x4xf32> -> vector<256x36xf32>
    %c0_27 = arith.constant 0 : index
    %c0_28 = arith.constant 0 : index
    %56 = vector.load %arg4[%c0_27, %c0_28] : memref<36x4xf32, #tpu.memory_space<vmem>>, vector<36x4xf32>
    %cst_29 = arith.constant dense<0.000000e+00> : vector<256x4xf32>
    %57 = tpu.matmul %55, %56, %cst_29 {dimension_numbers = #tpu.dot_dimension_numbers<[1], [0], [0], [1], [0, 0, 1, 1], [], []>} : vector<256x36xf32>, vector<36x4xf32>, vector<256x4xf32> -> vector<256x4xf32>
    %c0_30 = arith.constant 0 : index
    %c0_31 = arith.constant 0 : index
    %58 = vector.load %arg5[%c0_30, %c0_31] : memref<1x4xf32, #tpu.memory_space<vmem>>, vector<1x4xf32>
    %59 = vector.broadcast %58 : vector<1x4xf32> to vector<256x4xf32>
    %60 = arith.addf %57, %59 : vector<256x4xf32>
    %61 = vector.shape_cast %1 : vector<16x16x4xf32> to vector<256x4xf32>
    %62 = arith.addf %60, %61 : vector<256x4xf32>
    %cst_32 = arith.constant 0.000000e+00 : f32
    %63 = vector.broadcast %cst_32 : f32 to vector<256x4xf32>
    %64 = arith.maximumf %62, %63 : vector<256x4xf32>
    %65 = vector.shape_cast %64 : vector<256x4xf32> to vector<16x16x4xf32>
    %c0_33 = arith.constant 0 : index
    %c0_34 = arith.constant 0 : index
    %c0_35 = arith.constant 0 : index
    %c0_36 = arith.constant 0 : index
    %66 = vector.load %arg6[%c0_33, %c0_34, %c0_35, %c0_36] : memref<1x16x16x4xf32, #tpu.memory_space<vmem>>, vector<1x16x16x4xf32>
    %67 = vector.shape_cast %66 : vector<1x16x16x4xf32> to vector<16x16x4xf32>
    %68 = vector.shape_cast %65 : vector<16x16x4xf32> to vector<1x16x16x4xf32>
    tpu.vector_store %arg6[%c0_33, %c0_34, %c0_35, %c0_36], %68 {strides = array<i32>} : memref<1x16x16x4xf32, #tpu.memory_space<vmem>>, vector<1x16x16x4xf32>,
    return
  }
  func.func @transform_0(%arg0: i32) -> (i32, i32, i32, i32) {
    %c0_i32 = arith.constant 0 : i32
    %c0_i32_0 = arith.constant 0 : i32
    %c0_i32_1 = arith.constant 0 : i32
    %c0_i32_2 = arith.constant 0 : i32
    return %arg0, %c0_i32, %c0_i32_0, %c0_i32_1 : i32, i32, i32, i32
  }
  func.func @transform_1(%arg0: i32) -> (i32, i32) {
    %c0_i32 = arith.constant 0 : i32
    %c0_i32_0 = arith.constant 0 : i32
    %c0_i32_1 = arith.constant 0 : i32
    return %c0_i32, %c0_i32_0 : i32, i32
  }
  func.func @transform_2(%arg0: i32) -> (i32, i32) {
    %c0_i32 = arith.constant 0 : i32
    %c0_i32_0 = arith.constant 0 : i32
    %c0_i32_1 = arith.constant 0 : i32
    return %c0_i32, %c0_i32_0 : i32, i32
  }
  func.func @transform_3(%arg0: i32) -> (i32, i32) {
    %c0_i32 = arith.constant 0 : i32
    %c0_i32_0 = arith.constant 0 : i32
    %c0_i32_1 = arith.constant 0 : i32
    return %c0_i32, %c0_i32_0 : i32, i32
  }
  func.func @transform_4(%arg0: i32) -> (i32, i32) {
    %c0_i32 = arith.constant 0 : i32
    %c0_i32_0 = arith.constant 0 : i32
    %c0_i32_1 = arith.constant 0 : i32
    return %c0_i32, %c0_i32_0 : i32, i32
  }
  func.func @transform_5(%arg0: i32) -> (i32, i32, i32, i32) {
    %c0_i32 = arith.constant 0 : i32
    %c0_i32_0 = arith.constant 0 : i32
    %c0_i32_1 = arith.constant 0 : i32
    %c0_i32_2 = arith.constant 0 : i32
    return %arg0, %c0_i32, %c0_i32_0, %c0_i32_1 : i32, i32, i32, i32
  }
}

</mosaic_0001>

<llo_original>
// kernel: tpu_custom_call.1
$region0: #{tpu_custom_call.1}
  #allocation0 [shape = 'u32[]', space=smem, size = 0x4, offset = 0x4, fixed_abs, tag = 'smem constant byte address 0x4 - core index']
  #allocation1 [shape = 'u32[144,128]{1,0:T(1,128)}', space=vmem, size = 0x12000, scoped, tag = 'internal scratch']
  #allocation2 [shape = 'f32[18,18,4]{2,1,0:T(8,128)}', space=vmem, size = 0x36000, scoped, tag = 'scratch operand']
  #allocation3 [shape = 'f32[18,18,4]{2,1,0:T(8,128)}', space=vmem, size = 0x36000, scoped, tag = 'scratch operand']
  %s0 = inlined_call_operand.vmem [shape: f32[2,16,16,4], index: 0, kind: input, shape index: {}]
  %s1 = inlined_call_operand.vmem [shape: f32[36,4], index: 1, kind: input, shape index: {}]
  %s2 = inlined_call_operand.vmem [shape: f32[1,4], index: 2, kind: input, shape index: {}]
  %s3 = inlined_call_operand.vmem [shape: f32[36,4], index: 3, kind: input, shape index: {}]
  %s4 = inlined_call_operand.vmem [shape: f32[1,4], index: 4, kind: input, shape index: {}]
  %s5 = inlined_call_operand.vmem [shape: f32[2,16,16,4], index: 5, kind: output, shape index: {}]
  %s6 = sld [smem:[#allocation0]]
  $region53: #{tpu_custom_call.1} parent=0
    _
  %s8 = ssub.s32 1, %s6
  %s9 = scalar_select 0, %s8, %s6
  loop: start=0, step=1, limit=4
  $region2: #{tpu_custom_call.1} parent=0 // loop_pre_header
    _
  $region3: #{tpu_custom_call.1} parent=0 // loop_header
    %s11 = sphi 0, %s15
    %p12 = scmp.ge.s32.totalorder %s11, 4
    %s21 = sphi 0, %s23
    %s24 = sphi 0, %s21
    %s25 = sphi 0, %s24
    %s41 = sphi 0, %s25
    %s45 = sphi 0, %s45
    %s47 = sphi 0, %s45
    %s48 = sphi 0, %s47
    %s62 = sphi 0, %s48
    %s66 = sphi 0, %s66
    %s68 = sphi 0, %s66
    %s69 = sphi 0, %s68
    %s83 = sphi 0, %s69
    %s87 = sphi 0, %s87
    %s89 = sphi 0, %s87
    %s90 = sphi 0, %s89
    %s104 = sphi 0, %s90
    %s108 = sphi 0, %s108
    %s110 = sphi 0, %s108
    %s111 = sphi 0, %s110
    %s125 = sphi 0, %s111
    %s131 = sphi 0, %s133
    %s134 = sphi 0, %s131
    %s135 = sphi 0, %s134
    %s151 = sphi 0, %s135
  $region4: #{tpu_custom_call.1} parent=0 // loop_header_branch
    %14 = sbr.rel (%p12) target = $region8
  $region5: #{tpu_custom_call.1} parent=0 // loop_body
    %s16 = ssub.s32 %s11, 1
    %s17 = ssub.s32 %s11, 2
    %s18 = sadd.s32 %s11, 1
    %s19 = ssub.s32 %s11, %s18
    %p20 = scmp.eq.s32.totalorder %s19, 0
    %s22 = sadd.s32 %s21, 1
    %s23 = scalar_select %p20, %s21, %s22
    %p26 = pneg %p20
    %p27 = scmp.eq.s32.totalorder %s11, 1
    %p28 = por %p26, %p27
    %p29 = scmp.ne.s32.totalorder %s21, %s24
    %p30 = scmp.eq.s32.totalorder %s11, 0
    %p31 = por %p29, %p30
    %p32 = scmp.ne.s32.totalorder %s21, %s24
    %p33 = scmp.eq.s32.totalorder %s16, 1
    %p34 = por %p32, %p33
    %p35 = scmp.ne.s32.totalorder %s24, %s25
    %p36 = scmp.eq.s32.totalorder %s16, 0
    %p37 = por %p35, %p36
    %p38 = scmp.ne.s32.totalorder %s24, %s25
    %p39 = scmp.eq.s32.totalorder %s17, 1
    %p40 = por %p38, %p39
    %p42 = scmp.ne.s32.totalorder %s25, %s41
    %p43 = scmp.eq.s32.totalorder %s17, 0
    %p44 = por %p42, %p43
    %s46 = sadd.s32 %s45, 1
    %p49 = scmp.eq.s32.totalorder %s11, 1
    %p50 = scmp.ne.s32.totalorder %s45, %s47
    %p51 = scmp.eq.s32.totalorder %s11, 0
    %p52 = por %p50, %p51
    %p53 = scmp.ne.s32.totalorder %s45, %s47
    %p54 = scmp.eq.s32.totalorder %s16, 1
    %p55 = por %p53, %p54
    %p56 = scmp.ne.s32.totalorder %s47, %s48
    %p57 = scmp.eq.s32.totalorder %s16, 0
    %p58 = por %p56, %p57
    %p59 = scmp.ne.s32.totalorder %s47, %s48
    %p60 = scmp.eq.s32.totalorder %s17, 1
    %p61 = por %p59, %p60
    %p63 = scmp.ne.s32.totalorder %s48, %s62
    %p64 = scmp.eq.s32.totalorder %s17, 0
    %p65 = por %p63, %p64
    %s67 = sadd.s32 %s66, 1
    %p70 = scmp.eq.s32.totalorder %s11, 1
    %p71 = scmp.ne.s32.totalorder %s66, %s68
    %p72 = scmp.eq.s32.totalorder %s11, 0
    %p73 = por %p71, %p72
    %p74 = scmp.ne.s32.totalorder %s66, %s68
    %p75 = scmp.eq.s32.totalorder %s16, 1
    %p76 = por %p74, %p75
    %p77 = scmp.ne.s32.totalorder %s68, %s69
    %p78 = scmp.eq.s32.totalorder %s16, 0
    %p79 = por %p77, %p78
    %p80 = scmp.ne.s32.totalorder %s68, %s69
    %p81 = scmp.eq.s32.totalorder %s17, 1
    %p82 = por %p80, %p81
    %p84 = scmp.ne.s32.totalorder %s69, %s83
    %p85 = scmp.eq.s32.totalorder %s17, 0
    %p86 = por %p84, %p85
    %s88 = sadd.s32 %s87, 1
    %p91 = scmp.eq.s32.totalorder %s11, 1
    %p92 = scmp.ne.s32.totalorder %s87, %s89
    %p93 = scmp.eq.s32.totalorder %s11, 0
    %p94 = por %p92, %p93
    %p95 = scmp.ne.s32.totalorder %s87, %s89
    %p96 = scmp.eq.s32.totalorder %s16, 1
    %p97 = por %p95, %p96
    %p98 = scmp.ne.s32.totalorder %s89, %s90
    %p99 = scmp.eq.s32.totalorder %s16, 0
    %p100 = por %p98, %p99
    %p101 = scmp.ne.s32.totalorder %s89, %s90
    %p102 = scmp.eq.s32.totalorder %s17, 1
    %p103 = por %p101, %p102
    %p105 = scmp.ne.s32.totalorder %s90, %s104
    %p106 = scmp.eq.s32.totalorder %s17, 0
    %p107 = por %p105, %p106
    %s109 = sadd.s32 %s108, 1
    %p112 = scmp.eq.s32.totalorder %s11, 1
    %p113 = scmp.ne.s32.totalorder %s108, %s110
    %p114 = scmp.eq.s32.totalorder %s11, 0
    %p115 = por %p113, %p114
    %p116 = scmp.ne.s32.totalorder %s108, %s110
    %p117 = scmp.eq.s32.totalorder %s16, 1
    %p118 = por %p116, %p117
    %p119 = scmp.ne.s32.totalorder %s110, %s111
    %p120 = scmp.eq.s32.totalorder %s16, 0
    %p121 = por %p119, %p120
    %p122 = scmp.ne.s32.totalorder %s110, %s111
    %p123 = scmp.eq.s32.totalorder %s17, 1
    %p124 = por %p122, %p123
    %p126 = scmp.ne.s32.totalorder %s111, %s125
    %p127 = scmp.eq.s32.totalorder %s17, 0
    %p128 = por %p126, %p127
    %s129 = ssub.s32 %s11, %s18
    %p130 = scmp.eq.s32.totalorder %s129, 0
    %s132 = sadd.s32 %s131, 1
    %s133 = scalar_select %p130, %s131, %s132
    %p136 = pneg %p130
    %p137 = scmp.eq.s32.totalorder %s11, 1
    %p138 = por %p136, %p137
    %p139 = scmp.ne.s32.totalorder %s131, %s134
    %p140 = scmp.eq.s32.totalorder %s11, 0
    %p141 = por %p139, %p140
    %p142 = scmp.ne.s32.totalorder %s131, %s134
    %p143 = scmp.eq.s32.totalorder %s16, 1
    %p144 = por %p142, %p143
    %p145 = scmp.ne.s32.totalorder %s134, %s135
    %p146 = scmp.eq.s32.totalorder %s16, 0
    %p147 = por %p145, %p146
    %p148 = scmp.ne.s32.totalorder %s134, %s135
    %p149 = scmp.eq.s32.totalorder %s17, 1
    %p150 = por %p148, %p149
    %p152 = scmp.ne.s32.totalorder %s135, %s151
    %p153 = scmp.eq.s32.totalorder %s17, 0
    %p154 = por %p152, %p153
    %p155 = scmp.le.s32.totalorder 1, %s11
    %p156 = scmp.lt.s32.totalorder %s11, 3
    %p157 = pnand %p155, %p156
    %p158 = pneg %p157
    // Predicated region
    $region9: #{tpu_custom_call.1} parent=5 // pred_check
      _
    $region10: #{tpu_custom_call.1} parent=5 // pred_check_branch
      %160 = sbr.rel (%p157) target = $region12
    $region11: #{tpu_custom_call.1} parent=5 // pred_region
      %s161 = ssub.s32 %s11, 1
      // Predicated region
      $region13: #{tpu_custom_call.1} parent=11 // pred_check
        %p162 = pneg %p58
      $region14: #{tpu_custom_call.1} parent=11 // pred_check_branch
        %164 = sbr.rel (%p162) target = $region16
      $region15: #{tpu_custom_call.1} parent=11 // pred_region
        _
      $region16: #{tpu_custom_call.1} parent=11 // pred_fallthru
        _
      // Predicated region
      $region17: #{tpu_custom_call.1} parent=11 // pred_check
        %p165 = pneg %p79
      $region18: #{tpu_custom_call.1} parent=11 // pred_check_branch
        %167 = sbr.rel (%p165) target = $region20
      $region19: #{tpu_custom_call.1} parent=11 // pred_region
        _
      $region20: #{tpu_custom_call.1} parent=11 // pred_fallthru
        _
      // Predicated region
      $region21: #{tpu_custom_call.1} parent=11 // pred_check
        %p168 = pneg %p100
      $region22: #{tpu_custom_call.1} parent=11 // pred_check_branch
        %170 = sbr.rel (%p168) target = $region24
      $region23: #{tpu_custom_call.1} parent=11 // pred_region
        _
      $region24: #{tpu_custom_call.1} parent=11 // pred_fallthru
        _
      // Predicated region
      $region25: #{tpu_custom_call.1} parent=11 // pred_check
        %p171 = pneg %p121
      $region26: #{tpu_custom_call.1} parent=11 // pred_check_branch
        %173 = sbr.rel (%p171) target = $region28
      $region27: #{tpu_custom_call.1} parent=11 // pred_region
        _
      $region28: #{tpu_custom_call.1} parent=11 // pred_fallthru
        _
    $region12: #{tpu_custom_call.1} parent=5 // pred_fallthru
      _
    %p174 = scmp.lt.s32.totalorder %s11, 2
    // Predicated region
    $region29: #{tpu_custom_call.1} parent=5 // pred_check
      %p175 = pneg %p174
    $region30: #{tpu_custom_call.1} parent=5 // pred_check_branch
      %177 = sbr.rel (%p175) target = $region32
    $region31: #{tpu_custom_call.1} parent=5 // pred_region
      // Predicated region
      $region33: #{tpu_custom_call.1} parent=31 // pred_check
        %p178 = pneg %p31
      $region34: #{tpu_custom_call.1} parent=31 // pred_check_branch
        %180 = sbr.rel (%p178) target = $region36
      $region35: #{tpu_custom_call.1} parent=31 // pred_region
        %p181 = scmp.lt.s32.totalorder %s11, 1
        %s182 = scalar_select %p181, %s11, 1
        %s183 = smul.addr %s182, 32
        %s184 = smul.addr %s183, 8
        %s185 = scalar_lea.vmem %s0, %s184
      $region36: #{tpu_custom_call.1} parent=31 // pred_fallthru
        _
    $region32: #{tpu_custom_call.1} parent=5 // pred_fallthru
      _
    %p186 = scmp.le.s32.totalorder 1, %s11
    %p187 = scmp.lt.s32.totalorder %s11, 3
    %p188 = pnand %p186, %p187
    %p189 = pneg %p188
    // Predicated region
    $region37: #{tpu_custom_call.1} parent=5 // pred_check
      _
    $region38: #{tpu_custom_call.1} parent=5 // pred_check_branch
      %191 = sbr.rel (%p188) target = $region40
    $region39: #{tpu_custom_call.1} parent=5 // pred_region
      %s192 = ssub.s32 %s11, 1
      %p193 = scmp.lt.s32.totalorder %s16, 1
      %s194 = scalar_select %p193, %s16, 1
      %s195 = smul.addr %s194, 32
      %s196 = smul.addr %s195, 8
      %s197 = scalar_lea.vmem %s0, %s196
      %p198 = pneg %p37
      %p199 = pneg %p34
      %p200 = pneg %p58
      %p201 = pneg %p55
      %p202 = pneg %p79
      %p203 = pneg %p76
      %p204 = pneg %p100
      %p205 = pneg %p97
      %p206 = pneg %p121
      %p207 = pneg %p118
      %p208 = pneg %p147
      %p209 = pneg %p144
      %p210 = scmp.lt.s32.totalorder %s16, 1
      %s211 = scalar_select %p210, %s16, 1
      %s212 = smul.addr %s211, 32
      %s213 = smul.addr %s212, 8
      %s214 = scalar_lea.vmem %s5, %s213
      %p215 = scmp.lt.s32.totalorder %s16, 1
      %s216 = scalar_select %p215, %s16, 1
      %s217 = smul.addr %s216, 32
      %s218 = smul.addr %s217, 8
      %s219 = scalar_lea.vmem %s0, %s218
      %p220 = scmp.lt.s32.totalorder %s16, 1
      %s221 = scalar_select %p220, %s16, 1
      %s222 = smul.addr %s221, 32
      %s223 = smul.addr %s222, 8
      %s224 = scalar_lea.vmem %s5, %s223
      %v225 = vld [vmem:[%s219] sm:$0xff]
      %v226 = vld [vmem:[%s219 + $0x8] sm:$0xff]
      %v227 = vld [vmem:[%s219 + $0x10] sm:$0xff]
      %v228 = vld [vmem:[%s219 + $0x18] sm:$0xff]
      %v229 = vld [vmem:[%s219 + $0x20] sm:$0xff]
      %v230 = vld [vmem:[%s219 + $0x28] sm:$0xff]
      %v231 = vld [vmem:[%s219 + $0x30] sm:$0xff]
      %v232 = vld [vmem:[%s219 + $0x38] sm:$0xff]
      %v233 = vld [vmem:[%s219 + $0x40] sm:$0xff]
      %v234 = vld [vmem:[%s219 + $0x48] sm:$0xff]
      %v235 = vld [vmem:[%s219 + $0x50] sm:$0xff]
      %v236 = vld [vmem:[%s219 + $0x58] sm:$0xff]
      %v237 = vld [vmem:[%s219 + $0x60] sm:$0xff]
      %v238 = vld [vmem:[%s219 + $0x68] sm:$0xff]
      %v239 = vld [vmem:[%s219 + $0x70] sm:$0xff]
      %v240 = vld [vmem:[%s219 + $0x78] sm:$0xff]
      %v241 = vld [vmem:[%s219 + $0x80] sm:$0xff]
      %v242 = vld [vmem:[%s219 + $0x88] sm:$0xff]
      %v243 = vld [vmem:[%s219 + $0x90] sm:$0xff]
      %v244 = vld [vmem:[%s219 + $0x98] sm:$0xff]
      %v245 = vld [vmem:[%s219 + $0xa0] sm:$0xff]
      %v246 = vld [vmem:[%s219 + $0xa8] sm:$0xff]
      %v247 = vld [vmem:[%s219 + $0xb0] sm:$0xff]
      %v248 = vld [vmem:[%s219 + $0xb8] sm:$0xff]
      %v249 = vld [vmem:[%s219 + $0xc0] sm:$0xff]
      %v250 = vld [vmem:[%s219 + $0xc8] sm:$0xff]
      %v251 = vld [vmem:[%s219 + $0xd0] sm:$0xff]
      %v252 = vld [vmem:[%s219 + $0xd8] sm:$0xff]
      %v253 = vld [vmem:[%s219 + $0xe0] sm:$0xff]
      %v254 = vld [vmem:[%s219 + $0xe8] sm:$0xff]
      %v255 = vld [vmem:[%s219 + $0xf0] sm:$0xff]
      %v256 = vld [vmem:[%s219 + $0xf8] sm:$0xff]
      %vm257 = vcmask 31744
      %258 = vst.msk [vmem:[#allocation2] sm:$0xff] %vm257, 0.0
      %259 = vst.msk [vmem:[#allocation2 + $0x8] sm:$0xff] %vm257, 0.0
      %vm260 = vcmask 25600
      %261 = vst.msk [vmem:[#allocation2 + $0x10] sm:$0x3] %vm260, 0.0
      %262 = vst.msk [vmem:[#allocation2 + $0x18] sm:$0xff] %vm257, 0.0
      %263 = vst.msk [vmem:[#allocation2 + $0x20] sm:$0xff] %vm257, 0.0
      %264 = vst.msk [vmem:[#allocation2 + $0x28] sm:$0x3] %vm260, 0.0
      %265 = vst.msk [vmem:[#allocation2 + $0x30] sm:$0xff] %vm257, 0.0
      %266 = vst.msk [vmem:[#allocation2 + $0x38] sm:$0xff] %vm257, 0.0
      %267 = vst.msk [vmem:[#allocation2 + $0x40] sm:$0x3] %vm260, 0.0
      %268 = vst.msk [vmem:[#allocation2 + $0x48] sm:$0xff] %vm257, 0.0
      %269 = vst.msk [vmem:[#allocation2 + $0x50] sm:$0xff] %vm257, 0.0
      %270 = vst.msk [vmem:[#allocation2 + $0x58] sm:$0x3] %vm260, 0.0
      %271 = vst.msk [vmem:[#allocation2 + $0x60] sm:$0xff] %vm257, 0.0
      %272 = vst.msk [vmem:[#allocation2 + $0x68] sm:$0xff] %vm257, 0.0
      %273 = vst.msk [vmem:[#allocation2 + $0x70] sm:$0x3] %vm260, 0.0
      %274 = vst.msk [vmem:[#allocation2 + $0x78] sm:$0xff] %vm257, 0.0
      %275 = vst.msk [vmem:[#allocation2 + $0x80] sm:$0xff] %vm257, 0.0
      %276 = vst.msk [vmem:[#allocation2 + $0x88] sm:$0x3] %vm260, 0.0
      %277 = vst.msk [vmem:[#allocation2 + $0x90] sm:$0xff] %vm257, 0.0
      %278 = vst.msk [vmem:[#allocation2 + $0x98] sm:$0xff] %vm257, 0.0
      %279 = vst.msk [vmem:[#allocation2 + $0xa0] sm:$0x3] %vm260, 0.0
      %280 = vst.msk [vmem:[#allocation2 + $0xa8] sm:$0xff] %vm257, 0.0
      %281 = vst.msk [vmem:[#allocation2 + $0xb0] sm:$0xff] %vm257, 0.0
      %282 = vst.msk [vmem:[#allocation2 + $0xb8] sm:$0x3] %vm260, 0.0
      %283 = vst.msk [vmem:[#allocation2 + $0xc0] sm:$0xff] %vm257, 0.0
      %284 = vst.msk [vmem:[#allocation2 + $0xc8] sm:$0xff] %vm257, 0.0
      %285 = vst.msk [vmem:[#allocation2 + $0xd0] sm:$0x3] %vm260, 0.0
      %286 = vst.msk [vmem:[#allocation2 + $0xd8] sm:$0xff] %vm257, 0.0
      %287 = vst.msk [vmem:[#allocation2 + $0xe0] sm:$0xff] %vm257, 0.0
      %288 = vst.msk [vmem:[#allocation2 + $0xe8] sm:$0x3] %vm260, 0.0
      %289 = vst.msk [vmem:[#allocation2 + $0xf0] sm:$0xff] %vm257, 0.0
      %290 = vst.msk [vmem:[#allocation2 + $0xf8] sm:$0xff] %vm257, 0.0
      %291 = vst.msk [vmem:[#allocation2 + $0x100] sm:$0x3] %vm260, 0.0
      %292 = vst.msk [vmem:[#allocation2 + $0x108] sm:$0xff] %vm257, 0.0
      %293 = vst.msk [vmem:[#allocation2 + $0x110] sm:$0xff] %vm257, 0.0
      %294 = vst.msk [vmem:[#allocation2 + $0x118] sm:$0x3] %vm260, 0.0
      %295 = vst.msk [vmem:[#allocation2 + $0x120] sm:$0xff] %vm257, 0.0
      %296 = vst.msk [vmem:[#allocation2 + $0x128] sm:$0xff] %vm257, 0.0
      %297 = vst.msk [vmem:[#allocation2 + $0x130] sm:$0x3] %vm260, 0.0
      %298 = vst.msk [vmem:[#allocation2 + $0x138] sm:$0xff] %vm257, 0.0
      %299 = vst.msk [vmem:[#allocation2 + $0x140] sm:$0xff] %vm257, 0.0
      %300 = vst.msk [vmem:[#allocation2 + $0x148] sm:$0x3] %vm260, 0.0
      %301 = vst.msk [vmem:[#allocation2 + $0x150] sm:$0xff] %vm257, 0.0
      %302 = vst.msk [vmem:[#allocation2 + $0x158] sm:$0xff] %vm257, 0.0
      %303 = vst.msk [vmem:[#allocation2 + $0x160] sm:$0x3] %vm260, 0.0
      %304 = vst.msk [vmem:[#allocation2 + $0x168] sm:$0xff] %vm257, 0.0
      %305 = vst.msk [vmem:[#allocation2 + $0x170] sm:$0xff] %vm257, 0.0
      %306 = vst.msk [vmem:[#allocation2 + $0x178] sm:$0x3] %vm260, 0.0
      %307 = vst.msk [vmem:[#allocation2 + $0x180] sm:$0xff] %vm257, 0.0
      %308 = vst.msk [vmem:[#allocation2 + $0x188] sm:$0xff] %vm257, 0.0
      %309 = vst.msk [vmem:[#allocation2 + $0x190] sm:$0x3] %vm260, 0.0
      %310 = vst.msk [vmem:[#allocation2 + $0x198] sm:$0xff] %vm257, 0.0
      %311 = vst.msk [vmem:[#allocation2 + $0x1a0] sm:$0xff] %vm257, 0.0
      %312 = vst.msk [vmem:[#allocation2 + $0x1a8] sm:$0x3] %vm260, 0.0
      %s313 = scalar_lea.vmem [#allocation2], 24
      %314 = vst.msk [vmem:[%s313 + $0x1] sm:$0xff] %vm257, %v225
      %315 = vst.msk [vmem:[%s313 + $0x9] sm:$0xff] %vm257, %v226
      %316 = vst.msk [vmem:[%s313 + $0x19] sm:$0xff] %vm257, %v227
      %317 = vst.msk [vmem:[%s313 + $0x21] sm:$0xff] %vm257, %v228
      %318 = vst.msk [vmem:[%s313 + $0x31] sm:$0xff] %vm257, %v229
      %319 = vst.msk [vmem:[%s313 + $0x39] sm:$0xff] %vm257, %v230
      %320 = vst.msk [vmem:[%s313 + $0x49] sm:$0xff] %vm257, %v231
      %321 = vst.msk [vmem:[%s313 + $0x51] sm:$0xff] %vm257, %v232
      %322 = vst.msk [vmem:[%s313 + $0x61] sm:$0xff] %vm257, %v233
      %323 = vst.msk [vmem:[%s313 + $0x69] sm:$0xff] %vm257, %v234
      %324 = vst.msk [vmem:[%s313 + $0x79] sm:$0xff] %vm257, %v235
      %325 = vst.msk [vmem:[%s313 + $0x81] sm:$0xff] %vm257, %v236
      %326 = vst.msk [vmem:[%s313 + $0x91] sm:$0xff] %vm257, %v237
      %327 = vst.msk [vmem:[%s313 + $0x99] sm:$0xff] %vm257, %v238
      %328 = vst.msk [vmem:[%s313 + $0xa9] sm:$0xff] %vm257, %v239
      %329 = vst.msk [vmem:[%s313 + $0xb1] sm:$0xff] %vm257, %v240
      %330 = vst.msk [vmem:[%s313 + $0xc1] sm:$0xff] %vm257, %v241
      %331 = vst.msk [vmem:[%s313 + $0xc9] sm:$0xff] %vm257, %v242
      %332 = vst.msk [vmem:[%s313 + $0xd9] sm:$0xff] %vm257, %v243
      %333 = vst.msk [vmem:[%s313 + $0xe1] sm:$0xff] %vm257, %v244
      %334 = vst.msk [vmem:[%s313 + $0xf1] sm:$0xff] %vm257, %v245
      %335 = vst.msk [vmem:[%s313 + $0xf9] sm:$0xff] %vm257, %v246
      %336 = vst.msk [vmem:[%s313 + $0x109] sm:$0xff] %vm257, %v247
      %337 = vst.msk [vmem:[%s313 + $0x111] sm:$0xff] %vm257, %v248
      %338 = vst.msk [vmem:[%s313 + $0x121] sm:$0xff] %vm257, %v249
      %339 = vst.msk [vmem:[%s313 + $0x129] sm:$0xff] %vm257, %v250
      %340 = vst.msk [vmem:[%s313 + $0x139] sm:$0xff] %vm257, %v251
      %341 = vst.msk [vmem:[%s313 + $0x141] sm:$0xff] %vm257, %v252
      %342 = vst.msk [vmem:[%s313 + $0x151] sm:$0xff] %vm257, %v253
      %343 = vst.msk [vmem:[%s313 + $0x159] sm:$0xff] %vm257, %v254
      %344 = vst.msk [vmem:[%s313 + $0x169] sm:$0xff] %vm257, %v255
      %345 = vst.msk [vmem:[%s313 + $0x171] sm:$0xff] %vm257, %v256
      %v346 = vld [vmem:[#allocation2] sm:$0xff]
      %v347 = vld [vmem:[#allocation2 + $0x8] sm:$0xff]
      %v348 = vld [vmem:[#allocation2 + $0x10] sm:$0x3]
      %v349 = vld [vmem:[#allocation2 + $0x18] sm:$0xff]
      %v350 = vld [vmem:[#allocation2 + $0x20] sm:$0xff]
      %v351 = vld [vmem:[#allocation2 + $0x28] sm:$0x3]
      %v352 = vld [vmem:[#allocation2 + $0x30] sm:$0xff]
      %v353 = vld [vmem:[#allocation2 + $0x38] sm:$0xff]
      %v354 = vld [vmem:[#allocation2 + $0x40] sm:$0x3]
      %v355 = vld [vmem:[#allocation2 + $0x48] sm:$0xff]
      %v356 = vld [vmem:[#allocation2 + $0x50] sm:$0xff]
      %v357 = vld [vmem:[#allocation2 + $0x58] sm:$0x3]
      %v358 = vld [vmem:[#allocation2 + $0x60] sm:$0xff]
      %v359 = vld [vmem:[#allocation2 + $0x68] sm:$0xff]
      %v360 = vld [vmem:[#allocation2 + $0x70] sm:$0x3]
      %v361 = vld [vmem:[#allocation2 + $0x78] sm:$0xff]
      %v362 = vld [vmem:[#allocation2 + $0x80] sm:$0xff]
      %v363 = vld [vmem:[#allocation2 + $0x88] sm:$0x3]
      %v364 = vld [vmem:[#allocation2 + $0x90] sm:$0xff]
      %v365 = vld [vmem:[#allocation2 + $0x98] sm:$0xff]
      %v366 = vld [vmem:[#allocation2 + $0xa0] sm:$0x3]
      %v367 = vld [vmem:[#allocation2 + $0xa8] sm:$0xff]
      %v368 = vld [vmem:[#allocation2 + $0xb0] sm:$0xff]
      %v369 = vld [vmem:[#allocation2 + $0xb8] sm:$0x3]
      %v370 = vld [vmem:[#allocation2 + $0xc0] sm:$0xff]
      %v371 = vld [vmem:[#allocation2 + $0xc8] sm:$0xff]
      %v372 = vld [vmem:[#allocation2 + $0xd0] sm:$0x3]
      %v373 = vld [vmem:[#allocation2 + $0xd8] sm:$0xff]
      %v374 = vld [vmem:[#allocation2 + $0xe0] sm:$0xff]
      %v375 = vld [vmem:[#allocation2 + $0xe8] sm:$0x3]
      %v376 = vld [vmem:[#allocation2 + $0xf0] sm:$0xff]
      %v377 = vld [vmem:[#allocation2 + $0xf8] sm:$0xff]
      %v378 = vld [vmem:[#allocation2 + $0x100] sm:$0x3]
      %v379 = vld [vmem:[#allocation2 + $0x108] sm:$0xff]
      %v380 = vld [vmem:[#allocation2 + $0x110] sm:$0xff]
      %v381 = vld [vmem:[#allocation2 + $0x118] sm:$0x3]
      %v382 = vld [vmem:[#allocation2 + $0x120] sm:$0xff]
      %v383 = vld [vmem:[#allocation2 + $0x128] sm:$0xff]
      %v384 = vld [vmem:[#allocation2 + $0x130] sm:$0x3]
      %v385 = vld [vmem:[#allocation2 + $0x138] sm:$0xff]
      %v386 = vld [vmem:[#allocation2 + $0x140] sm:$0xff]
      %v387 = vld [vmem:[#allocation2 + $0x148] sm:$0x3]
      %v388 = vld [vmem:[#allocation2 + $0x150] sm:$0xff]
      %v389 = vld [vmem:[#allocation2 + $0x158] sm:$0xff]
      %v390 = vld [vmem:[#allocation2 + $0x160] sm:$0x3]
      %v391 = vld [vmem:[#allocation2 + $0x168] sm:$0xff]
      %v392 = vld [vmem:[#allocation2 + $0x170] sm:$0xff]
      %v393 = vld [vmem:[#allocation2 + $0x178] sm:$0x3]
      %v394 = vld [vmem:[#allocation2 + $0x180] sm:$0xff]
      %v395 = vld [vmem:[#allocation2 + $0x188] sm:$0xff]
      %v396 = vld [vmem:[#allocation2 + $0x190] sm:$0x3]
      %v397 = vld [vmem:[#allocation2 + $0x198] sm:$0xff]
      %v398 = vld [vmem:[#allocation2 + $0x1a0] sm:$0xff]
      %v399 = vld [vmem:[#allocation2 + $0x1a8] sm:$0x3]
      %vm448 = vcmask 1046528
      %v449 = vrot.slane %v346, 1
      %v450 = vrot.slane %v347, 1
      %v451 = vsel %vm448, %v449, %v450
      %v452 = vrot.slane %v348, 1
      %v453 = vsel %vm448, %v450, %v452
      %v454 = vrot.slane %v349, 1
      %v455 = vrot.slane %v350, 1
      %v456 = vsel %vm448, %v454, %v455
      %v457 = vrot.slane %v351, 1
      %v458 = vsel %vm448, %v455, %v457
      %v459 = vrot.slane %v352, 1
      %v460 = vrot.slane %v353, 1
      %v461 = vsel %vm448, %v459, %v460
      %v462 = vrot.slane %v354, 1
      %v463 = vsel %vm448, %v460, %v462
      %v464 = vrot.slane %v355, 1
      %v465 = vrot.slane %v356, 1
      %v466 = vsel %vm448, %v464, %v465
      %v467 = vrot.slane %v357, 1
      %v468 = vsel %vm448, %v465, %v467
      %v469 = vrot.slane %v358, 1
      %v470 = vrot.slane %v359, 1
      %v471 = vsel %vm448, %v469, %v470
      %v472 = vrot.slane %v360, 1
      %v473 = vsel %vm448, %v470, %v472
      %v474 = vrot.slane %v361, 1
      %v475 = vrot.slane %v362, 1
      %v476 = vsel %vm448, %v474, %v475
      %v477 = vrot.slane %v363, 1
      %v478 = vsel %vm448, %v475, %v477
      %v479 = vrot.slane %v364, 1
      %v480 = vrot.slane %v365, 1
      %v481 = vsel %vm448, %v479, %v480
      %v482 = vrot.slane %v366, 1
      %v483 = vsel %vm448, %v480, %v482
      %v484 = vrot.slane %v367, 1
      %v485 = vrot.slane %v368, 1
      %v486 = vsel %vm448, %v484, %v485
      %v487 = vrot.slane %v369, 1
      %v488 = vsel %vm448, %v485, %v487
      %v489 = vrot.slane %v370, 1
      %v490 = vrot.slane %v371, 1
      %v491 = vsel %vm448, %v489, %v490
      %v492 = vrot.slane %v372, 1
      %v493 = vsel %vm448, %v490, %v492
      %v494 = vrot.slane %v373, 1
      %v495 = vrot.slane %v374, 1
      %v496 = vsel %vm448, %v494, %v495
      %v497 = vrot.slane %v375, 1
      %v498 = vsel %vm448, %v495, %v497
      %v499 = vrot.slane %v376, 1
      %v500 = vrot.slane %v377, 1
      %v501 = vsel %vm448, %v499, %v500
      %v502 = vrot.slane %v378, 1
      %v503 = vsel %vm448, %v500, %v502
      %v504 = vrot.slane %v379, 1
      %v505 = vrot.slane %v380, 1
      %v506 = vsel %vm448, %v504, %v505
      %v507 = vrot.slane %v381, 1
      %v508 = vsel %vm448, %v505, %v507
      %v509 = vrot.slane %v382, 1
      %v510 = vrot.slane %v383, 1
      %v511 = vsel %vm448, %v509, %v510
      %v512 = vrot.slane %v384, 1
      %v513 = vsel %vm448, %v510, %v512
      %v514 = vrot.slane %v385, 1
      %v515 = vrot.slane %v386, 1
      %v516 = vsel %vm448, %v514, %v515
      %v517 = vrot.slane %v387, 1
      %v518 = vsel %vm448, %v515, %v517
      %v519 = vrot.slane %v388, 1
      %v520 = vrot.slane %v389, 1
      %v521 = vsel %vm448, %v519, %v520
      %v522 = vrot.slane %v390, 1
      %v523 = vsel %vm448, %v520, %v522
      %v524 = vrot.slane %v391, 1
      %v525 = vrot.slane %v392, 1
      %v526 = vsel %vm448, %v524, %v525
      %v527 = vrot.slane %v393, 1
      %v528 = vsel %vm448, %v525, %v527
      %vm529 = vcmask 1045504
      %v530 = vrot.slane %v346, 2
      %v531 = vrot.slane %v347, 2
      %v532 = vsel %vm529, %v530, %v531
      %v533 = vrot.slane %v348, 2
      %v534 = vsel %vm529, %v531, %v533
      %v535 = vrot.slane %v349, 2
      %v536 = vrot.slane %v350, 2
      %v537 = vsel %vm529, %v535, %v536
      %v538 = vrot.slane %v351, 2
      %v539 = vsel %vm529, %v536, %v538
      %v540 = vrot.slane %v352, 2
      %v541 = vrot.slane %v353, 2
      %v542 = vsel %vm529, %v540, %v541
      %v543 = vrot.slane %v354, 2
      %v544 = vsel %vm529, %v541, %v543
      %v545 = vrot.slane %v355, 2
      %v546 = vrot.slane %v356, 2
      %v547 = vsel %vm529, %v545, %v546
      %v548 = vrot.slane %v357, 2
      %v549 = vsel %vm529, %v546, %v548
      %v550 = vrot.slane %v358, 2
      %v551 = vrot.slane %v359, 2
      %v552 = vsel %vm529, %v550, %v551
      %v553 = vrot.slane %v360, 2
      %v554 = vsel %vm529, %v551, %v553
      %v555 = vrot.slane %v361, 2
      %v556 = vrot.slane %v362, 2
      %v557 = vsel %vm529, %v555, %v556
      %v558 = vrot.slane %v363, 2
      %v559 = vsel %vm529, %v556, %v558
      %v560 = vrot.slane %v364, 2
      %v561 = vrot.slane %v365, 2
      %v562 = vsel %vm529, %v560, %v561
      %v563 = vrot.slane %v366, 2
      %v564 = vsel %vm529, %v561, %v563
      %v565 = vrot.slane %v367, 2
      %v566 = vrot.slane %v368, 2
      %v567 = vsel %vm529, %v565, %v566
      %v568 = vrot.slane %v369, 2
      %v569 = vsel %vm529, %v566, %v568
      %v570 = vrot.slane %v370, 2
      %v571 = vrot.slane %v371, 2
      %v572 = vsel %vm529, %v570, %v571
      %v573 = vrot.slane %v372, 2
      %v574 = vsel %vm529, %v571, %v573
      %v575 = vrot.slane %v373, 2
      %v576 = vrot.slane %v374, 2
      %v577 = vsel %vm529, %v575, %v576
      %v578 = vrot.slane %v375, 2
      %v579 = vsel %vm529, %v576, %v578
      %v580 = vrot.slane %v376, 2
      %v581 = vrot.slane %v377, 2
      %v582 = vsel %vm529, %v580, %v581
      %v583 = vrot.slane %v378, 2
      %v584 = vsel %vm529, %v581, %v583
      %v585 = vrot.slane %v379, 2
      %v586 = vrot.slane %v380, 2
      %v587 = vsel %vm529, %v585, %v586
      %v588 = vrot.slane %v381, 2
      %v589 = vsel %vm529, %v586, %v588
      %v590 = vrot.slane %v382, 2
      %v591 = vrot.slane %v383, 2
      %v592 = vsel %vm529, %v590, %v591
      %v593 = vrot.slane %v384, 2
      %v594 = vsel %vm529, %v591, %v593
      %v595 = vrot.slane %v385, 2
      %v596 = vrot.slane %v386, 2
      %v597 = vsel %vm529, %v595, %v596
      %v598 = vrot.slane %v387, 2
      %v599 = vsel %vm529, %v596, %v598
      %v600 = vrot.slane %v388, 2
      %v601 = vrot.slane %v389, 2
      %v602 = vsel %vm529, %v600, %v601
      %v603 = vrot.slane %v390, 2
      %v604 = vsel %vm529, %v601, %v603
      %v605 = vrot.slane %v391, 2
      %v606 = vrot.slane %v392, 2
      %v607 = vsel %vm529, %v605, %v606
      %v608 = vrot.slane %v393, 2
      %v609 = vsel %vm529, %v606, %v608
      %v613 = vrot.slane %v394, 1
      %v614 = vrot.slane %v395, 1
      %v615 = vsel %vm448, %v613, %v614
      %v616 = vrot.slane %v396, 1
      %v617 = vsel %vm448, %v614, %v616
      %v618 = vrot.slane %v394, 2
      %v619 = vrot.slane %v395, 2
      %v620 = vsel %vm529, %v618, %v619
      %v621 = vrot.slane %v396, 2
      %v622 = vsel %vm529, %v619, %v621
      %v626 = vrot.slane %v397, 1
      %v627 = vrot.slane %v398, 1
      %v628 = vsel %vm448, %v626, %v627
      %v629 = vrot.slane %v399, 1
      %v630 = vsel %vm448, %v627, %v629
      %v631 = vrot.slane %v397, 2
      %v632 = vrot.slane %v398, 2
      %v633 = vsel %vm529, %v631, %v632
      %v634 = vrot.slane %v399, 2
      %v635 = vsel %vm529, %v632, %v634
      %636 = vrot.lane.b32.xlu0 %v451, 4
      %v637 = vpop.permute.xlu0 %636
      %638 = vrot.lane.b32.xlu0 %v453, 4
      %v639 = vpop.permute.xlu0 %638
      %640 = vrot.lane.b32.xlu0 %v456, 4
      %v641 = vpop.permute.xlu0 %640
      %642 = vrot.lane.b32.xlu0 %v458, 4
      %v643 = vpop.permute.xlu0 %642
      %644 = vrot.lane.b32.xlu0 %v461, 4
      %v645 = vpop.permute.xlu0 %644
      %646 = vrot.lane.b32.xlu0 %v463, 4
      %v647 = vpop.permute.xlu0 %646
      %648 = vrot.lane.b32.xlu0 %v466, 4
      %v649 = vpop.permute.xlu0 %648
      %650 = vrot.lane.b32.xlu0 %v468, 4
      %v651 = vpop.permute.xlu0 %650
      %652 = vrot.lane.b32.xlu0 %v471, 4
      %v653 = vpop.permute.xlu0 %652
      %654 = vrot.lane.b32.xlu0 %v473, 4
      %v655 = vpop.permute.xlu0 %654
      %656 = vrot.lane.b32.xlu0 %v476, 4
      %v657 = vpop.permute.xlu0 %656
      %658 = vrot.lane.b32.xlu0 %v478, 4
      %v659 = vpop.permute.xlu0 %658
      %660 = vrot.lane.b32.xlu0 %v481, 4
      %v661 = vpop.permute.xlu0 %660
      %662 = vrot.lane.b32.xlu0 %v483, 4
      %v663 = vpop.permute.xlu0 %662
      %664 = vrot.lane.b32.xlu0 %v486, 4
      %v665 = vpop.permute.xlu0 %664
      %666 = vrot.lane.b32.xlu0 %v488, 4
      %v667 = vpop.permute.xlu0 %666
      %668 = vrot.lane.b32.xlu0 %v491, 4
      %v669 = vpop.permute.xlu0 %668
      %670 = vrot.lane.b32.xlu0 %v493, 4
      %v671 = vpop.permute.xlu0 %670
      %672 = vrot.lane.b32.xlu0 %v496, 4
      %v673 = vpop.permute.xlu0 %672
      %674 = vrot.lane.b32.xlu0 %v498, 4
      %v675 = vpop.permute.xlu0 %674
      %676 = vrot.lane.b32.xlu0 %v501, 4
      %v677 = vpop.permute.xlu0 %676
      %678 = vrot.lane.b32.xlu0 %v503, 4
      %v679 = vpop.permute.xlu0 %678
      %680 = vrot.lane.b32.xlu0 %v506, 4
      %v681 = vpop.permute.xlu0 %680
      %682 = vrot.lane.b32.xlu0 %v508, 4
      %v683 = vpop.permute.xlu0 %682
      %684 = vrot.lane.b32.xlu0 %v511, 4
      %v685 = vpop.permute.xlu0 %684
      %686 = vrot.lane.b32.xlu0 %v513, 4
      %v687 = vpop.permute.xlu0 %686
      %688 = vrot.lane.b32.xlu0 %v516, 4
      %v689 = vpop.permute.xlu0 %688
      %690 = vrot.lane.b32.xlu0 %v518, 4
      %v691 = vpop.permute.xlu0 %690
      %692 = vrot.lane.b32.xlu0 %v521, 4
      %v693 = vpop.permute.xlu0 %692
      %694 = vrot.lane.b32.xlu0 %v523, 4
      %v695 = vpop.permute.xlu0 %694
      %696 = vrot.lane.b32.xlu0 %v526, 4
      %v697 = vpop.permute.xlu0 %696
      %698 = vrot.lane.b32.xlu0 %v528, 4
      %v699 = vpop.permute.xlu0 %698
      %732 = vrot.lane.b32.xlu0 %v532, 8
      %v733 = vpop.permute.xlu0 %732
      %734 = vrot.lane.b32.xlu0 %v534, 8
      %v735 = vpop.permute.xlu0 %734
      %736 = vrot.lane.b32.xlu0 %v537, 8
      %v737 = vpop.permute.xlu0 %736
      %738 = vrot.lane.b32.xlu0 %v539, 8
      %v739 = vpop.permute.xlu0 %738
      %740 = vrot.lane.b32.xlu0 %v542, 8
      %v741 = vpop.permute.xlu0 %740
      %742 = vrot.lane.b32.xlu0 %v544, 8
      %v743 = vpop.permute.xlu0 %742
      %744 = vrot.lane.b32.xlu0 %v547, 8
      %v745 = vpop.permute.xlu0 %744
      %746 = vrot.lane.b32.xlu0 %v549, 8
      %v747 = vpop.permute.xlu0 %746
      %748 = vrot.lane.b32.xlu0 %v552, 8
      %v749 = vpop.permute.xlu0 %748
      %750 = vrot.lane.b32.xlu0 %v554, 8
      %v751 = vpop.permute.xlu0 %750
      %752 = vrot.lane.b32.xlu0 %v557, 8
      %v753 = vpop.permute.xlu0 %752
      %754 = vrot.lane.b32.xlu0 %v559, 8
      %v755 = vpop.permute.xlu0 %754
      %756 = vrot.lane.b32.xlu0 %v562, 8
      %v757 = vpop.permute.xlu0 %756
      %758 = vrot.lane.b32.xlu0 %v564, 8
      %v759 = vpop.permute.xlu0 %758
      %760 = vrot.lane.b32.xlu0 %v567, 8
      %v761 = vpop.permute.xlu0 %760
      %762 = vrot.lane.b32.xlu0 %v569, 8
      %v763 = vpop.permute.xlu0 %762
      %764 = vrot.lane.b32.xlu0 %v572, 8
      %v765 = vpop.permute.xlu0 %764
      %766 = vrot.lane.b32.xlu0 %v574, 8
      %v767 = vpop.permute.xlu0 %766
      %768 = vrot.lane.b32.xlu0 %v577, 8
      %v769 = vpop.permute.xlu0 %768
      %770 = vrot.lane.b32.xlu0 %v579, 8
      %v771 = vpop.permute.xlu0 %770
      %772 = vrot.lane.b32.xlu0 %v582, 8
      %v773 = vpop.permute.xlu0 %772
      %774 = vrot.lane.b32.xlu0 %v584, 8
      %v775 = vpop.permute.xlu0 %774
      %776 = vrot.lane.b32.xlu0 %v587, 8
      %v777 = vpop.permute.xlu0 %776
      %778 = vrot.lane.b32.xlu0 %v589, 8
      %v779 = vpop.permute.xlu0 %778
      %780 = vrot.lane.b32.xlu0 %v592, 8
      %v781 = vpop.permute.xlu0 %780
      %782 = vrot.lane.b32.xlu0 %v594, 8
      %v783 = vpop.permute.xlu0 %782
      %784 = vrot.lane.b32.xlu0 %v597, 8
      %v785 = vpop.permute.xlu0 %784
      %786 = vrot.lane.b32.xlu0 %v599, 8
      %v787 = vpop.permute.xlu0 %786
      %788 = vrot.lane.b32.xlu0 %v602, 8
      %v789 = vpop.permute.xlu0 %788
      %790 = vrot.lane.b32.xlu0 %v604, 8
      %v791 = vpop.permute.xlu0 %790
      %792 = vrot.lane.b32.xlu0 %v607, 8
      %v793 = vpop.permute.xlu0 %792
      %794 = vrot.lane.b32.xlu0 %v609, 8
      %v795 = vpop.permute.xlu0 %794
      %828 = vrot.lane.b32.xlu0 %v349, 12
      %v829 = vpop.permute.xlu0 %828
      %830 = vrot.lane.b32.xlu0 %v350, 12
      %v831 = vpop.permute.xlu0 %830
      %832 = vrot.lane.b32.xlu0 %v352, 12
      %v833 = vpop.permute.xlu0 %832
      %834 = vrot.lane.b32.xlu0 %v353, 12
      %v835 = vpop.permute.xlu0 %834
      %836 = vrot.lane.b32.xlu0 %v355, 12
      %v837 = vpop.permute.xlu0 %836
      %838 = vrot.lane.b32.xlu0 %v356, 12
      %v839 = vpop.permute.xlu0 %838
      %840 = vrot.lane.b32.xlu0 %v358, 12
      %v841 = vpop.permute.xlu0 %840
      %842 = vrot.lane.b32.xlu0 %v359, 12
      %v843 = vpop.permute.xlu0 %842
      %844 = vrot.lane.b32.xlu0 %v361, 12
      %v845 = vpop.permute.xlu0 %844
      %846 = vrot.lane.b32.xlu0 %v362, 12
      %v847 = vpop.permute.xlu0 %846
      %848 = vrot.lane.b32.xlu0 %v364, 12
      %v849 = vpop.permute.xlu0 %848
      %850 = vrot.lane.b32.xlu0 %v365, 12
      %v851 = vpop.permute.xlu0 %850
      %852 = vrot.lane.b32.xlu0 %v367, 12
      %v853 = vpop.permute.xlu0 %852
      %854 = vrot.lane.b32.xlu0 %v368, 12
      %v855 = vpop.permute.xlu0 %854
      %856 = vrot.lane.b32.xlu0 %v370, 12
      %v857 = vpop.permute.xlu0 %856
      %858 = vrot.lane.b32.xlu0 %v371, 12
      %v859 = vpop.permute.xlu0 %858
      %860 = vrot.lane.b32.xlu0 %v373, 12
      %v861 = vpop.permute.xlu0 %860
      %862 = vrot.lane.b32.xlu0 %v374, 12
      %v863 = vpop.permute.xlu0 %862
      %864 = vrot.lane.b32.xlu0 %v376, 12
      %v865 = vpop.permute.xlu0 %864
      %866 = vrot.lane.b32.xlu0 %v377, 12
      %v867 = vpop.permute.xlu0 %866
      %868 = vrot.lane.b32.xlu0 %v379, 12
      %v869 = vpop.permute.xlu0 %868
      %870 = vrot.lane.b32.xlu0 %v380, 12
      %v871 = vpop.permute.xlu0 %870
      %872 = vrot.lane.b32.xlu0 %v382, 12
      %v873 = vpop.permute.xlu0 %872
      %874 = vrot.lane.b32.xlu0 %v383, 12
      %v875 = vpop.permute.xlu0 %874
      %876 = vrot.lane.b32.xlu0 %v385, 12
      %v877 = vpop.permute.xlu0 %876
      %878 = vrot.lane.b32.xlu0 %v386, 12
      %v879 = vpop.permute.xlu0 %878
      %880 = vrot.lane.b32.xlu0 %v388, 12
      %v881 = vpop.permute.xlu0 %880
      %882 = vrot.lane.b32.xlu0 %v389, 12
      %v883 = vpop.permute.xlu0 %882
      %884 = vrot.lane.b32.xlu0 %v391, 12
      %v885 = vpop.permute.xlu0 %884
      %886 = vrot.lane.b32.xlu0 %v392, 12
      %v887 = vpop.permute.xlu0 %886
      %888 = vrot.lane.b32.xlu0 %v394, 12
      %v889 = vpop.permute.xlu0 %888
      %890 = vrot.lane.b32.xlu0 %v395, 12
      %v891 = vpop.permute.xlu0 %890
      %924 = vrot.lane.b32.xlu0 %v456, 16
      %v925 = vpop.permute.xlu0 %924
      %926 = vrot.lane.b32.xlu0 %v458, 16
      %v927 = vpop.permute.xlu0 %926
      %928 = vrot.lane.b32.xlu0 %v461, 16
      %v929 = vpop.permute.xlu0 %928
      %930 = vrot.lane.b32.xlu0 %v463, 16
      %v931 = vpop.permute.xlu0 %930
      %932 = vrot.lane.b32.xlu0 %v466, 16
      %v933 = vpop.permute.xlu0 %932
      %934 = vrot.lane.b32.xlu0 %v468, 16
      %v935 = vpop.permute.xlu0 %934
      %936 = vrot.lane.b32.xlu0 %v471, 16
      %v937 = vpop.permute.xlu0 %936
      %938 = vrot.lane.b32.xlu0 %v473, 16
      %v939 = vpop.permute.xlu0 %938
      %940 = vrot.lane.b32.xlu0 %v476, 16
      %v941 = vpop.permute.xlu0 %940
      %942 = vrot.lane.b32.xlu0 %v478, 16
      %v943 = vpop.permute.xlu0 %942
      %944 = vrot.lane.b32.xlu0 %v481, 16
      %v945 = vpop.permute.xlu0 %944
      %946 = vrot.lane.b32.xlu0 %v483, 16
      %v947 = vpop.permute.xlu0 %946
      %948 = vrot.lane.b32.xlu0 %v486, 16
      %v949 = vpop.permute.xlu0 %948
      %950 = vrot.lane.b32.xlu0 %v488, 16
      %v951 = vpop.permute.xlu0 %950
      %952 = vrot.lane.b32.xlu0 %v491, 16
      %v953 = vpop.permute.xlu0 %952
      %954 = vrot.lane.b32.xlu0 %v493, 16
      %v955 = vpop.permute.xlu0 %954
      %956 = vrot.lane.b32.xlu0 %v496, 16
      %v957 = vpop.permute.xlu0 %956
      %958 = vrot.lane.b32.xlu0 %v498, 16
      %v959 = vpop.permute.xlu0 %958
      %960 = vrot.lane.b32.xlu0 %v501, 16
      %v961 = vpop.permute.xlu0 %960
      %962 = vrot.lane.b32.xlu0 %v503, 16
      %v963 = vpop.permute.xlu0 %962
      %964 = vrot.lane.b32.xlu0 %v506, 16
      %v965 = vpop.permute.xlu0 %964
      %966 = vrot.lane.b32.xlu0 %v508, 16
      %v967 = vpop.permute.xlu0 %966
      %968 = vrot.lane.b32.xlu0 %v511, 16
      %v969 = vpop.permute.xlu0 %968
      %970 = vrot.lane.b32.xlu0 %v513, 16
      %v971 = vpop.permute.xlu0 %970
      %972 = vrot.lane.b32.xlu0 %v516, 16
      %v973 = vpop.permute.xlu0 %972
      %974 = vrot.lane.b32.xlu0 %v518, 16
      %v975 = vpop.permute.xlu0 %974
      %976 = vrot.lane.b32.xlu0 %v521, 16
      %v977 = vpop.permute.xlu0 %976
      %978 = vrot.lane.b32.xlu0 %v523, 16
      %v979 = vpop.permute.xlu0 %978
      %980 = vrot.lane.b32.xlu0 %v526, 16
      %v981 = vpop.permute.xlu0 %980
      %982 = vrot.lane.b32.xlu0 %v528, 16
      %v983 = vpop.permute.xlu0 %982
      %984 = vrot.lane.b32.xlu0 %v615, 16
      %v985 = vpop.permute.xlu0 %984
      %986 = vrot.lane.b32.xlu0 %v617, 16
      %v987 = vpop.permute.xlu0 %986
      %1020 = vrot.lane.b32.xlu0 %v537, 20
      %v1021 = vpop.permute.xlu0 %1020
      %1022 = vrot.lane.b32.xlu0 %v539, 20
      %v1023 = vpop.permute.xlu0 %1022
      %1024 = vrot.lane.b32.xlu0 %v542, 20
      %v1025 = vpop.permute.xlu0 %1024
      %1026 = vrot.lane.b32.xlu0 %v544, 20
      %v1027 = vpop.permute.xlu0 %1026
      %1028 = vrot.lane.b32.xlu0 %v547, 20
      %v1029 = vpop.permute.xlu0 %1028
      %1030 = vrot.lane.b32.xlu0 %v549, 20
      %v1031 = vpop.permute.xlu0 %1030
      %1032 = vrot.lane.b32.xlu0 %v552, 20
      %v1033 = vpop.permute.xlu0 %1032
      %1034 = vrot.lane.b32.xlu0 %v554, 20
      %v1035 = vpop.permute.xlu0 %1034
      %1036 = vrot.lane.b32.xlu0 %v557, 20
      %v1037 = vpop.permute.xlu0 %1036
      %1038 = vrot.lane.b32.xlu0 %v559, 20
      %v1039 = vpop.permute.xlu0 %1038
      %1040 = vrot.lane.b32.xlu0 %v562, 20
      %v1041 = vpop.permute.xlu0 %1040
      %1042 = vrot.lane.b32.xlu0 %v564, 20
      %v1043 = vpop.permute.xlu0 %1042
      %1044 = vrot.lane.b32.xlu0 %v567, 20
      %v1045 = vpop.permute.xlu0 %1044
      %1046 = vrot.lane.b32.xlu0 %v569, 20
      %v1047 = vpop.permute.xlu0 %1046
      %1048 = vrot.lane.b32.xlu0 %v572, 20
      %v1049 = vpop.permute.xlu0 %1048
      %1050 = vrot.lane.b32.xlu0 %v574, 20
      %v1051 = vpop.permute.xlu0 %1050
      %1052 = vrot.lane.b32.xlu0 %v577, 20
      %v1053 = vpop.permute.xlu0 %1052
      %1054 = vrot.lane.b32.xlu0 %v579, 20
      %v1055 = vpop.permute.xlu0 %1054
      %1056 = vrot.lane.b32.xlu0 %v582, 20
      %v1057 = vpop.permute.xlu0 %1056
      %1058 = vrot.lane.b32.xlu0 %v584, 20
      %v1059 = vpop.permute.xlu0 %1058
      %1060 = vrot.lane.b32.xlu0 %v587, 20
      %v1061 = vpop.permute.xlu0 %1060
      %1062 = vrot.lane.b32.xlu0 %v589, 20
      %v1063 = vpop.permute.xlu0 %1062
      %1064 = vrot.lane.b32.xlu0 %v592, 20
      %v1065 = vpop.permute.xlu0 %1064
      %1066 = vrot.lane.b32.xlu0 %v594, 20
      %v1067 = vpop.permute.xlu0 %1066
      %1068 = vrot.lane.b32.xlu0 %v597, 20
      %v1069 = vpop.permute.xlu0 %1068
      %1070 = vrot.lane.b32.xlu0 %v599, 20
      %v1071 = vpop.permute.xlu0 %1070
      %1072 = vrot.lane.b32.xlu0 %v602, 20
      %v1073 = vpop.permute.xlu0 %1072
      %1074 = vrot.lane.b32.xlu0 %v604, 20
      %v1075 = vpop.permute.xlu0 %1074
      %1076 = vrot.lane.b32.xlu0 %v607, 20
      %v1077 = vpop.permute.xlu0 %1076
      %1078 = vrot.lane.b32.xlu0 %v609, 20
      %v1079 = vpop.permute.xlu0 %1078
      %1080 = vrot.lane.b32.xlu0 %v620, 20
      %v1081 = vpop.permute.xlu0 %1080
      %1082 = vrot.lane.b32.xlu0 %v622, 20
      %v1083 = vpop.permute.xlu0 %1082
      %1116 = vrot.lane.b32.xlu0 %v352, 24
      %v1117 = vpop.permute.xlu0 %1116
      %1118 = vrot.lane.b32.xlu0 %v353, 24
      %v1119 = vpop.permute.xlu0 %1118
      %1120 = vrot.lane.b32.xlu0 %v355, 24
      %v1121 = vpop.permute.xlu0 %1120
      %1122 = vrot.lane.b32.xlu0 %v356, 24
      %v1123 = vpop.permute.xlu0 %1122
      %1124 = vrot.lane.b32.xlu0 %v358, 24
      %v1125 = vpop.permute.xlu0 %1124
      %1126 = vrot.lane.b32.xlu0 %v359, 24
      %v1127 = vpop.permute.xlu0 %1126
      %1128 = vrot.lane.b32.xlu0 %v361, 24
      %v1129 = vpop.permute.xlu0 %1128
      %1130 = vrot.lane.b32.xlu0 %v362, 24
      %v1131 = vpop.permute.xlu0 %1130
      %1132 = vrot.lane.b32.xlu0 %v364, 24
      %v1133 = vpop.permute.xlu0 %1132
      %1134 = vrot.lane.b32.xlu0 %v365, 24
      %v1135 = vpop.permute.xlu0 %1134
      %1136 = vrot.lane.b32.xlu0 %v367, 24
      %v1137 = vpop.permute.xlu0 %1136
      %1138 = vrot.lane.b32.xlu0 %v368, 24
      %v1139 = vpop.permute.xlu0 %1138
      %1140 = vrot.lane.b32.xlu0 %v370, 24
      %v1141 = vpop.permute.xlu0 %1140
      %1142 = vrot.lane.b32.xlu0 %v371, 24
      %v1143 = vpop.permute.xlu0 %1142
      %1144 = vrot.lane.b32.xlu0 %v373, 24
      %v1145 = vpop.permute.xlu0 %1144
      %1146 = vrot.lane.b32.xlu0 %v374, 24
      %v1147 = vpop.permute.xlu0 %1146
      %1148 = vrot.lane.b32.xlu0 %v376, 24
      %v1149 = vpop.permute.xlu0 %1148
      %1150 = vrot.lane.b32.xlu0 %v377, 24
      %v1151 = vpop.permute.xlu0 %1150
      %1152 = vrot.lane.b32.xlu0 %v379, 24
      %v1153 = vpop.permute.xlu0 %1152
      %1154 = vrot.lane.b32.xlu0 %v380, 24
      %v1155 = vpop.permute.xlu0 %1154
      %1156 = vrot.lane.b32.xlu0 %v382, 24
      %v1157 = vpop.permute.xlu0 %1156
      %1158 = vrot.lane.b32.xlu0 %v383, 24
      %v1159 = vpop.permute.xlu0 %1158
      %1160 = vrot.lane.b32.xlu0 %v385, 24
      %v1161 = vpop.permute.xlu0 %1160
      %1162 = vrot.lane.b32.xlu0 %v386, 24
      %v1163 = vpop.permute.xlu0 %1162
      %1164 = vrot.lane.b32.xlu0 %v388, 24
      %v1165 = vpop.permute.xlu0 %1164
      %1166 = vrot.lane.b32.xlu0 %v389, 24
      %v1167 = vpop.permute.xlu0 %1166
      %1168 = vrot.lane.b32.xlu0 %v391, 24
      %v1169 = vpop.permute.xlu0 %1168
      %1170 = vrot.lane.b32.xlu0 %v392, 24
      %v1171 = vpop.permute.xlu0 %1170
      %1172 = vrot.lane.b32.xlu0 %v394, 24
      %v1173 = vpop.permute.xlu0 %1172
      %1174 = vrot.lane.b32.xlu0 %v395, 24
      %v1175 = vpop.permute.xlu0 %1174
      %1176 = vrot.lane.b32.xlu0 %v397, 24
      %v1177 = vpop.permute.xlu0 %1176
      %1178 = vrot.lane.b32.xlu0 %v398, 24
      %v1179 = vpop.permute.xlu0 %1178
      %1212 = vrot.lane.b32.xlu0 %v461, 28
      %v1213 = vpop.permute.xlu0 %1212
      %1214 = vrot.lane.b32.xlu0 %v463, 28
      %v1215 = vpop.permute.xlu0 %1214
      %1216 = vrot.lane.b32.xlu0 %v466, 28
      %v1217 = vpop.permute.xlu0 %1216
      %1218 = vrot.lane.b32.xlu0 %v468, 28
      %v1219 = vpop.permute.xlu0 %1218
      %1220 = vrot.lane.b32.xlu0 %v471, 28
      %v1221 = vpop.permute.xlu0 %1220
      %1222 = vrot.lane.b32.xlu0 %v473, 28
      %v1223 = vpop.permute.xlu0 %1222
      %1224 = vrot.lane.b32.xlu0 %v476, 28
      %v1225 = vpop.permute.xlu0 %1224
      %1226 = vrot.lane.b32.xlu0 %v478, 28
      %v1227 = vpop.permute.xlu0 %1226
      %1228 = vrot.lane.b32.xlu0 %v481, 28
      %v1229 = vpop.permute.xlu0 %1228
      %1230 = vrot.lane.b32.xlu0 %v483, 28
      %v1231 = vpop.permute.xlu0 %1230
      %1232 = vrot.lane.b32.xlu0 %v486, 28
      %v1233 = vpop.permute.xlu0 %1232
      %1234 = vrot.lane.b32.xlu0 %v488, 28
      %v1235 = vpop.permute.xlu0 %1234
      %1236 = vrot.lane.b32.xlu0 %v491, 28
      %v1237 = vpop.permute.xlu0 %1236
      %1238 = vrot.lane.b32.xlu0 %v493, 28
      %v1239 = vpop.permute.xlu0 %1238
      %1240 = vrot.lane.b32.xlu0 %v496, 28
      %v1241 = vpop.permute.xlu0 %1240
      %1242 = vrot.lane.b32.xlu0 %v498, 28
      %v1243 = vpop.permute.xlu0 %1242
      %1244 = vrot.lane.b32.xlu0 %v501, 28
      %v1245 = vpop.permute.xlu0 %1244
      %1246 = vrot.lane.b32.xlu0 %v503, 28
      %v1247 = vpop.permute.xlu0 %1246
      %1248 = vrot.lane.b32.xlu0 %v506, 28
      %v1249 = vpop.permute.xlu0 %1248
      %1250 = vrot.lane.b32.xlu0 %v508, 28
      %v1251 = vpop.permute.xlu0 %1250
      %1252 = vrot.lane.b32.xlu0 %v511, 28
      %v1253 = vpop.permute.xlu0 %1252
      %1254 = vrot.lane.b32.xlu0 %v513, 28
      %v1255 = vpop.permute.xlu0 %1254
      %1256 = vrot.lane.b32.xlu0 %v516, 28
      %v1257 = vpop.permute.xlu0 %1256
      %1258 = vrot.lane.b32.xlu0 %v518, 28
      %v1259 = vpop.permute.xlu0 %1258
      %1260 = vrot.lane.b32.xlu0 %v521, 28
      %v1261 = vpop.permute.xlu0 %1260
      %1262 = vrot.lane.b32.xlu0 %v523, 28
      %v1263 = vpop.permute.xlu0 %1262
      %1264 = vrot.lane.b32.xlu0 %v526, 28
      %v1265 = vpop.permute.xlu0 %1264
      %1266 = vrot.lane.b32.xlu0 %v528, 28
      %v1267 = vpop.permute.xlu0 %1266
      %1268 = vrot.lane.b32.xlu0 %v615, 28
      %v1269 = vpop.permute.xlu0 %1268
      %1270 = vrot.lane.b32.xlu0 %v617, 28
      %v1271 = vpop.permute.xlu0 %1270
      %1272 = vrot.lane.b32.xlu0 %v628, 28
      %v1273 = vpop.permute.xlu0 %1272
      %1274 = vrot.lane.b32.xlu0 %v630, 28
      %v1275 = vpop.permute.xlu0 %1274
      %1308 = vrot.lane.b32.xlu0 %v542, 32
      %v1309 = vpop.permute.xlu0 %1308
      %1310 = vrot.lane.b32.xlu0 %v544, 32
      %v1311 = vpop.permute.xlu0 %1310
      %1312 = vrot.lane.b32.xlu0 %v547, 32
      %v1313 = vpop.permute.xlu0 %1312
      %1314 = vrot.lane.b32.xlu0 %v549, 32
      %v1315 = vpop.permute.xlu0 %1314
      %1316 = vrot.lane.b32.xlu0 %v552, 32
      %v1317 = vpop.permute.xlu0 %1316
      %1318 = vrot.lane.b32.xlu0 %v554, 32
      %v1319 = vpop.permute.xlu0 %1318
      %1320 = vrot.lane.b32.xlu0 %v557, 32
      %v1321 = vpop.permute.xlu0 %1320
      %1322 = vrot.lane.b32.xlu0 %v559, 32
      %v1323 = vpop.permute.xlu0 %1322
      %1324 = vrot.lane.b32.xlu0 %v562, 32
      %v1325 = vpop.permute.xlu0 %1324
      %1326 = vrot.lane.b32.xlu0 %v564, 32
      %v1327 = vpop.permute.xlu0 %1326
      %1328 = vrot.lane.b32.xlu0 %v567, 32
      %v1329 = vpop.permute.xlu0 %1328
      %1330 = vrot.lane.b32.xlu0 %v569, 32
      %v1331 = vpop.permute.xlu0 %1330
      %1332 = vrot.lane.b32.xlu0 %v572, 32
      %v1333 = vpop.permute.xlu0 %1332
      %1334 = vrot.lane.b32.xlu0 %v574, 32
      %v1335 = vpop.permute.xlu0 %1334
      %1336 = vrot.lane.b32.xlu0 %v577, 32
      %v1337 = vpop.permute.xlu0 %1336
      %1338 = vrot.lane.b32.xlu0 %v579, 32
      %v1339 = vpop.permute.xlu0 %1338
      %1340 = vrot.lane.b32.xlu0 %v582, 32
      %v1341 = vpop.permute.xlu0 %1340
      %1342 = vrot.lane.b32.xlu0 %v584, 32
      %v1343 = vpop.permute.xlu0 %1342
      %1344 = vrot.lane.b32.xlu0 %v587, 32
      %v1345 = vpop.permute.xlu0 %1344
      %1346 = vrot.lane.b32.xlu0 %v589, 32
      %v1347 = vpop.permute.xlu0 %1346
      %1348 = vrot.lane.b32.xlu0 %v592, 32
      %v1349 = vpop.permute.xlu0 %1348
      %1350 = vrot.lane.b32.xlu0 %v594, 32
      %v1351 = vpop.permute.xlu0 %1350
      %1352 = vrot.lane.b32.xlu0 %v597, 32
      %v1353 = vpop.permute.xlu0 %1352
      %1354 = vrot.lane.b32.xlu0 %v599, 32
      %v1355 = vpop.permute.xlu0 %1354
      %1356 = vrot.lane.b32.xlu0 %v602, 32
      %v1357 = vpop.permute.xlu0 %1356
      %1358 = vrot.lane.b32.xlu0 %v604, 32
      %v1359 = vpop.permute.xlu0 %1358
      %1360 = vrot.lane.b32.xlu0 %v607, 32
      %v1361 = vpop.permute.xlu0 %1360
      %1362 = vrot.lane.b32.xlu0 %v609, 32
      %v1363 = vpop.permute.xlu0 %1362
      %1364 = vrot.lane.b32.xlu0 %v620, 32
      %v1365 = vpop.permute.xlu0 %1364
      %1366 = vrot.lane.b32.xlu0 %v622, 32
      %v1367 = vpop.permute.xlu0 %1366
      %1368 = vrot.lane.b32.xlu0 %v633, 32
      %v1369 = vpop.permute.xlu0 %1368
      %1370 = vrot.lane.b32.xlu0 %v635, 32
      %v1371 = vpop.permute.xlu0 %1370
      %v1404 = vsel %vm257, %v346, %v637
      %v1405 = vsel %vm257, %v347, %v639
      %v1406 = vsel %vm257, %v349, %v641
      %v1407 = vsel %vm257, %v350, %v643
      %v1408 = vsel %vm257, %v352, %v645
      %v1409 = vsel %vm257, %v353, %v647
      %v1410 = vsel %vm257, %v355, %v649
      %v1411 = vsel %vm257, %v356, %v651
      %v1412 = vsel %vm257, %v358, %v653
      %v1413 = vsel %vm257, %v359, %v655
      %v1414 = vsel %vm257, %v361, %v657
      %v1415 = vsel %vm257, %v362, %v659
      %v1416 = vsel %vm257, %v364, %v661
      %v1417 = vsel %vm257, %v365, %v663
      %v1418 = vsel %vm257, %v367, %v665
      %v1419 = vsel %vm257, %v368, %v667
      %v1420 = vsel %vm257, %v370, %v669
      %v1421 = vsel %vm257, %v371, %v671
      %v1422 = vsel %vm257, %v373, %v673
      %v1423 = vsel %vm257, %v374, %v675
      %v1424 = vsel %vm257, %v376, %v677
      %v1425 = vsel %vm257, %v377, %v679
      %v1426 = vsel %vm257, %v379, %v681
      %v1427 = vsel %vm257, %v380, %v683
      %v1428 = vsel %vm257, %v382, %v685
      %v1429 = vsel %vm257, %v383, %v687
      %v1430 = vsel %vm257, %v385, %v689
      %v1431 = vsel %vm257, %v386, %v691
      %v1432 = vsel %vm257, %v388, %v693
      %v1433 = vsel %vm257, %v389, %v695
      %v1434 = vsel %vm257, %v391, %v697
      %v1435 = vsel %vm257, %v392, %v699
      %vm1436 = vcmask 64512
      %v1437 = vsel %vm1436, %v1404, %v733
      %v1438 = vsel %vm1436, %v1405, %v735
      %v1439 = vsel %vm1436, %v1406, %v737
      %v1440 = vsel %vm1436, %v1407, %v739
      %v1441 = vsel %vm1436, %v1408, %v741
      %v1442 = vsel %vm1436, %v1409, %v743
      %v1443 = vsel %vm1436, %v1410, %v745
      %v1444 = vsel %vm1436, %v1411, %v747
      %v1445 = vsel %vm1436, %v1412, %v749
      %v1446 = vsel %vm1436, %v1413, %v751
      %v1447 = vsel %vm1436, %v1414, %v753
      %v1448 = vsel %vm1436, %v1415, %v755
      %v1449 = vsel %vm1436, %v1416, %v757
      %v1450 = vsel %vm1436, %v1417, %v759
      %v1451 = vsel %vm1436, %v1418, %v761
      %v1452 = vsel %vm1436, %v1419, %v763
      %v1453 = vsel %vm1436, %v1420, %v765
      %v1454 = vsel %vm1436, %v1421, %v767
      %v1455 = vsel %vm1436, %v1422, %v769
      %v1456 = vsel %vm1436, %v1423, %v771
      %v1457 = vsel %vm1436, %v1424, %v773
      %v1458 = vsel %vm1436, %v1425, %v775
      %v1459 = vsel %vm1436, %v1426, %v777
      %v1460 = vsel %vm1436, %v1427, %v779
      %v1461 = vsel %vm1436, %v1428, %v781
      %v1462 = vsel %vm1436, %v1429, %v783
      %v1463 = vsel %vm1436, %v1430, %v785
      %v1464 = vsel %vm1436, %v1431, %v787
      %v1465 = vsel %vm1436, %v1432, %v789
      %v1466 = vsel %vm1436, %v1433, %v791
      %v1467 = vsel %vm1436, %v1434, %v793
      %v1468 = vsel %vm1436, %v1435, %v795
      %vm1469 = vcmask 97280
      %v1470 = vsel %vm1469, %v1437, %v829
      %v1471 = vsel %vm1469, %v1438, %v831
      %v1472 = vsel %vm1469, %v1439, %v833
      %v1473 = vsel %vm1469, %v1440, %v835
      %v1474 = vsel %vm1469, %v1441, %v837
      %v1475 = vsel %vm1469, %v1442, %v839
      %v1476 = vsel %vm1469, %v1443, %v841
      %v1477 = vsel %vm1469, %v1444, %v843
      %v1478 = vsel %vm1469, %v1445, %v845
      %v1479 = vsel %vm1469, %v1446, %v847
      %v1480 = vsel %vm1469, %v1447, %v849
      %v1481 = vsel %vm1469, %v1448, %v851
      %v1482 = vsel %vm1469, %v1449, %v853
      %v1483 = vsel %vm1469, %v1450, %v855
      %v1484 = vsel %vm1469, %v1451, %v857
      %v1485 = vsel %vm1469, %v1452, %v859
      %v1486 = vsel %vm1469, %v1453, %v861
      %v1487 = vsel %vm1469, %v1454, %v863
      %v1488 = vsel %vm1469, %v1455, %v865
      %v1489 = vsel %vm1469, %v1456, %v867
      %v1490 = vsel %vm1469, %v1457, %v869
      %v1491 = vsel %vm1469, %v1458, %v871
      %v1492 = vsel %vm1469, %v1459, %v873
      %v1493 = vsel %vm1469, %v1460, %v875
      %v1494 = vsel %vm1469, %v1461, %v877
      %v1495 = vsel %vm1469, %v1462, %v879
      %v1496 = vsel %vm1469, %v1463, %v881
      %v1497 = vsel %vm1469, %v1464, %v883
      %v1498 = vsel %vm1469, %v1465, %v885
      %v1499 = vsel %vm1469, %v1466, %v887
      %v1500 = vsel %vm1469, %v1467, %v889
      %v1501 = vsel %vm1469, %v1468, %v891
      %vm1502 = vcmask 130048
      %v1503 = vsel %vm1502, %v1470, %v925
      %v1504 = vsel %vm1502, %v1471, %v927
      %v1505 = vsel %vm1502, %v1472, %v929
      %v1506 = vsel %vm1502, %v1473, %v931
      %v1507 = vsel %vm1502, %v1474, %v933
      %v1508 = vsel %vm1502, %v1475, %v935
      %v1509 = vsel %vm1502, %v1476, %v937
      %v1510 = vsel %vm1502, %v1477, %v939
      %v1511 = vsel %vm1502, %v1478, %v941
      %v1512 = vsel %vm1502, %v1479, %v943
      %v1513 = vsel %vm1502, %v1480, %v945
      %v1514 = vsel %vm1502, %v1481, %v947
      %v1515 = vsel %vm1502, %v1482, %v949
      %v1516 = vsel %vm1502, %v1483, %v951
      %v1517 = vsel %vm1502, %v1484, %v953
      %v1518 = vsel %vm1502, %v1485, %v955
      %v1519 = vsel %vm1502, %v1486, %v957
      %v1520 = vsel %vm1502, %v1487, %v959
      %v1521 = vsel %vm1502, %v1488, %v961
      %v1522 = vsel %vm1502, %v1489, %v963
      %v1523 = vsel %vm1502, %v1490, %v965
      %v1524 = vsel %vm1502, %v1491, %v967
      %v1525 = vsel %vm1502, %v1492, %v969
      %v1526 = vsel %vm1502, %v1493, %v971
      %v1527 = vsel %vm1502, %v1494, %v973
      %v1528 = vsel %vm1502, %v1495, %v975
      %v1529 = vsel %vm1502, %v1496, %v977
      %v1530 = vsel %vm1502, %v1497, %v979
      %v1531 = vsel %vm1502, %v1498, %v981
      %v1532 = vsel %vm1502, %v1499, %v983
      %v1533 = vsel %vm1502, %v1500, %v985
      %v1534 = vsel %vm1502, %v1501, %v987
      %vm1535 = vcmask 162816
      %v1536 = vsel %vm1535, %v1503, %v1021
      %v1537 = vsel %vm1535, %v1504, %v1023
      %v1538 = vsel %vm1535, %v1505, %v1025
      %v1539 = vsel %vm1535, %v1506, %v1027
      %v1540 = vsel %vm1535, %v1507, %v1029
      %v1541 = vsel %vm1535, %v1508, %v1031
      %v1542 = vsel %vm1535, %v1509, %v1033
      %v1543 = vsel %vm1535, %v1510, %v1035
      %v1544 = vsel %vm1535, %v1511, %v1037
      %v1545 = vsel %vm1535, %v1512, %v1039
      %v1546 = vsel %vm1535, %v1513, %v1041
      %v1547 = vsel %vm1535, %v1514, %v1043
      %v1548 = vsel %vm1535, %v1515, %v1045
      %v1549 = vsel %vm1535, %v1516, %v1047
      %v1550 = vsel %vm1535, %v1517, %v1049
      %v1551 = vsel %vm1535, %v1518, %v1051
      %v1552 = vsel %vm1535, %v1519, %v1053
      %v1553 = vsel %vm1535, %v1520, %v1055
      %v1554 = vsel %vm1535, %v1521, %v1057
      %v1555 = vsel %vm1535, %v1522, %v1059
      %v1556 = vsel %vm1535, %v1523, %v1061
      %v1557 = vsel %vm1535, %v1524, %v1063
      %v1558 = vsel %vm1535, %v1525, %v1065
      %v1559 = vsel %vm1535, %v1526, %v1067
      %v1560 = vsel %vm1535, %v1527, %v1069
      %v1561 = vsel %vm1535, %v1528, %v1071
      %v1562 = vsel %vm1535, %v1529, %v1073
      %v1563 = vsel %vm1535, %v1530, %v1075
      %v1564 = vsel %vm1535, %v1531, %v1077
      %v1565 = vsel %vm1535, %v1532, %v1079
      %v1566 = vsel %vm1535, %v1533, %v1081
      %v1567 = vsel %vm1535, %v1534, %v1083
      %vm1568 = vcmask 195584
      %v1569 = vsel %vm1568, %v1536, %v1117
      %v1570 = vsel %vm1568, %v1537, %v1119
      %v1571 = vsel %vm1568, %v1538, %v1121
      %v1572 = vsel %vm1568, %v1539, %v1123
      %v1573 = vsel %vm1568, %v1540, %v1125
      %v1574 = vsel %vm1568, %v1541, %v1127
      %v1575 = vsel %vm1568, %v1542, %v1129
      %v1576 = vsel %vm1568, %v1543, %v1131
      %v1577 = vsel %vm1568, %v1544, %v1133
      %v1578 = vsel %vm1568, %v1545, %v1135
      %v1579 = vsel %vm1568, %v1546, %v1137
      %v1580 = vsel %vm1568, %v1547, %v1139
      %v1581 = vsel %vm1568, %v1548, %v1141
      %v1582 = vsel %vm1568, %v1549, %v1143
      %v1583 = vsel %vm1568, %v1550, %v1145
      %v1584 = vsel %vm1568, %v1551, %v1147
      %v1585 = vsel %vm1568, %v1552, %v1149
      %v1586 = vsel %vm1568, %v1553, %v1151
      %v1587 = vsel %vm1568, %v1554, %v1153
      %v1588 = vsel %vm1568, %v1555, %v1155
      %v1589 = vsel %vm1568, %v1556, %v1157
      %v1590 = vsel %vm1568, %v1557, %v1159
      %v1591 = vsel %vm1568, %v1558, %v1161
      %v1592 = vsel %vm1568, %v1559, %v1163
      %v1593 = vsel %vm1568, %v1560, %v1165
      %v1594 = vsel %vm1568, %v1561, %v1167
      %v1595 = vsel %vm1568, %v1562, %v1169
      %v1596 = vsel %vm1568, %v1563, %v1171
      %v1597 = vsel %vm1568, %v1564, %v1173
      %v1598 = vsel %vm1568, %v1565, %v1175
      %v1599 = vsel %vm1568, %v1566, %v1177
      %v1600 = vsel %vm1568, %v1567, %v1179
      %vm1601 = vcmask 228352
      %v1602 = vsel %vm1601, %v1569, %v1213
      %v1603 = vsel %vm1601, %v1570, %v1215
      %v1604 = vsel %vm1601, %v1571, %v1217
      %v1605 = vsel %vm1601, %v1572, %v1219
      %v1606 = vsel %vm1601, %v1573, %v1221
      %v1607 = vsel %vm1601, %v1574, %v1223
      %v1608 = vsel %vm1601, %v1575, %v1225
      %v1609 = vsel %vm1601, %v1576, %v1227
      %v1610 = vsel %vm1601, %v1577, %v1229
      %v1611 = vsel %vm1601, %v1578, %v1231
      %v1612 = vsel %vm1601, %v1579, %v1233
      %v1613 = vsel %vm1601, %v1580, %v1235
      %v1614 = vsel %vm1601, %v1581, %v1237
      %v1615 = vsel %vm1601, %v1582, %v1239
      %v1616 = vsel %vm1601, %v1583, %v1241
      %v1617 = vsel %vm1601, %v1584, %v1243
      %v1618 = vsel %vm1601, %v1585, %v1245
      %v1619 = vsel %vm1601, %v1586, %v1247
      %v1620 = vsel %vm1601, %v1587, %v1249
      %v1621 = vsel %vm1601, %v1588, %v1251
      %v1622 = vsel %vm1601, %v1589, %v1253
      %v1623 = vsel %vm1601, %v1590, %v1255
      %v1624 = vsel %vm1601, %v1591, %v1257
      %v1625 = vsel %vm1601, %v1592, %v1259
      %v1626 = vsel %vm1601, %v1593, %v1261
      %v1627 = vsel %vm1601, %v1594, %v1263
      %v1628 = vsel %vm1601, %v1595, %v1265
      %v1629 = vsel %vm1601, %v1596, %v1267
      %v1630 = vsel %vm1601, %v1597, %v1269
      %v1631 = vsel %vm1601, %v1598, %v1271
      %v1632 = vsel %vm1601, %v1599, %v1273
      %v1633 = vsel %vm1601, %v1600, %v1275
      %vm1634 = vcmask 261120
      %v1635 = vsel %vm1634, %v1602, %v1309
      %v1636 = vsel %vm1634, %v1603, %v1311
      %v1637 = vsel %vm1634, %v1604, %v1313
      %v1638 = vsel %vm1634, %v1605, %v1315
      %v1639 = vsel %vm1634, %v1606, %v1317
      %v1640 = vsel %vm1634, %v1607, %v1319
      %v1641 = vsel %vm1634, %v1608, %v1321
      %v1642 = vsel %vm1634, %v1609, %v1323
      %v1643 = vsel %vm1634, %v1610, %v1325
      %v1644 = vsel %vm1634, %v1611, %v1327
      %v1645 = vsel %vm1634, %v1612, %v1329
      %v1646 = vsel %vm1634, %v1613, %v1331
      %v1647 = vsel %vm1634, %v1614, %v1333
      %v1648 = vsel %vm1634, %v1615, %v1335
      %v1649 = vsel %vm1634, %v1616, %v1337
      %v1650 = vsel %vm1634, %v1617, %v1339
      %v1651 = vsel %vm1634, %v1618, %v1341
      %v1652 = vsel %vm1634, %v1619, %v1343
      %v1653 = vsel %vm1634, %v1620, %v1345
      %v1654 = vsel %vm1634, %v1621, %v1347
      %v1655 = vsel %vm1634, %v1622, %v1349
      %v1656 = vsel %vm1634, %v1623, %v1351
      %v1657 = vsel %vm1634, %v1624, %v1353
      %v1658 = vsel %vm1634, %v1625, %v1355
      %v1659 = vsel %vm1634, %v1626, %v1357
      %v1660 = vsel %vm1634, %v1627, %v1359
      %v1661 = vsel %vm1634, %v1628, %v1361
      %v1662 = vsel %vm1634, %v1629, %v1363
      %v1663 = vsel %vm1634, %v1630, %v1365
      %v1664 = vsel %vm1634, %v1631, %v1367
      %v1665 = vsel %vm1634, %v1632, %v1369
      %v1666 = vsel %vm1634, %v1633, %v1371
      %v1667 = vld [vmem:[%s1] sm:$0xff]
      %v1668 = vld [vmem:[%s1 + $0x8] sm:$0xff]
      %v1669 = vld [vmem:[%s1 + $0x10] sm:$0xff]
      %v1670 = vld [vmem:[%s1 + $0x18] sm:$0xff]
      %v1671 = vld [vmem:[%s1 + $0x20] sm:$0xf]
      %v1672 = vld [vmem:[%s2] sm:$0x1]
      %v1674 = vlaneseq
      %v1675 = vshrl.u32 %v1674, 7
      %v1676 = vsub.s32 0, %v1675
      %v1677 = vrot.slane %v1672, %v1676
      %vm1679 = vcmask 293888
      %v1681 = vsel %vm1679, %v1635, 0
      %v1684 = vsel %vm1679, %v1636, 0
      %v1687 = vsel %vm1679, %v1637, 0
      %v1690 = vsel %vm1679, %v1638, 0
      %v1693 = vsel %vm1679, %v1639, 0
      %v1696 = vsel %vm1679, %v1640, 0
      %v1699 = vsel %vm1679, %v1641, 0
      %v1702 = vsel %vm1679, %v1642, 0
      %v1705 = vsel %vm1679, %v1643, 0
      %v1708 = vsel %vm1679, %v1644, 0
      %v1711 = vsel %vm1679, %v1645, 0
      %v1714 = vsel %vm1679, %v1646, 0
      %v1717 = vsel %vm1679, %v1647, 0
      %v1720 = vsel %vm1679, %v1648, 0
      %v1723 = vsel %vm1679, %v1649, 0
      %v1726 = vsel %vm1679, %v1650, 0
      %v1729 = vsel %vm1679, %v1651, 0
      %v1732 = vsel %vm1679, %v1652, 0
      %v1735 = vsel %vm1679, %v1653, 0
      %v1738 = vsel %vm1679, %v1654, 0
      %v1741 = vsel %vm1679, %v1655, 0
      %v1744 = vsel %vm1679, %v1656, 0
      %v1747 = vsel %vm1679, %v1657, 0
      %v1750 = vsel %vm1679, %v1658, 0
      %v1753 = vsel %vm1679, %v1659, 0
      %v1756 = vsel %vm1679, %v1660, 0
      %v1759 = vsel %vm1679, %v1661, 0
      %v1762 = vsel %vm1679, %v1662, 0
      %v1765 = vsel %vm1679, %v1663, 0
      %v1768 = vsel %vm1679, %v1664, 0
      %v1771 = vsel %vm1679, %v1665, 0
      %v1774 = vsel %vm1679, %v1666, 0
      %vm1776 = vcmask 1043456
      %v1778 = vsel %vm1776, %v1671, 0
      %1780 = vmatprep.subr.mxu0 0.0
      %1781 = vmatpush1.msra.mxu0 %v1667
      %1782 = vmatprep.subr.mxu0 0.0
      %1783 = vmatpush1.msra.mxu0 %v1668
      %1784 = vmatprep.subr.mxu0 0.0
      %1785 = vmatpush1.msra.mxu0 %v1669
      %1786 = vmatprep.subr.mxu0 0.0
      %1787 = vmatpush1.msra.mxu0 %v1670
      %1788 = vmatprep.subr.mxu0 0.0
      %1789 = vmatpush1.msra.mxu0 %v1778
      %1790 = vmatprep.subr.mxu0 0.0
      %1791 = vmatpush1.msra.mxu0 0.0
      %1792 = vmatprep.subr.mxu0 0.0
      %1793 = vmatpush1.msra.mxu0 0.0
      %1794 = vmatprep.subr.mxu0 0.0
      %1795 = vmatpush1.msra.mxu0 0.0
      %1796 = vmatprep.subr.mxu0 0.0
      %1797 = vmatpush1.msra.mxu0 0.0
      %1798 = vmatprep.subr.mxu0 0.0
      %1799 = vmatpush1.msra.mxu0 0.0
      %1800 = vmatprep.subr.mxu0 0.0
      %1801 = vmatpush1.msra.mxu0 0.0
      %1802 = vmatprep.subr.mxu0 0.0
      %1803 = vmatpush1.msra.mxu0 0.0
      %1804 = vmatprep.subr.mxu0 0.0
      %1805 = vmatpush1.msra.mxu0 0.0
      %1806 = vmatprep.subr.mxu0 0.0
      %1807 = vmatpush1.msra.mxu0 0.0
      %1808 = vmatprep.subr.mxu0 0.0
      %1809 = vmatpush1.msra.mxu0 0.0
      %1810 = vmatprep.subr.mxu0 0.0
      %1811 = vmatpush1.msra.mxu0 0.0
      %1812 = vmatprep.subr.mxu0 0.0
      %1813 = vmatpush1.msra.mxu0 0.0
      %1814 = vmatprep.subr.mxu0 0.0
      %1815 = vmatpush1.msra.mxu0 0.0
      %1816 = vmatprep.subr.mxu0 0.0
      %1817 = vmatpush1.msra.mxu0 0.0
      %1818 = vmatprep.subr.mxu0 0.0
      %1819 = vmatpush1.msra.mxu0 0.0
      %1820 = vmatprep.subr.mxu0 0.0
      %1821 = vmatpush1.msra.mxu0 0.0
      %1822 = vmatprep.subr.mxu0 0.0
      %1823 = vmatpush1.msra.mxu0 0.0
      %1824 = vmatprep.subr.mxu0 0.0
      %1825 = vmatpush1.msra.mxu0 0.0
      %1826 = vmatprep.subr.mxu0 0.0
      %1827 = vmatpush1.msra.mxu0 0.0
      %1828 = vmatprep.subr.mxu0 0.0
      %1829 = vmatpush1.msra.mxu0 0.0
      %1830 = vmatprep.subr.mxu0 0.0
      %1831 = vmatpush1.msra.mxu0 0.0
      %1832 = vmatprep.subr.mxu0 0.0
      %1833 = vmatpush1.msra.mxu0 0.0
      %1834 = vmatprep.subr.mxu0 0.0
      %1835 = vmatpush1.msra.mxu0 0.0
      %1836 = vmatprep.subr.mxu0 0.0
      %1837 = vmatpush1.msra.mxu0 0.0
      %1838 = vmatprep.subr.mxu0 0.0
      %1839 = vmatpush1.msra.mxu0 0.0
      %1840 = vmatprep.subr.mxu0 0.0
      %1841 = vmatpush1.msra.mxu0 0.0
      %1842 = vmatprep.subr.mxu0 0.0
      %1843 = vmatpush1.msra.mxu0 0.0
      %1844 = vmatprep.mubr.f32.mxu0 0.0
      %1845 = vmatmul.mubr.f32.gmra.mrb[0].mxu0 %v1681
      %v1846 = vpop.f32.mrb[0].mxu0
      %v1847 = vadd.f32 %v1677, %v1846
      %v1848 = vpop.f32.mrb[0].mxu0
      %1849 = vmatprep.mubr.f32.mxu0 0.0
      %1850 = vmatmul.mubr.f32.gmra.mrb[0].mxu0 %v1684
      %v1851 = vpop.f32.mrb[0].mxu0
      %v1852 = vadd.f32 %v1677, %v1851
      %v1853 = vpop.f32.mrb[0].mxu0
      %1854 = vmatprep.mubr.f32.mxu0 0.0
      %1855 = vmatmul.mubr.f32.gmra.mrb[0].mxu0 %v1687
      %v1856 = vpop.f32.mrb[0].mxu0
      %v1857 = vadd.f32 %v1677, %v1856
      %v1858 = vpop.f32.mrb[0].mxu0
      %1859 = vmatprep.mubr.f32.mxu0 0.0
      %1860 = vmatmul.mubr.f32.gmra.mrb[0].mxu0 %v1690
      %v1861 = vpop.f32.mrb[0].mxu0
      %v1862 = vadd.f32 %v1677, %v1861
      %v1863 = vpop.f32.mrb[0].mxu0
      %1864 = vmatprep.mubr.f32.mxu0 0.0
      %1865 = vmatmul.mubr.f32.gmra.mrb[0].mxu0 %v1693
      %v1866 = vpop.f32.mrb[0].mxu0
      %v1867 = vadd.f32 %v1677, %v1866
      %v1868 = vpop.f32.mrb[0].mxu0
      %1869 = vmatprep.mubr.f32.mxu0 0.0
      %1870 = vmatmul.mubr.f32.gmra.mrb[0].mxu0 %v1696
      %v1871 = vpop.f32.mrb[0].mxu0
      %v1872 = vadd.f32 %v1677, %v1871
      %v1873 = vpop.f32.mrb[0].mxu0
      %1874 = vmatprep.mubr.f32.mxu0 0.0
      %1875 = vmatmul.mubr.f32.gmra.mrb[0].mxu0 %v1699
      %v1876 = vpop.f32.mrb[0].mxu0
      %v1877 = vadd.f32 %v1677, %v1876
      %v1878 = vpop.f32.mrb[0].mxu0
      %1879 = vmatprep.mubr.f32.mxu0 0.0
      %1880 = vmatmul.mubr.f32.gmra.mrb[0].mxu0 %v1702
      %v1881 = vpop.f32.mrb[0].mxu0
      %v1882 = vadd.f32 %v1677, %v1881
      %v1883 = vpop.f32.mrb[0].mxu0
      %1884 = vmatprep.mubr.f32.mxu0 0.0
      %1885 = vmatmul.mubr.f32.gmra.mrb[0].mxu0 %v1705
      %v1886 = vpop.f32.mrb[0].mxu0
      %v1887 = vadd.f32 %v1677, %v1886
      %v1888 = vpop.f32.mrb[0].mxu0
      %1889 = vmatprep.mubr.f32.mxu0 0.0
      %1890 = vmatmul.mubr.f32.gmra.mrb[0].mxu0 %v1708
      %v1891 = vpop.f32.mrb[0].mxu0
      %v1892 = vadd.f32 %v1677, %v1891
      %v1893 = vpop.f32.mrb[0].mxu0
      %1894 = vmatprep.mubr.f32.mxu0 0.0
      %1895 = vmatmul.mubr.f32.gmra.mrb[0].mxu0 %v1711
      %v1896 = vpop.f32.mrb[0].mxu0
      %v1897 = vadd.f32 %v1677, %v1896
      %v1898 = vpop.f32.mrb[0].mxu0
      %1899 = vmatprep.mubr.f32.mxu0 0.0
      %1900 = vmatmul.mubr.f32.gmra.mrb[0].mxu0 %v1714
      %v1901 = vpop.f32.mrb[0].mxu0
      %v1902 = vadd.f32 %v1677, %v1901
      %v1903 = vpop.f32.mrb[0].mxu0
      %1904 = vmatprep.mubr.f32.mxu0 0.0
      %1905 = vmatmul.mubr.f32.gmra.mrb[0].mxu0 %v1717
      %v1906 = vpop.f32.mrb[0].mxu0
      %v1907 = vadd.f32 %v1677, %v1906
      %v1908 = vpop.f32.mrb[0].mxu0
      %1909 = vmatprep.mubr.f32.mxu0 0.0
      %1910 = vmatmul.mubr.f32.gmra.mrb[0].mxu0 %v1720
      %v1911 = vpop.f32.mrb[0].mxu0
      %v1912 = vadd.f32 %v1677, %v1911
      %v1913 = vpop.f32.mrb[0].mxu0
      %1914 = vmatprep.mubr.f32.mxu0 0.0
      %1915 = vmatmul.mubr.f32.gmra.mrb[0].mxu0 %v1723
      %v1916 = vpop.f32.mrb[0].mxu0
      %v1917 = vadd.f32 %v1677, %v1916
      %v1918 = vpop.f32.mrb[0].mxu0
      %1919 = vmatprep.mubr.f32.mxu0 0.0
      %1920 = vmatmul.mubr.f32.gmra.mrb[0].mxu0 %v1726
      %v1921 = vpop.f32.mrb[0].mxu0
      %v1922 = vadd.f32 %v1677, %v1921
      %v1923 = vpop.f32.mrb[0].mxu0
      %1924 = vmatprep.mubr.f32.mxu0 0.0
      %1925 = vmatmul.mubr.f32.gmra.mrb[0].mxu0 %v1729
      %v1926 = vpop.f32.mrb[0].mxu0
      %v1927 = vadd.f32 %v1677, %v1926
      %v1928 = vpop.f32.mrb[0].mxu0
      %1929 = vmatprep.mubr.f32.mxu0 0.0
      %1930 = vmatmul.mubr.f32.gmra.mrb[0].mxu0 %v1732
      %v1931 = vpop.f32.mrb[0].mxu0
      %v1932 = vadd.f32 %v1677, %v1931
      %v1933 = vpop.f32.mrb[0].mxu0
      %1934 = vmatprep.mubr.f32.mxu0 0.0
      %1935 = vmatmul.mubr.f32.gmra.mrb[0].mxu0 %v1735
      %v1936 = vpop.f32.mrb[0].mxu0
      %v1937 = vadd.f32 %v1677, %v1936
      %v1938 = vpop.f32.mrb[0].mxu0
      %1939 = vmatprep.mubr.f32.mxu0 0.0
      %1940 = vmatmul.mubr.f32.gmra.mrb[0].mxu0 %v1738
      %v1941 = vpop.f32.mrb[0].mxu0
      %v1942 = vadd.f32 %v1677, %v1941
      %v1943 = vpop.f32.mrb[0].mxu0
      %1944 = vmatprep.mubr.f32.mxu0 0.0
      %1945 = vmatmul.mubr.f32.gmra.mrb[0].mxu0 %v1741
      %v1946 = vpop.f32.mrb[0].mxu0
      %v1947 = vadd.f32 %v1677, %v1946
      %v1948 = vpop.f32.mrb[0].mxu0
      %1949 = vmatprep.mubr.f32.mxu0 0.0
      %1950 = vmatmul.mubr.f32.gmra.mrb[0].mxu0 %v1744
      %v1951 = vpop.f32.mrb[0].mxu0
      %v1952 = vadd.f32 %v1677, %v1951
      %v1953 = vpop.f32.mrb[0].mxu0
      %1954 = vmatprep.mubr.f32.mxu0 0.0
      %1955 = vmatmul.mubr.f32.gmra.mrb[0].mxu0 %v1747
      %v1956 = vpop.f32.mrb[0].mxu0
      %v1957 = vadd.f32 %v1677, %v1956
      %v1958 = vpop.f32.mrb[0].mxu0
      %1959 = vmatprep.mubr.f32.mxu0 0.0
      %1960 = vmatmul.mubr.f32.gmra.mrb[0].mxu0 %v1750
      %v1961 = vpop.f32.mrb[0].mxu0
      %v1962 = vadd.f32 %v1677, %v1961
      %v1963 = vpop.f32.mrb[0].mxu0
      %1964 = vmatprep.mubr.f32.mxu0 0.0
      %1965 = vmatmul.mubr.f32.gmra.mrb[0].mxu0 %v1753
      %v1966 = vpop.f32.mrb[0].mxu0
      %v1967 = vadd.f32 %v1677, %v1966
      %v1968 = vpop.f32.mrb[0].mxu0
      %1969 = vmatprep.mubr.f32.mxu0 0.0
      %1970 = vmatmul.mubr.f32.gmra.mrb[0].mxu0 %v1756
      %v1971 = vpop.f32.mrb[0].mxu0
      %v1972 = vadd.f32 %v1677, %v1971
      %v1973 = vpop.f32.mrb[0].mxu0
      %1974 = vmatprep.mubr.f32.mxu0 0.0
      %1975 = vmatmul.mubr.f32.gmra.mrb[0].mxu0 %v1759
      %v1976 = vpop.f32.mrb[0].mxu0
      %v1977 = vadd.f32 %v1677, %v1976
      %v1978 = vpop.f32.mrb[0].mxu0
      %1979 = vmatprep.mubr.f32.mxu0 0.0
      %1980 = vmatmul.mubr.f32.gmra.mrb[0].mxu0 %v1762
      %v1981 = vpop.f32.mrb[0].mxu0
      %v1982 = vadd.f32 %v1677, %v1981
      %v1983 = vpop.f32.mrb[0].mxu0
      %1984 = vmatprep.mubr.f32.mxu0 0.0
      %1985 = vmatmul.mubr.f32.gmra.mrb[0].mxu0 %v1765
      %v1986 = vpop.f32.mrb[0].mxu0
      %v1987 = vadd.f32 %v1677, %v1986
      %v1988 = vpop.f32.mrb[0].mxu0
      %1989 = vmatprep.mubr.f32.mxu0 0.0
      %1990 = vmatmul.mubr.f32.gmra.mrb[0].mxu0 %v1768
      %v1991 = vpop.f32.mrb[0].mxu0
      %v1992 = vadd.f32 %v1677, %v1991
      %v1993 = vpop.f32.mrb[0].mxu0
      %1994 = vmatprep.mubr.f32.mxu0 0.0
      %1995 = vmatmul.mubr.f32.gmra.mrb[0].mxu0 %v1771
      %v1996 = vpop.f32.mrb[0].mxu0
      %v1997 = vadd.f32 %v1677, %v1996
      %v1998 = vpop.f32.mrb[0].mxu0
      %1999 = vmatprep.mubr.f32.mxu0 0.0
      %2000 = vmatmul.mubr.f32.gmra.mrb[0].mxu0 %v1774
      %v2001 = vpop.f32.mrb[0].mxu0
      %v2002 = vadd.f32 %v1677, %v2001
      %v2003 = vpop.f32.mrb[0].mxu0
      %2004 = vdwg.mxu0
      %v2005 = vmax.f32 %v1847, 0.0
      %v2006 = vmax.f32 %v1852, 0.0
      %v2007 = vmax.f32 %v1857, 0.0
      %v2008 = vmax.f32 %v1862, 0.0
      %v2009 = vmax.f32 %v1867, 0.0
      %v2010 = vmax.f32 %v1872, 0.0
      %v2011 = vmax.f32 %v1877, 0.0
      %v2012 = vmax.f32 %v1882, 0.0
      %v2013 = vmax.f32 %v1887, 0.0
      %v2014 = vmax.f32 %v1892, 0.0
      %v2015 = vmax.f32 %v1897, 0.0
      %v2016 = vmax.f32 %v1902, 0.0
      %v2017 = vmax.f32 %v1907, 0.0
      %v2018 = vmax.f32 %v1912, 0.0
      %v2019 = vmax.f32 %v1917, 0.0
      %v2020 = vmax.f32 %v1922, 0.0
      %v2021 = vmax.f32 %v1927, 0.0
      %v2022 = vmax.f32 %v1932, 0.0
      %v2023 = vmax.f32 %v1937, 0.0
      %v2024 = vmax.f32 %v1942, 0.0
      %v2025 = vmax.f32 %v1947, 0.0
      %v2026 = vmax.f32 %v1952, 0.0
      %v2027 = vmax.f32 %v1957, 0.0
      %v2028 = vmax.f32 %v1962, 0.0
      %v2029 = vmax.f32 %v1967, 0.0
      %v2030 = vmax.f32 %v1972, 0.0
      %v2031 = vmax.f32 %v1977, 0.0
      %v2032 = vmax.f32 %v1982, 0.0
      %v2033 = vmax.f32 %v1987, 0.0
      %v2034 = vmax.f32 %v1992, 0.0
      %v2035 = vmax.f32 %v1997, 0.0
      %v2036 = vmax.f32 %v2002, 0.0
      %2037 = vst.msk [vmem:[#allocation3] sm:$0xff] %vm257, 0.0
      %2038 = vst.msk [vmem:[#allocation3 + $0x8] sm:$0xff] %vm257, 0.0
      %2039 = vst.msk [vmem:[#allocation3 + $0x10] sm:$0x3] %vm260, 0.0
      %2040 = vst.msk [vmem:[#allocation3 + $0x18] sm:$0xff] %vm257, 0.0
      %2041 = vst.msk [vmem:[#allocation3 + $0x20] sm:$0xff] %vm257, 0.0
      %2042 = vst.msk [vmem:[#allocation3 + $0x28] sm:$0x3] %vm260, 0.0
      %2043 = vst.msk [vmem:[#allocation3 + $0x30] sm:$0xff] %vm257, 0.0
      %2044 = vst.msk [vmem:[#allocation3 + $0x38] sm:$0xff] %vm257, 0.0
      %2045 = vst.msk [vmem:[#allocation3 + $0x40] sm:$0x3] %vm260, 0.0
      %2046 = vst.msk [vmem:[#allocation3 + $0x48] sm:$0xff] %vm257, 0.0
      %2047 = vst.msk [vmem:[#allocation3 + $0x50] sm:$0xff] %vm257, 0.0
      %2048 = vst.msk [vmem:[#allocation3 + $0x58] sm:$0x3] %vm260, 0.0
      %2049 = vst.msk [vmem:[#allocation3 + $0x60] sm:$0xff] %vm257, 0.0
      %2050 = vst.msk [vmem:[#allocation3 + $0x68] sm:$0xff] %vm257, 0.0
      %2051 = vst.msk [vmem:[#allocation3 + $0x70] sm:$0x3] %vm260, 0.0
      %2052 = vst.msk [vmem:[#allocation3 + $0x78] sm:$0xff] %vm257, 0.0
      %2053 = vst.msk [vmem:[#allocation3 + $0x80] sm:$0xff] %vm257, 0.0
      %2054 = vst.msk [vmem:[#allocation3 + $0x88] sm:$0x3] %vm260, 0.0
      %2055 = vst.msk [vmem:[#allocation3 + $0x90] sm:$0xff] %vm257, 0.0
      %2056 = vst.msk [vmem:[#allocation3 + $0x98] sm:$0xff] %vm257, 0.0
      %2057 = vst.msk [vmem:[#allocation3 + $0xa0] sm:$0x3] %vm260, 0.0
      %2058 = vst.msk [vmem:[#allocation3 + $0xa8] sm:$0xff] %vm257, 0.0
      %2059 = vst.msk [vmem:[#allocation3 + $0xb0] sm:$0xff] %vm257, 0.0
      %2060 = vst.msk [vmem:[#allocation3 + $0xb8] sm:$0x3] %vm260, 0.0
      %2061 = vst.msk [vmem:[#allocation3 + $0xc0] sm:$0xff] %vm257, 0.0
      %2062 = vst.msk [vmem:[#allocation3 + $0xc8] sm:$0xff] %vm257, 0.0
      %2063 = vst.msk [vmem:[#allocation3 + $0xd0] sm:$0x3] %vm260, 0.0
      %2064 = vst.msk [vmem:[#allocation3 + $0xd8] sm:$0xff] %vm257, 0.0
      %2065 = vst.msk [vmem:[#allocation3 + $0xe0] sm:$0xff] %vm257, 0.0
      %2066 = vst.msk [vmem:[#allocation3 + $0xe8] sm:$0x3] %vm260, 0.0
      %2067 = vst.msk [vmem:[#allocation3 + $0xf0] sm:$0xff] %vm257, 0.0
      %2068 = vst.msk [vmem:[#allocation3 + $0xf8] sm:$0xff] %vm257, 0.0
      %2069 = vst.msk [vmem:[#allocation3 + $0x100] sm:$0x3] %vm260, 0.0
      %2070 = vst.msk [vmem:[#allocation3 + $0x108] sm:$0xff] %vm257, 0.0
      %2071 = vst.msk [vmem:[#allocation3 + $0x110] sm:$0xff] %vm257, 0.0
      %2072 = vst.msk [vmem:[#allocation3 + $0x118] sm:$0x3] %vm260, 0.0
      %2073 = vst.msk [vmem:[#allocation3 + $0x120] sm:$0xff] %vm257, 0.0
      %2074 = vst.msk [vmem:[#allocation3 + $0x128] sm:$0xff] %vm257, 0.0
      %2075 = vst.msk [vmem:[#allocation3 + $0x130] sm:$0x3] %vm260, 0.0
      %2076 = vst.msk [vmem:[#allocation3 + $0x138] sm:$0xff] %vm257, 0.0
      %2077 = vst.msk [vmem:[#allocation3 + $0x140] sm:$0xff] %vm257, 0.0
      %2078 = vst.msk [vmem:[#allocation3 + $0x148] sm:$0x3] %vm260, 0.0
      %2079 = vst.msk [vmem:[#allocation3 + $0x150] sm:$0xff] %vm257, 0.0
      %2080 = vst.msk [vmem:[#allocation3 + $0x158] sm:$0xff] %vm257, 0.0
      %2081 = vst.msk [vmem:[#allocation3 + $0x160] sm:$0x3] %vm260, 0.0
      %2082 = vst.msk [vmem:[#allocation3 + $0x168] sm:$0xff] %vm257, 0.0
      %2083 = vst.msk [vmem:[#allocation3 + $0x170] sm:$0xff] %vm257, 0.0
      %2084 = vst.msk [vmem:[#allocation3 + $0x178] sm:$0x3] %vm260, 0.0
      %2085 = vst.msk [vmem:[#allocation3 + $0x180] sm:$0xff] %vm257, 0.0
      %2086 = vst.msk [vmem:[#allocation3 + $0x188] sm:$0xff] %vm257, 0.0
      %2087 = vst.msk [vmem:[#allocation3 + $0x190] sm:$0x3] %vm260, 0.0
      %2088 = vst.msk [vmem:[#allocation3 + $0x198] sm:$0xff] %vm257, 0.0
      %2089 = vst.msk [vmem:[#allocation3 + $0x1a0] sm:$0xff] %vm257, 0.0
      %2090 = vst.msk [vmem:[#allocation3 + $0x1a8] sm:$0x3] %vm260, 0.0
      %s2091 = scalar_lea.vmem [#allocation3], 24
      %2092 = vst.msk [vmem:[%s2091 + $0x1] sm:$0xff] %vm257, %v2005
      %2093 = vst.msk [vmem:[%s2091 + $0x9] sm:$0xff] %vm257, %v2006
      %2094 = vst.msk [vmem:[%s2091 + $0x19] sm:$0xff] %vm257, %v2007
      %2095 = vst.msk [vmem:[%s2091 + $0x21] sm:$0xff] %vm257, %v2008
      %2096 = vst.msk [vmem:[%s2091 + $0x31] sm:$0xff] %vm257, %v2009
      %2097 = vst.msk [vmem:[%s2091 + $0x39] sm:$0xff] %vm257, %v2010
      %2098 = vst.msk [vmem:[%s2091 + $0x49] sm:$0xff] %vm257, %v2011
      %2099 = vst.msk [vmem:[%s2091 + $0x51] sm:$0xff] %vm257, %v2012
      %2100 = vst.msk [vmem:[%s2091 + $0x61] sm:$0xff] %vm257, %v2013
      %2101 = vst.msk [vmem:[%s2091 + $0x69] sm:$0xff] %vm257, %v2014
      %2102 = vst.msk [vmem:[%s2091 + $0x79] sm:$0xff] %vm257, %v2015
      %2103 = vst.msk [vmem:[%s2091 + $0x81] sm:$0xff] %vm257, %v2016
      %2104 = vst.msk [vmem:[%s2091 + $0x91] sm:$0xff] %vm257, %v2017
      %2105 = vst.msk [vmem:[%s2091 + $0x99] sm:$0xff] %vm257, %v2018
      %2106 = vst.msk [vmem:[%s2091 + $0xa9] sm:$0xff] %vm257, %v2019
      %2107 = vst.msk [vmem:[%s2091 + $0xb1] sm:$0xff] %vm257, %v2020
      %2108 = vst.msk [vmem:[%s2091 + $0xc1] sm:$0xff] %vm257, %v2021
      %2109 = vst.msk [vmem:[%s2091 + $0xc9] sm:$0xff] %vm257, %v2022
      %2110 = vst.msk [vmem:[%s2091 + $0xd9] sm:$0xff] %vm257, %v2023
      %2111 = vst.msk [vmem:[%s2091 + $0xe1] sm:$0xff] %vm257, %v2024
      %2112 = vst.msk [vmem:[%s2091 + $0xf1] sm:$0xff] %vm257, %v2025
      %2113 = vst.msk [vmem:[%s2091 + $0xf9] sm:$0xff] %vm257, %v2026
      %2114 = vst.msk [vmem:[%s2091 + $0x109] sm:$0xff] %vm257, %v2027
      %2115 = vst.msk [vmem:[%s2091 + $0x111] sm:$0xff] %vm257, %v2028
      %2116 = vst.msk [vmem:[%s2091 + $0x121] sm:$0xff] %vm257, %v2029
      %2117 = vst.msk [vmem:[%s2091 + $0x129] sm:$0xff] %vm257, %v2030
      %2118 = vst.msk [vmem:[%s2091 + $0x139] sm:$0xff] %vm257, %v2031
      %2119 = vst.msk [vmem:[%s2091 + $0x141] sm:$0xff] %vm257, %v2032
      %2120 = vst.msk [vmem:[%s2091 + $0x151] sm:$0xff] %vm257, %v2033
      %2121 = vst.msk [vmem:[%s2091 + $0x159] sm:$0xff] %vm257, %v2034
      %2122 = vst.msk [vmem:[%s2091 + $0x169] sm:$0xff] %vm257, %v2035
      %2123 = vst.msk [vmem:[%s2091 + $0x171] sm:$0xff] %vm257, %v2036
      %v2124 = vld [vmem:[#allocation3] sm:$0xff]
      %v2125 = vld [vmem:[#allocation3 + $0x8] sm:$0xff]
      %v2126 = vld [vmem:[#allocation3 + $0x10] sm:$0x3]
      %v2127 = vld [vmem:[#allocation3 + $0x18] sm:$0xff]
      %v2128 = vld [vmem:[#allocation3 + $0x20] sm:$0xff]
      %v2129 = vld [vmem:[#allocation3 + $0x28] sm:$0x3]
      %v2130 = vld [vmem:[#allocation3 + $0x30] sm:$0xff]
      %v2131 = vld [vmem:[#allocation3 + $0x38] sm:$0xff]
      %v2132 = vld [vmem:[#allocation3 + $0x40] sm:$0x3]
      %v2133 = vld [vmem:[#allocation3 + $0x48] sm:$0xff]
      %v2134 = vld [vmem:[#allocation3 + $0x50] sm:$0xff]
      %v2135 = vld [vmem:[#allocation3 + $0x58] sm:$0x3]
      %v2136 = vld [vmem:[#allocation3 + $0x60] sm:$0xff]
      %v2137 = vld [vmem:[#allocation3 + $0x68] sm:$0xff]
      %v2138 = vld [vmem:[#allocation3 + $0x70] sm:$0x3]
      %v2139 = vld [vmem:[#allocation3 + $0x78] sm:$0xff]
      %v2140 = vld [vmem:[#allocation3 + $0x80] sm:$0xff]
      %v2141 = vld [vmem:[#allocation3 + $0x88] sm:$0x3]
      %v2142 = vld [vmem:[#allocation3 + $0x90] sm:$0xff]
      %v2143 = vld [vmem:[#allocation3 + $0x98] sm:$0xff]
      %v2144 = vld [vmem:[#allocation3 + $0xa0] sm:$0x3]
      %v2145 = vld [vmem:[#allocation3 + $0xa8] sm:$0xff]
      %v2146 = vld [vmem:[#allocation3 + $0xb0] sm:$0xff]
      %v2147 = vld [vmem:[#allocation3 + $0xb8] sm:$0x3]
      %v2148 = vld [vmem:[#allocation3 + $0xc0] sm:$0xff]
      %v2149 = vld [vmem:[#allocation3 + $0xc8] sm:$0xff]
      %v2150 = vld [vmem:[#allocation3 + $0xd0] sm:$0x3]
      %v2151 = vld [vmem:[#allocation3 + $0xd8] sm:$0xff]
      %v2152 = vld [vmem:[#allocation3 + $0xe0] sm:$0xff]
      %v2153 = vld [vmem:[#allocation3 + $0xe8] sm:$0x3]
      %v2154 = vld [vmem:[#allocation3 + $0xf0] sm:$0xff]
      %v2155 = vld [vmem:[#allocation3 + $0xf8] sm:$0xff]
      %v2156 = vld [vmem:[#allocation3 + $0x100] sm:$0x3]
      %v2157 = vld [vmem:[#allocation3 + $0x108] sm:$0xff]
      %v2158 = vld [vmem:[#allocation3 + $0x110] sm:$0xff]
      %v2159 = vld [vmem:[#allocation3 + $0x118] sm:$0x3]
      %v2160 = vld [vmem:[#allocation3 + $0x120] sm:$0xff]
      %v2161 = vld [vmem:[#allocation3 + $0x128] sm:$0xff]
      %v2162 = vld [vmem:[#allocation3 + $0x130] sm:$0x3]
      %v2163 = vld [vmem:[#allocation3 + $0x138] sm:$0xff]
      %v2164 = vld [vmem:[#allocation3 + $0x140] sm:$0xff]
      %v2165 = vld [vmem:[#allocation3 + $0x148] sm:$0x3]
      %v2166 = vld [vmem:[#allocation3 + $0x150] sm:$0xff]
      %v2167 = vld [vmem:[#allocation3 + $0x158] sm:$0xff]
      %v2168 = vld [vmem:[#allocation3 + $0x160] sm:$0x3]
      %v2169 = vld [vmem:[#allocation3 + $0x168] sm:$0xff]
      %v2170 = vld [vmem:[#allocation3 + $0x170] sm:$0xff]
      %v2171 = vld [vmem:[#allocation3 + $0x178] sm:$0x3]
      %v2172 = vld [vmem:[#allocation3 + $0x180] sm:$0xff]
      %v2173 = vld [vmem:[#allocation3 + $0x188] sm:$0xff]
      %v2174 = vld [vmem:[#allocation3 + $0x190] sm:$0x3]
      %v2175 = vld [vmem:[#allocation3 + $0x198] sm:$0xff]
      %v2176 = vld [vmem:[#allocation3 + $0x1a0] sm:$0xff]
      %v2177 = vld [vmem:[#allocation3 + $0x1a8] sm:$0x3]
      %v2226 = vrot.slane %v2124, 1
      %v2227 = vrot.slane %v2125, 1
      %v2228 = vsel %vm448, %v2226, %v2227
      %v2229 = vrot.slane %v2126, 1
      %v2230 = vsel %vm448, %v2227, %v2229
      %v2231 = vrot.slane %v2127, 1
      %v2232 = vrot.slane %v2128, 1
      %v2233 = vsel %vm448, %v2231, %v2232
      %v2234 = vrot.slane %v2129, 1
      %v2235 = vsel %vm448, %v2232, %v2234
      %v2236 = vrot.slane %v2130, 1
      %v2237 = vrot.slane %v2131, 1
      %v2238 = vsel %vm448, %v2236, %v2237
      %v2239 = vrot.slane %v2132, 1
      %v2240 = vsel %vm448, %v2237, %v2239
      %v2241 = vrot.slane %v2133, 1
      %v2242 = vrot.slane %v2134, 1
      %v2243 = vsel %vm448, %v2241, %v2242
      %v2244 = vrot.slane %v2135, 1
      %v2245 = vsel %vm448, %v2242, %v2244
      %v2246 = vrot.slane %v2136, 1
      %v2247 = vrot.slane %v2137, 1
      %v2248 = vsel %vm448, %v2246, %v2247
      %v2249 = vrot.slane %v2138, 1
      %v2250 = vsel %vm448, %v2247, %v2249
      %v2251 = vrot.slane %v2139, 1
      %v2252 = vrot.slane %v2140, 1
      %v2253 = vsel %vm448, %v2251, %v2252
      %v2254 = vrot.slane %v2141, 1
      %v2255 = vsel %vm448, %v2252, %v2254
      %v2256 = vrot.slane %v2142, 1
      %v2257 = vrot.slane %v2143, 1
      %v2258 = vsel %vm448, %v2256, %v2257
      %v2259 = vrot.slane %v2144, 1
      %v2260 = vsel %vm448, %v2257, %v2259
      %v2261 = vrot.slane %v2145, 1
      %v2262 = vrot.slane %v2146, 1
      %v2263 = vsel %vm448, %v2261, %v2262
      %v2264 = vrot.slane %v2147, 1
      %v2265 = vsel %vm448, %v2262, %v2264
      %v2266 = vrot.slane %v2148, 1
      %v2267 = vrot.slane %v2149, 1
      %v2268 = vsel %vm448, %v2266, %v2267
      %v2269 = vrot.slane %v2150, 1
      %v2270 = vsel %vm448, %v2267, %v2269
      %v2271 = vrot.slane %v2151, 1
      %v2272 = vrot.slane %v2152, 1
      %v2273 = vsel %vm448, %v2271, %v2272
      %v2274 = vrot.slane %v2153, 1
      %v2275 = vsel %vm448, %v2272, %v2274
      %v2276 = vrot.slane %v2154, 1
      %v2277 = vrot.slane %v2155, 1
      %v2278 = vsel %vm448, %v2276, %v2277
      %v2279 = vrot.slane %v2156, 1
      %v2280 = vsel %vm448, %v2277, %v2279
      %v2281 = vrot.slane %v2157, 1
      %v2282 = vrot.slane %v2158, 1
      %v2283 = vsel %vm448, %v2281, %v2282
      %v2284 = vrot.slane %v2159, 1
      %v2285 = vsel %vm448, %v2282, %v2284
      %v2286 = vrot.slane %v2160, 1
      %v2287 = vrot.slane %v2161, 1
      %v2288 = vsel %vm448, %v2286, %v2287
      %v2289 = vrot.slane %v2162, 1
      %v2290 = vsel %vm448, %v2287, %v2289
      %v2291 = vrot.slane %v2163, 1
      %v2292 = vrot.slane %v2164, 1
      %v2293 = vsel %vm448, %v2291, %v2292
      %v2294 = vrot.slane %v2165, 1
      %v2295 = vsel %vm448, %v2292, %v2294
      %v2296 = vrot.slane %v2166, 1
      %v2297 = vrot.slane %v2167, 1
      %v2298 = vsel %vm448, %v2296, %v2297
      %v2299 = vrot.slane %v2168, 1
      %v2300 = vsel %vm448, %v2297, %v2299
      %v2301 = vrot.slane %v2169, 1
      %v2302 = vrot.slane %v2170, 1
      %v2303 = vsel %vm448, %v2301, %v2302
      %v2304 = vrot.slane %v2171, 1
      %v2305 = vsel %vm448, %v2302, %v2304
      %v2306 = vrot.slane %v2124, 2
      %v2307 = vrot.slane %v2125, 2
      %v2308 = vsel %vm529, %v2306, %v2307
      %v2309 = vrot.slane %v2126, 2
      %v2310 = vsel %vm529, %v2307, %v2309
      %v2311 = vrot.slane %v2127, 2
      %v2312 = vrot.slane %v2128, 2
      %v2313 = vsel %vm529, %v2311, %v2312
      %v2314 = vrot.slane %v2129, 2
      %v2315 = vsel %vm529, %v2312, %v2314
      %v2316 = vrot.slane %v2130, 2
      %v2317 = vrot.slane %v2131, 2
      %v2318 = vsel %vm529, %v2316, %v2317
      %v2319 = vrot.slane %v2132, 2
      %v2320 = vsel %vm529, %v2317, %v2319
      %v2321 = vrot.slane %v2133, 2
      %v2322 = vrot.slane %v2134, 2
      %v2323 = vsel %vm529, %v2321, %v2322
      %v2324 = vrot.slane %v2135, 2
      %v2325 = vsel %vm529, %v2322, %v2324
      %v2326 = vrot.slane %v2136, 2
      %v2327 = vrot.slane %v2137, 2
      %v2328 = vsel %vm529, %v2326, %v2327
      %v2329 = vrot.slane %v2138, 2
      %v2330 = vsel %vm529, %v2327, %v2329
      %v2331 = vrot.slane %v2139, 2
      %v2332 = vrot.slane %v2140, 2
      %v2333 = vsel %vm529, %v2331, %v2332
      %v2334 = vrot.slane %v2141, 2
      %v2335 = vsel %vm529, %v2332, %v2334
      %v2336 = vrot.slane %v2142, 2
      %v2337 = vrot.slane %v2143, 2
      %v2338 = vsel %vm529, %v2336, %v2337
      %v2339 = vrot.slane %v2144, 2
      %v2340 = vsel %vm529, %v2337, %v2339
      %v2341 = vrot.slane %v2145, 2
      %v2342 = vrot.slane %v2146, 2
      %v2343 = vsel %vm529, %v2341, %v2342
      %v2344 = vrot.slane %v2147, 2
      %v2345 = vsel %vm529, %v2342, %v2344
      %v2346 = vrot.slane %v2148, 2
      %v2347 = vrot.slane %v2149, 2
      %v2348 = vsel %vm529, %v2346, %v2347
      %v2349 = vrot.slane %v2150, 2
      %v2350 = vsel %vm529, %v2347, %v2349
      %v2351 = vrot.slane %v2151, 2
      %v2352 = vrot.slane %v2152, 2
      %v2353 = vsel %vm529, %v2351, %v2352
      %v2354 = vrot.slane %v2153, 2
      %v2355 = vsel %vm529, %v2352, %v2354
      %v2356 = vrot.slane %v2154, 2
      %v2357 = vrot.slane %v2155, 2
      %v2358 = vsel %vm529, %v2356, %v2357
      %v2359 = vrot.slane %v2156, 2
      %v2360 = vsel %vm529, %v2357, %v2359
      %v2361 = vrot.slane %v2157, 2
      %v2362 = vrot.slane %v2158, 2
      %v2363 = vsel %vm529, %v2361, %v2362
      %v2364 = vrot.slane %v2159, 2
      %v2365 = vsel %vm529, %v2362, %v2364
      %v2366 = vrot.slane %v2160, 2
      %v2367 = vrot.slane %v2161, 2
      %v2368 = vsel %vm529, %v2366, %v2367
      %v2369 = vrot.slane %v2162, 2
      %v2370 = vsel %vm529, %v2367, %v2369
      %v2371 = vrot.slane %v2163, 2
      %v2372 = vrot.slane %v2164, 2
      %v2373 = vsel %vm529, %v2371, %v2372
      %v2374 = vrot.slane %v2165, 2
      %v2375 = vsel %vm529, %v2372, %v2374
      %v2376 = vrot.slane %v2166, 2
      %v2377 = vrot.slane %v2167, 2
      %v2378 = vsel %vm529, %v2376, %v2377
      %v2379 = vrot.slane %v2168, 2
      %v2380 = vsel %vm529, %v2377, %v2379
      %v2381 = vrot.slane %v2169, 2
      %v2382 = vrot.slane %v2170, 2
      %v2383 = vsel %vm529, %v2381, %v2382
      %v2384 = vrot.slane %v2171, 2
      %v2385 = vsel %vm529, %v2382, %v2384
      %v2389 = vrot.slane %v2172, 1
      %v2390 = vrot.slane %v2173, 1
      %v2391 = vsel %vm448, %v2389, %v2390
      %v2392 = vrot.slane %v2174, 1
      %v2393 = vsel %vm448, %v2390, %v2392
      %v2394 = vrot.slane %v2172, 2
      %v2395 = vrot.slane %v2173, 2
      %v2396 = vsel %vm529, %v2394, %v2395
      %v2397 = vrot.slane %v2174, 2
      %v2398 = vsel %vm529, %v2395, %v2397
      %v2402 = vrot.slane %v2175, 1
      %v2403 = vrot.slane %v2176, 1
      %v2404 = vsel %vm448, %v2402, %v2403
      %v2405 = vrot.slane %v2177, 1
      %v2406 = vsel %vm448, %v2403, %v2405
      %v2407 = vrot.slane %v2175, 2
      %v2408 = vrot.slane %v2176, 2
      %v2409 = vsel %vm529, %v2407, %v2408
      %v2410 = vrot.slane %v2177, 2
      %v2411 = vsel %vm529, %v2408, %v2410
      %2412 = vrot.lane.b32.xlu0 %v2228, 4
      %v2413 = vpop.permute.xlu0 %2412
      %2414 = vrot.lane.b32.xlu0 %v2230, 4
      %v2415 = vpop.permute.xlu0 %2414
      %2416 = vrot.lane.b32.xlu0 %v2233, 4
      %v2417 = vpop.permute.xlu0 %2416
      %2418 = vrot.lane.b32.xlu0 %v2235, 4
      %v2419 = vpop.permute.xlu0 %2418
      %2420 = vrot.lane.b32.xlu0 %v2238, 4
      %v2421 = vpop.permute.xlu0 %2420
      %2422 = vrot.lane.b32.xlu0 %v2240, 4
      %v2423 = vpop.permute.xlu0 %2422
      %2424 = vrot.lane.b32.xlu0 %v2243, 4
      %v2425 = vpop.permute.xlu0 %2424
      %2426 = vrot.lane.b32.xlu0 %v2245, 4
      %v2427 = vpop.permute.xlu0 %2426
      %2428 = vrot.lane.b32.xlu0 %v2248, 4
      %v2429 = vpop.permute.xlu0 %2428
      %2430 = vrot.lane.b32.xlu0 %v2250, 4
      %v2431 = vpop.permute.xlu0 %2430
      %2432 = vrot.lane.b32.xlu0 %v2253, 4
      %v2433 = vpop.permute.xlu0 %2432
      %2434 = vrot.lane.b32.xlu0 %v2255, 4
      %v2435 = vpop.permute.xlu0 %2434
      %2436 = vrot.lane.b32.xlu0 %v2258, 4
      %v2437 = vpop.permute.xlu0 %2436
      %2438 = vrot.lane.b32.xlu0 %v2260, 4
      %v2439 = vpop.permute.xlu0 %2438
      %2440 = vrot.lane.b32.xlu0 %v2263, 4
      %v2441 = vpop.permute.xlu0 %2440
      %2442 = vrot.lane.b32.xlu0 %v2265, 4
      %v2443 = vpop.permute.xlu0 %2442
      %2444 = vrot.lane.b32.xlu0 %v2268, 4
      %v2445 = vpop.permute.xlu0 %2444
      %2446 = vrot.lane.b32.xlu0 %v2270, 4
      %v2447 = vpop.permute.xlu0 %2446
      %2448 = vrot.lane.b32.xlu0 %v2273, 4
      %v2449 = vpop.permute.xlu0 %2448
      %2450 = vrot.lane.b32.xlu0 %v2275, 4
      %v2451 = vpop.permute.xlu0 %2450
      %2452 = vrot.lane.b32.xlu0 %v2278, 4
      %v2453 = vpop.permute.xlu0 %2452
      %2454 = vrot.lane.b32.xlu0 %v2280, 4
      %v2455 = vpop.permute.xlu0 %2454
      %2456 = vrot.lane.b32.xlu0 %v2283, 4
      %v2457 = vpop.permute.xlu0 %2456
      %2458 = vrot.lane.b32.xlu0 %v2285, 4
      %v2459 = vpop.permute.xlu0 %2458
      %2460 = vrot.lane.b32.xlu0 %v2288, 4
      %v2461 = vpop.permute.xlu0 %2460
      %2462 = vrot.lane.b32.xlu0 %v2290, 4
      %v2463 = vpop.permute.xlu0 %2462
      %2464 = vrot.lane.b32.xlu0 %v2293, 4
      %v2465 = vpop.permute.xlu0 %2464
      %2466 = vrot.lane.b32.xlu0 %v2295, 4
      %v2467 = vpop.permute.xlu0 %2466
      %2468 = vrot.lane.b32.xlu0 %v2298, 4
      %v2469 = vpop.permute.xlu0 %2468
      %2470 = vrot.lane.b32.xlu0 %v2300, 4
      %v2471 = vpop.permute.xlu0 %2470
      %2472 = vrot.lane.b32.xlu0 %v2303, 4
      %v2473 = vpop.permute.xlu0 %2472
      %2474 = vrot.lane.b32.xlu0 %v2305, 4
      %v2475 = vpop.permute.xlu0 %2474
      %2508 = vrot.lane.b32.xlu0 %v2308, 8
      %v2509 = vpop.permute.xlu0 %2508
      %2510 = vrot.lane.b32.xlu0 %v2310, 8
      %v2511 = vpop.permute.xlu0 %2510
      %2512 = vrot.lane.b32.xlu0 %v2313, 8
      %v2513 = vpop.permute.xlu0 %2512
      %2514 = vrot.lane.b32.xlu0 %v2315, 8
      %v2515 = vpop.permute.xlu0 %2514
      %2516 = vrot.lane.b32.xlu0 %v2318, 8
      %v2517 = vpop.permute.xlu0 %2516
      %2518 = vrot.lane.b32.xlu0 %v2320, 8
      %v2519 = vpop.permute.xlu0 %2518
      %2520 = vrot.lane.b32.xlu0 %v2323, 8
      %v2521 = vpop.permute.xlu0 %2520
      %2522 = vrot.lane.b32.xlu0 %v2325, 8
      %v2523 = vpop.permute.xlu0 %2522
      %2524 = vrot.lane.b32.xlu0 %v2328, 8
      %v2525 = vpop.permute.xlu0 %2524
      %2526 = vrot.lane.b32.xlu0 %v2330, 8
      %v2527 = vpop.permute.xlu0 %2526
      %2528 = vrot.lane.b32.xlu0 %v2333, 8
      %v2529 = vpop.permute.xlu0 %2528
      %2530 = vrot.lane.b32.xlu0 %v2335, 8
      %v2531 = vpop.permute.xlu0 %2530
      %2532 = vrot.lane.b32.xlu0 %v2338, 8
      %v2533 = vpop.permute.xlu0 %2532
      %2534 = vrot.lane.b32.xlu0 %v2340, 8
      %v2535 = vpop.permute.xlu0 %2534
      %2536 = vrot.lane.b32.xlu0 %v2343, 8
      %v2537 = vpop.permute.xlu0 %2536
      %2538 = vrot.lane.b32.xlu0 %v2345, 8
      %v2539 = vpop.permute.xlu0 %2538
      %2540 = vrot.lane.b32.xlu0 %v2348, 8
      %v2541 = vpop.permute.xlu0 %2540
      %2542 = vrot.lane.b32.xlu0 %v2350, 8
      %v2543 = vpop.permute.xlu0 %2542
      %2544 = vrot.lane.b32.xlu0 %v2353, 8
      %v2545 = vpop.permute.xlu0 %2544
      %2546 = vrot.lane.b32.xlu0 %v2355, 8
      %v2547 = vpop.permute.xlu0 %2546
      %2548 = vrot.lane.b32.xlu0 %v2358, 8
      %v2549 = vpop.permute.xlu0 %2548
      %2550 = vrot.lane.b32.xlu0 %v2360, 8
      %v2551 = vpop.permute.xlu0 %2550
      %2552 = vrot.lane.b32.xlu0 %v2363, 8
      %v2553 = vpop.permute.xlu0 %2552
      %2554 = vrot.lane.b32.xlu0 %v2365, 8
      %v2555 = vpop.permute.xlu0 %2554
      %2556 = vrot.lane.b32.xlu0 %v2368, 8
      %v2557 = vpop.permute.xlu0 %2556
      %2558 = vrot.lane.b32.xlu0 %v2370, 8
      %v2559 = vpop.permute.xlu0 %2558
      %2560 = vrot.lane.b32.xlu0 %v2373, 8
      %v2561 = vpop.permute.xlu0 %2560
      %2562 = vrot.lane.b32.xlu0 %v2375, 8
      %v2563 = vpop.permute.xlu0 %2562
      %2564 = vrot.lane.b32.xlu0 %v2378, 8
      %v2565 = vpop.permute.xlu0 %2564
      %2566 = vrot.lane.b32.xlu0 %v2380, 8
      %v2567 = vpop.permute.xlu0 %2566
      %2568 = vrot.lane.b32.xlu0 %v2383, 8
      %v2569 = vpop.permute.xlu0 %2568
      %2570 = vrot.lane.b32.xlu0 %v2385, 8
      %v2571 = vpop.permute.xlu0 %2570
      %2604 = vrot.lane.b32.xlu0 %v2127, 12
      %v2605 = vpop.permute.xlu0 %2604
      %2606 = vrot.lane.b32.xlu0 %v2128, 12
      %v2607 = vpop.permute.xlu0 %2606
      %2608 = vrot.lane.b32.xlu0 %v2130, 12
      %v2609 = vpop.permute.xlu0 %2608
      %2610 = vrot.lane.b32.xlu0 %v2131, 12
      %v2611 = vpop.permute.xlu0 %2610
      %2612 = vrot.lane.b32.xlu0 %v2133, 12
      %v2613 = vpop.permute.xlu0 %2612
      %2614 = vrot.lane.b32.xlu0 %v2134, 12
      %v2615 = vpop.permute.xlu0 %2614
      %2616 = vrot.lane.b32.xlu0 %v2136, 12
      %v2617 = vpop.permute.xlu0 %2616
      %2618 = vrot.lane.b32.xlu0 %v2137, 12
      %v2619 = vpop.permute.xlu0 %2618
      %2620 = vrot.lane.b32.xlu0 %v2139, 12
      %v2621 = vpop.permute.xlu0 %2620
      %2622 = vrot.lane.b32.xlu0 %v2140, 12
      %v2623 = vpop.permute.xlu0 %2622
      %2624 = vrot.lane.b32.xlu0 %v2142, 12
      %v2625 = vpop.permute.xlu0 %2624
      %2626 = vrot.lane.b32.xlu0 %v2143, 12
      %v2627 = vpop.permute.xlu0 %2626
      %2628 = vrot.lane.b32.xlu0 %v2145, 12
      %v2629 = vpop.permute.xlu0 %2628
      %2630 = vrot.lane.b32.xlu0 %v2146, 12
      %v2631 = vpop.permute.xlu0 %2630
      %2632 = vrot.lane.b32.xlu0 %v2148, 12
      %v2633 = vpop.permute.xlu0 %2632
      %2634 = vrot.lane.b32.xlu0 %v2149, 12
      %v2635 = vpop.permute.xlu0 %2634
      %2636 = vrot.lane.b32.xlu0 %v2151, 12
      %v2637 = vpop.permute.xlu0 %2636
      %2638 = vrot.lane.b32.xlu0 %v2152, 12
      %v2639 = vpop.permute.xlu0 %2638
      %2640 = vrot.lane.b32.xlu0 %v2154, 12
      %v2641 = vpop.permute.xlu0 %2640
      %2642 = vrot.lane.b32.xlu0 %v2155, 12
      %v2643 = vpop.permute.xlu0 %2642
      %2644 = vrot.lane.b32.xlu0 %v2157, 12
      %v2645 = vpop.permute.xlu0 %2644
      %2646 = vrot.lane.b32.xlu0 %v2158, 12
      %v2647 = vpop.permute.xlu0 %2646
      %2648 = vrot.lane.b32.xlu0 %v2160, 12
      %v2649 = vpop.permute.xlu0 %2648
      %2650 = vrot.lane.b32.xlu0 %v2161, 12
      %v2651 = vpop.permute.xlu0 %2650
      %2652 = vrot.lane.b32.xlu0 %v2163, 12
      %v2653 = vpop.permute.xlu0 %2652
      %2654 = vrot.lane.b32.xlu0 %v2164, 12
      %v2655 = vpop.permute.xlu0 %2654
      %2656 = vrot.lane.b32.xlu0 %v2166, 12
      %v2657 = vpop.permute.xlu0 %2656
      %2658 = vrot.lane.b32.xlu0 %v2167, 12
      %v2659 = vpop.permute.xlu0 %2658
      %2660 = vrot.lane.b32.xlu0 %v2169, 12
      %v2661 = vpop.permute.xlu0 %2660
      %2662 = vrot.lane.b32.xlu0 %v2170, 12
      %v2663 = vpop.permute.xlu0 %2662
      %2664 = vrot.lane.b32.xlu0 %v2172, 12
      %v2665 = vpop.permute.xlu0 %2664
      %2666 = vrot.lane.b32.xlu0 %v2173, 12
      %v2667 = vpop.permute.xlu0 %2666
      %2700 = vrot.lane.b32.xlu0 %v2233, 16
      %v2701 = vpop.permute.xlu0 %2700
      %2702 = vrot.lane.b32.xlu0 %v2235, 16
      %v2703 = vpop.permute.xlu0 %2702
      %2704 = vrot.lane.b32.xlu0 %v2238, 16
      %v2705 = vpop.permute.xlu0 %2704
      %2706 = vrot.lane.b32.xlu0 %v2240, 16
      %v2707 = vpop.permute.xlu0 %2706
      %2708 = vrot.lane.b32.xlu0 %v2243, 16
      %v2709 = vpop.permute.xlu0 %2708
      %2710 = vrot.lane.b32.xlu0 %v2245, 16
      %v2711 = vpop.permute.xlu0 %2710
      %2712 = vrot.lane.b32.xlu0 %v2248, 16
      %v2713 = vpop.permute.xlu0 %2712
      %2714 = vrot.lane.b32.xlu0 %v2250, 16
      %v2715 = vpop.permute.xlu0 %2714
      %2716 = vrot.lane.b32.xlu0 %v2253, 16
      %v2717 = vpop.permute.xlu0 %2716
      %2718 = vrot.lane.b32.xlu0 %v2255, 16
      %v2719 = vpop.permute.xlu0 %2718
      %2720 = vrot.lane.b32.xlu0 %v2258, 16
      %v2721 = vpop.permute.xlu0 %2720
      %2722 = vrot.lane.b32.xlu0 %v2260, 16
      %v2723 = vpop.permute.xlu0 %2722
      %2724 = vrot.lane.b32.xlu0 %v2263, 16
      %v2725 = vpop.permute.xlu0 %2724
      %2726 = vrot.lane.b32.xlu0 %v2265, 16
      %v2727 = vpop.permute.xlu0 %2726
      %2728 = vrot.lane.b32.xlu0 %v2268, 16
      %v2729 = vpop.permute.xlu0 %2728
      %2730 = vrot.lane.b32.xlu0 %v2270, 16
      %v2731 = vpop.permute.xlu0 %2730
      %2732 = vrot.lane.b32.xlu0 %v2273, 16
      %v2733 = vpop.permute.xlu0 %2732
      %2734 = vrot.lane.b32.xlu0 %v2275, 16
      %v2735 = vpop.permute.xlu0 %2734
      %2736 = vrot.lane.b32.xlu0 %v2278, 16
      %v2737 = vpop.permute.xlu0 %2736
      %2738 = vrot.lane.b32.xlu0 %v2280, 16
      %v2739 = vpop.permute.xlu0 %2738
      %2740 = vrot.lane.b32.xlu0 %v2283, 16
      %v2741 = vpop.permute.xlu0 %2740
      %2742 = vrot.lane.b32.xlu0 %v2285, 16
      %v2743 = vpop.permute.xlu0 %2742
      %2744 = vrot.lane.b32.xlu0 %v2288, 16
      %v2745 = vpop.permute.xlu0 %2744
      %2746 = vrot.lane.b32.xlu0 %v2290, 16
      %v2747 = vpop.permute.xlu0 %2746
      %2748 = vrot.lane.b32.xlu0 %v2293, 16
      %v2749 = vpop.permute.xlu0 %2748
      %2750 = vrot.lane.b32.xlu0 %v2295, 16
      %v2751 = vpop.permute.xlu0 %2750
      %2752 = vrot.lane.b32.xlu0 %v2298, 16
      %v2753 = vpop.permute.xlu0 %2752
      %2754 = vrot.lane.b32.xlu0 %v2300, 16
      %v2755 = vpop.permute.xlu0 %2754
      %2756 = vrot.lane.b32.xlu0 %v2303, 16
      %v2757 = vpop.permute.xlu0 %2756
      %2758 = vrot.lane.b32.xlu0 %v2305, 16
      %v2759 = vpop.permute.xlu0 %2758
      %2760 = vrot.lane.b32.xlu0 %v2391, 16
      %v2761 = vpop.permute.xlu0 %2760
      %2762 = vrot.lane.b32.xlu0 %v2393, 16
      %v2763 = vpop.permute.xlu0 %2762
      %2796 = vrot.lane.b32.xlu0 %v2313, 20
      %v2797 = vpop.permute.xlu0 %2796
      %2798 = vrot.lane.b32.xlu0 %v2315, 20
      %v2799 = vpop.permute.xlu0 %2798
      %2800 = vrot.lane.b32.xlu0 %v2318, 20
      %v2801 = vpop.permute.xlu0 %2800
      %2802 = vrot.lane.b32.xlu0 %v2320, 20
      %v2803 = vpop.permute.xlu0 %2802
      %2804 = vrot.lane.b32.xlu0 %v2323, 20
      %v2805 = vpop.permute.xlu0 %2804
      %2806 = vrot.lane.b32.xlu0 %v2325, 20
      %v2807 = vpop.permute.xlu0 %2806
      %2808 = vrot.lane.b32.xlu0 %v2328, 20
      %v2809 = vpop.permute.xlu0 %2808
      %2810 = vrot.lane.b32.xlu0 %v2330, 20
      %v2811 = vpop.permute.xlu0 %2810
      %2812 = vrot.lane.b32.xlu0 %v2333, 20
      %v2813 = vpop.permute.xlu0 %2812
      %2814 = vrot.lane.b32.xlu0 %v2335, 20
      %v2815 = vpop.permute.xlu0 %2814
      %2816 = vrot.lane.b32.xlu0 %v2338, 20
      %v2817 = vpop.permute.xlu0 %2816
      %2818 = vrot.lane.b32.xlu0 %v2340, 20
      %v2819 = vpop.permute.xlu0 %2818
      %2820 = vrot.lane.b32.xlu0 %v2343, 20
      %v2821 = vpop.permute.xlu0 %2820
      %2822 = vrot.lane.b32.xlu0 %v2345, 20
      %v2823 = vpop.permute.xlu0 %2822
      %2824 = vrot.lane.b32.xlu0 %v2348, 20
      %v2825 = vpop.permute.xlu0 %2824
      %2826 = vrot.lane.b32.xlu0 %v2350, 20
      %v2827 = vpop.permute.xlu0 %2826
      %2828 = vrot.lane.b32.xlu0 %v2353, 20
      %v2829 = vpop.permute.xlu0 %2828
      %2830 = vrot.lane.b32.xlu0 %v2355, 20
      %v2831 = vpop.permute.xlu0 %2830
      %2832 = vrot.lane.b32.xlu0 %v2358, 20
      %v2833 = vpop.permute.xlu0 %2832
      %2834 = vrot.lane.b32.xlu0 %v2360, 20
      %v2835 = vpop.permute.xlu0 %2834
      %2836 = vrot.lane.b32.xlu0 %v2363, 20
      %v2837 = vpop.permute.xlu0 %2836
      %2838 = vrot.lane.b32.xlu0 %v2365, 20
      %v2839 = vpop.permute.xlu0 %2838
      %2840 = vrot.lane.b32.xlu0 %v2368, 20
      %v2841 = vpop.permute.xlu0 %2840
      %2842 = vrot.lane.b32.xlu0 %v2370, 20
      %v2843 = vpop.permute.xlu0 %2842
      %2844 = vrot.lane.b32.xlu0 %v2373, 20
      %v2845 = vpop.permute.xlu0 %2844
      %2846 = vrot.lane.b32.xlu0 %v2375, 20
      %v2847 = vpop.permute.xlu0 %2846
      %2848 = vrot.lane.b32.xlu0 %v2378, 20
      %v2849 = vpop.permute.xlu0 %2848
      %2850 = vrot.lane.b32.xlu0 %v2380, 20
      %v2851 = vpop.permute.xlu0 %2850
      %2852 = vrot.lane.b32.xlu0 %v2383, 20
      %v2853 = vpop.permute.xlu0 %2852
      %2854 = vrot.lane.b32.xlu0 %v2385, 20
      %v2855 = vpop.permute.xlu0 %2854
      %2856 = vrot.lane.b32.xlu0 %v2396, 20
      %v2857 = vpop.permute.xlu0 %2856
      %2858 = vrot.lane.b32.xlu0 %v2398, 20
      %v2859 = vpop.permute.xlu0 %2858
      %2892 = vrot.lane.b32.xlu0 %v2130, 24
      %v2893 = vpop.permute.xlu0 %2892
      %2894 = vrot.lane.b32.xlu0 %v2131, 24
      %v2895 = vpop.permute.xlu0 %2894
      %2896 = vrot.lane.b32.xlu0 %v2133, 24
      %v2897 = vpop.permute.xlu0 %2896
      %2898 = vrot.lane.b32.xlu0 %v2134, 24
      %v2899 = vpop.permute.xlu0 %2898
      %2900 = vrot.lane.b32.xlu0 %v2136, 24
      %v2901 = vpop.permute.xlu0 %2900
      %2902 = vrot.lane.b32.xlu0 %v2137, 24
      %v2903 = vpop.permute.xlu0 %2902
      %2904 = vrot.lane.b32.xlu0 %v2139, 24
      %v2905 = vpop.permute.xlu0 %2904
      %2906 = vrot.lane.b32.xlu0 %v2140, 24
      %v2907 = vpop.permute.xlu0 %2906
      %2908 = vrot.lane.b32.xlu0 %v2142, 24
      %v2909 = vpop.permute.xlu0 %2908
      %2910 = vrot.lane.b32.xlu0 %v2143, 24
      %v2911 = vpop.permute.xlu0 %2910
      %2912 = vrot.lane.b32.xlu0 %v2145, 24
      %v2913 = vpop.permute.xlu0 %2912
      %2914 = vrot.lane.b32.xlu0 %v2146, 24
      %v2915 = vpop.permute.xlu0 %2914
      %2916 = vrot.lane.b32.xlu0 %v2148, 24
      %v2917 = vpop.permute.xlu0 %2916
      %2918 = vrot.lane.b32.xlu0 %v2149, 24
      %v2919 = vpop.permute.xlu0 %2918
      %2920 = vrot.lane.b32.xlu0 %v2151, 24
      %v2921 = vpop.permute.xlu0 %2920
      %2922 = vrot.lane.b32.xlu0 %v2152, 24
      %v2923 = vpop.permute.xlu0 %2922
      %2924 = vrot.lane.b32.xlu0 %v2154, 24
      %v2925 = vpop.permute.xlu0 %2924
      %2926 = vrot.lane.b32.xlu0 %v2155, 24
      %v2927 = vpop.permute.xlu0 %2926
      %2928 = vrot.lane.b32.xlu0 %v2157, 24
      %v2929 = vpop.permute.xlu0 %2928
      %2930 = vrot.lane.b32.xlu0 %v2158, 24
      %v2931 = vpop.permute.xlu0 %2930
      %2932 = vrot.lane.b32.xlu0 %v2160, 24
      %v2933 = vpop.permute.xlu0 %2932
      %2934 = vrot.lane.b32.xlu0 %v2161, 24
      %v2935 = vpop.permute.xlu0 %2934
      %2936 = vrot.lane.b32.xlu0 %v2163, 24
      %v2937 = vpop.permute.xlu0 %2936
      %2938 = vrot.lane.b32.xlu0 %v2164, 24
      %v2939 = vpop.permute.xlu0 %2938
      %2940 = vrot.lane.b32.xlu0 %v2166, 24
      %v2941 = vpop.permute.xlu0 %2940
      %2942 = vrot.lane.b32.xlu0 %v2167, 24
      %v2943 = vpop.permute.xlu0 %2942
      %2944 = vrot.lane.b32.xlu0 %v2169, 24
      %v2945 = vpop.permute.xlu0 %2944
      %2946 = vrot.lane.b32.xlu0 %v2170, 24
      %v2947 = vpop.permute.xlu0 %2946
      %2948 = vrot.lane.b32.xlu0 %v2172, 24
      %v2949 = vpop.permute.xlu0 %2948
      %2950 = vrot.lane.b32.xlu0 %v2173, 24
      %v2951 = vpop.permute.xlu0 %2950
      %2952 = vrot.lane.b32.xlu0 %v2175, 24
      %v2953 = vpop.permute.xlu0 %2952
      %2954 = vrot.lane.b32.xlu0 %v2176, 24
      %v2955 = vpop.permute.xlu0 %2954
      %2988 = vrot.lane.b32.xlu0 %v2238, 28
      %v2989 = vpop.permute.xlu0 %2988
      %2990 = vrot.lane.b32.xlu0 %v2240, 28
      %v2991 = vpop.permute.xlu0 %2990
      %2992 = vrot.lane.b32.xlu0 %v2243, 28
      %v2993 = vpop.permute.xlu0 %2992
      %2994 = vrot.lane.b32.xlu0 %v2245, 28
      %v2995 = vpop.permute.xlu0 %2994
      %2996 = vrot.lane.b32.xlu0 %v2248, 28
      %v2997 = vpop.permute.xlu0 %2996
      %2998 = vrot.lane.b32.xlu0 %v2250, 28
      %v2999 = vpop.permute.xlu0 %2998
      %3000 = vrot.lane.b32.xlu0 %v2253, 28
      %v3001 = vpop.permute.xlu0 %3000
      %3002 = vrot.lane.b32.xlu0 %v2255, 28
      %v3003 = vpop.permute.xlu0 %3002
      %3004 = vrot.lane.b32.xlu0 %v2258, 28
      %v3005 = vpop.permute.xlu0 %3004
      %3006 = vrot.lane.b32.xlu0 %v2260, 28
      %v3007 = vpop.permute.xlu0 %3006
      %3008 = vrot.lane.b32.xlu0 %v2263, 28
      %v3009 = vpop.permute.xlu0 %3008
      %3010 = vrot.lane.b32.xlu0 %v2265, 28
      %v3011 = vpop.permute.xlu0 %3010
      %3012 = vrot.lane.b32.xlu0 %v2268, 28
      %v3013 = vpop.permute.xlu0 %3012
      %3014 = vrot.lane.b32.xlu0 %v2270, 28
      %v3015 = vpop.permute.xlu0 %3014
      %3016 = vrot.lane.b32.xlu0 %v2273, 28
      %v3017 = vpop.permute.xlu0 %3016
      %3018 = vrot.lane.b32.xlu0 %v2275, 28
      %v3019 = vpop.permute.xlu0 %3018
      %3020 = vrot.lane.b32.xlu0 %v2278, 28
      %v3021 = vpop.permute.xlu0 %3020
      %3022 = vrot.lane.b32.xlu0 %v2280, 28
      %v3023 = vpop.permute.xlu0 %3022
      %3024 = vrot.lane.b32.xlu0 %v2283, 28
      %v3025 = vpop.permute.xlu0 %3024
      %3026 = vrot.lane.b32.xlu0 %v2285, 28
      %v3027 = vpop.permute.xlu0 %3026
      %3028 = vrot.lane.b32.xlu0 %v2288, 28
      %v3029 = vpop.permute.xlu0 %3028
      %3030 = vrot.lane.b32.xlu0 %v2290, 28
      %v3031 = vpop.permute.xlu0 %3030
      %3032 = vrot.lane.b32.xlu0 %v2293, 28
      %v3033 = vpop.permute.xlu0 %3032
      %3034 = vrot.lane.b32.xlu0 %v2295, 28
      %v3035 = vpop.permute.xlu0 %3034
      %3036 = vrot.lane.b32.xlu0 %v2298, 28
      %v3037 = vpop.permute.xlu0 %3036
      %3038 = vrot.lane.b32.xlu0 %v2300, 28
      %v3039 = vpop.permute.xlu0 %3038
      %3040 = vrot.lane.b32.xlu0 %v2303, 28
      %v3041 = vpop.permute.xlu0 %3040
      %3042 = vrot.lane.b32.xlu0 %v2305, 28
      %v3043 = vpop.permute.xlu0 %3042
      %3044 = vrot.lane.b32.xlu0 %v2391, 28
      %v3045 = vpop.permute.xlu0 %3044
      %3046 = vrot.lane.b32.xlu0 %v2393, 28
      %v3047 = vpop.permute.xlu0 %3046
      %3048 = vrot.lane.b32.xlu0 %v2404, 28
      %v3049 = vpop.permute.xlu0 %3048
      %3050 = vrot.lane.b32.xlu0 %v2406, 28
      %v3051 = vpop.permute.xlu0 %3050
      %3084 = vrot.lane.b32.xlu0 %v2318, 32
      %v3085 = vpop.permute.xlu0 %3084
      %3086 = vrot.lane.b32.xlu0 %v2320, 32
      %v3087 = vpop.permute.xlu0 %3086
      %3088 = vrot.lane.b32.xlu0 %v2323, 32
      %v3089 = vpop.permute.xlu0 %3088
      %3090 = vrot.lane.b32.xlu0 %v2325, 32
      %v3091 = vpop.permute.xlu0 %3090
      %3092 = vrot.lane.b32.xlu0 %v2328, 32
      %v3093 = vpop.permute.xlu0 %3092
      %3094 = vrot.lane.b32.xlu0 %v2330, 32
      %v3095 = vpop.permute.xlu0 %3094
      %3096 = vrot.lane.b32.xlu0 %v2333, 32
      %v3097 = vpop.permute.xlu0 %3096
      %3098 = vrot.lane.b32.xlu0 %v2335, 32
      %v3099 = vpop.permute.xlu0 %3098
      %3100 = vrot.lane.b32.xlu0 %v2338, 32
      %v3101 = vpop.permute.xlu0 %3100
      %3102 = vrot.lane.b32.xlu0 %v2340, 32
      %v3103 = vpop.permute.xlu0 %3102
      %3104 = vrot.lane.b32.xlu0 %v2343, 32
      %v3105 = vpop.permute.xlu0 %3104
      %3106 = vrot.lane.b32.xlu0 %v2345, 32
      %v3107 = vpop.permute.xlu0 %3106
      %3108 = vrot.lane.b32.xlu0 %v2348, 32
      %v3109 = vpop.permute.xlu0 %3108
      %3110 = vrot.lane.b32.xlu0 %v2350, 32
      %v3111 = vpop.permute.xlu0 %3110
      %3112 = vrot.lane.b32.xlu0 %v2353, 32
      %v3113 = vpop.permute.xlu0 %3112
      %3114 = vrot.lane.b32.xlu0 %v2355, 32
      %v3115 = vpop.permute.xlu0 %3114
      %3116 = vrot.lane.b32.xlu0 %v2358, 32
      %v3117 = vpop.permute.xlu0 %3116
      %3118 = vrot.lane.b32.xlu0 %v2360, 32
      %v3119 = vpop.permute.xlu0 %3118
      %3120 = vrot.lane.b32.xlu0 %v2363, 32
      %v3121 = vpop.permute.xlu0 %3120
      %3122 = vrot.lane.b32.xlu0 %v2365, 32
      %v3123 = vpop.permute.xlu0 %3122
      %3124 = vrot.lane.b32.xlu0 %v2368, 32
      %v3125 = vpop.permute.xlu0 %3124
      %3126 = vrot.lane.b32.xlu0 %v2370, 32
      %v3127 = vpop.permute.xlu0 %3126
      %3128 = vrot.lane.b32.xlu0 %v2373, 32
      %v3129 = vpop.permute.xlu0 %3128
      %3130 = vrot.lane.b32.xlu0 %v2375, 32
      %v3131 = vpop.permute.xlu0 %3130
      %3132 = vrot.lane.b32.xlu0 %v2378, 32
      %v3133 = vpop.permute.xlu0 %3132
      %3134 = vrot.lane.b32.xlu0 %v2380, 32
      %v3135 = vpop.permute.xlu0 %3134
      %3136 = vrot.lane.b32.xlu0 %v2383, 32
      %v3137 = vpop.permute.xlu0 %3136
      %3138 = vrot.lane.b32.xlu0 %v2385, 32
      %v3139 = vpop.permute.xlu0 %3138
      %3140 = vrot.lane.b32.xlu0 %v2396, 32
      %v3141 = vpop.permute.xlu0 %3140
      %3142 = vrot.lane.b32.xlu0 %v2398, 32
      %v3143 = vpop.permute.xlu0 %3142
      %3144 = vrot.lane.b32.xlu0 %v2409, 32
      %v3145 = vpop.permute.xlu0 %3144
      %3146 = vrot.lane.b32.xlu0 %v2411, 32
      %v3147 = vpop.permute.xlu0 %3146
      %v3180 = vsel %vm257, %v2124, %v2413
      %v3181 = vsel %vm257, %v2125, %v2415
      %v3182 = vsel %vm257, %v2127, %v2417
      %v3183 = vsel %vm257, %v2128, %v2419
      %v3184 = vsel %vm257, %v2130, %v2421
      %v3185 = vsel %vm257, %v2131, %v2423
      %v3186 = vsel %vm257, %v2133, %v2425
      %v3187 = vsel %vm257, %v2134, %v2427
      %v3188 = vsel %vm257, %v2136, %v2429
      %v3189 = vsel %vm257, %v2137, %v2431
      %v3190 = vsel %vm257, %v2139, %v2433
      %v3191 = vsel %vm257, %v2140, %v2435
      %v3192 = vsel %vm257, %v2142, %v2437
      %v3193 = vsel %vm257, %v2143, %v2439
      %v3194 = vsel %vm257, %v2145, %v2441
      %v3195 = vsel %vm257, %v2146, %v2443
      %v3196 = vsel %vm257, %v2148, %v2445
      %v3197 = vsel %vm257, %v2149, %v2447
      %v3198 = vsel %vm257, %v2151, %v2449
      %v3199 = vsel %vm257, %v2152, %v2451
      %v3200 = vsel %vm257, %v2154, %v2453
      %v3201 = vsel %vm257, %v2155, %v2455
      %v3202 = vsel %vm257, %v2157, %v2457
      %v3203 = vsel %vm257, %v2158, %v2459
      %v3204 = vsel %vm257, %v2160, %v2461
      %v3205 = vsel %vm257, %v2161, %v2463
      %v3206 = vsel %vm257, %v2163, %v2465
      %v3207 = vsel %vm257, %v2164, %v2467
      %v3208 = vsel %vm257, %v2166, %v2469
      %v3209 = vsel %vm257, %v2167, %v2471
      %v3210 = vsel %vm257, %v2169, %v2473
      %v3211 = vsel %vm257, %v2170, %v2475
      %v3212 = vsel %vm1436, %v3180, %v2509
      %v3213 = vsel %vm1436, %v3181, %v2511
      %v3214 = vsel %vm1436, %v3182, %v2513
      %v3215 = vsel %vm1436, %v3183, %v2515
      %v3216 = vsel %vm1436, %v3184, %v2517
      %v3217 = vsel %vm1436, %v3185, %v2519
      %v3218 = vsel %vm1436, %v3186, %v2521
      %v3219 = vsel %vm1436, %v3187, %v2523
      %v3220 = vsel %vm1436, %v3188, %v2525
      %v3221 = vsel %vm1436, %v3189, %v2527
      %v3222 = vsel %vm1436, %v3190, %v2529
      %v3223 = vsel %vm1436, %v3191, %v2531
      %v3224 = vsel %vm1436, %v3192, %v2533
      %v3225 = vsel %vm1436, %v3193, %v2535
      %v3226 = vsel %vm1436, %v3194, %v2537
      %v3227 = vsel %vm1436, %v3195, %v2539
      %v3228 = vsel %vm1436, %v3196, %v2541
      %v3229 = vsel %vm1436, %v3197, %v2543
      %v3230 = vsel %vm1436, %v3198, %v2545
      %v3231 = vsel %vm1436, %v3199, %v2547
      %v3232 = vsel %vm1436, %v3200, %v2549
      %v3233 = vsel %vm1436, %v3201, %v2551
      %v3234 = vsel %vm1436, %v3202, %v2553
      %v3235 = vsel %vm1436, %v3203, %v2555
      %v3236 = vsel %vm1436, %v3204, %v2557
      %v3237 = vsel %vm1436, %v3205, %v2559
      %v3238 = vsel %vm1436, %v3206, %v2561
      %v3239 = vsel %vm1436, %v3207, %v2563
      %v3240 = vsel %vm1436, %v3208, %v2565
      %v3241 = vsel %vm1436, %v3209, %v2567
      %v3242 = vsel %vm1436, %v3210, %v2569
      %v3243 = vsel %vm1436, %v3211, %v2571
      %v3244 = vsel %vm1469, %v3212, %v2605
      %v3245 = vsel %vm1469, %v3213, %v2607
      %v3246 = vsel %vm1469, %v3214, %v2609
      %v3247 = vsel %vm1469, %v3215, %v2611
      %v3248 = vsel %vm1469, %v3216, %v2613
      %v3249 = vsel %vm1469, %v3217, %v2615
      %v3250 = vsel %vm1469, %v3218, %v2617
      %v3251 = vsel %vm1469, %v3219, %v2619
      %v3252 = vsel %vm1469, %v3220, %v2621
      %v3253 = vsel %vm1469, %v3221, %v2623
      %v3254 = vsel %vm1469, %v3222, %v2625
      %v3255 = vsel %vm1469, %v3223, %v2627
      %v3256 = vsel %vm1469, %v3224, %v2629
      %v3257 = vsel %vm1469, %v3225, %v2631
      %v3258 = vsel %vm1469, %v3226, %v2633
      %v3259 = vsel %vm1469, %v3227, %v2635
      %v3260 = vsel %vm1469, %v3228, %v2637
      %v3261 = vsel %vm1469, %v3229, %v2639
      %v3262 = vsel %vm1469, %v3230, %v2641
      %v3263 = vsel %vm1469, %v3231, %v2643
      %v3264 = vsel %vm1469, %v3232, %v2645
      %v3265 = vsel %vm1469, %v3233, %v2647
      %v3266 = vsel %vm1469, %v3234, %v2649
      %v3267 = vsel %vm1469, %v3235, %v2651
      %v3268 = vsel %vm1469, %v3236, %v2653
      %v3269 = vsel %vm1469, %v3237, %v2655
      %v3270 = vsel %vm1469, %v3238, %v2657
      %v3271 = vsel %vm1469, %v3239, %v2659
      %v3272 = vsel %vm1469, %v3240, %v2661
      %v3273 = vsel %vm1469, %v3241, %v2663
      %v3274 = vsel %vm1469, %v3242, %v2665
      %v3275 = vsel %vm1469, %v3243, %v2667
      %v3276 = vsel %vm1502, %v3244, %v2701
      %v3277 = vsel %vm1502, %v3245, %v2703
      %v3278 = vsel %vm1502, %v3246, %v2705
      %v3279 = vsel %vm1502, %v3247, %v2707
      %v3280 = vsel %vm1502, %v3248, %v2709
      %v3281 = vsel %vm1502, %v3249, %v2711
      %v3282 = vsel %vm1502, %v3250, %v2713
      %v3283 = vsel %vm1502, %v3251, %v2715
      %v3284 = vsel %vm1502, %v3252, %v2717
      %v3285 = vsel %vm1502, %v3253, %v2719
      %v3286 = vsel %vm1502, %v3254, %v2721
      %v3287 = vsel %vm1502, %v3255, %v2723
      %v3288 = vsel %vm1502, %v3256, %v2725
      %v3289 = vsel %vm1502, %v3257, %v2727
      %v3290 = vsel %vm1502, %v3258, %v2729
      %v3291 = vsel %vm1502, %v3259, %v2731
      %v3292 = vsel %vm1502, %v3260, %v2733
      %v3293 = vsel %vm1502, %v3261, %v2735
      %v3294 = vsel %vm1502, %v3262, %v2737
      %v3295 = vsel %vm1502, %v3263, %v2739
      %v3296 = vsel %vm1502, %v3264, %v2741
      %v3297 = vsel %vm1502, %v3265, %v2743
      %v3298 = vsel %vm1502, %v3266, %v2745
      %v3299 = vsel %vm1502, %v3267, %v2747
      %v3300 = vsel %vm1502, %v3268, %v2749
      %v3301 = vsel %vm1502, %v3269, %v2751
      %v3302 = vsel %vm1502, %v3270, %v2753
      %v3303 = vsel %vm1502, %v3271, %v2755
      %v3304 = vsel %vm1502, %v3272, %v2757
      %v3305 = vsel %vm1502, %v3273, %v2759
      %v3306 = vsel %vm1502, %v3274, %v2761
      %v3307 = vsel %vm1502, %v3275, %v2763
      %v3308 = vsel %vm1535, %v3276, %v2797
      %v3309 = vsel %vm1535, %v3277, %v2799
      %v3310 = vsel %vm1535, %v3278, %v2801
      %v3311 = vsel %vm1535, %v3279, %v2803
      %v3312 = vsel %vm1535, %v3280, %v2805
      %v3313 = vsel %vm1535, %v3281, %v2807
      %v3314 = vsel %vm1535, %v3282, %v2809
      %v3315 = vsel %vm1535, %v3283, %v2811
      %v3316 = vsel %vm1535, %v3284, %v2813
      %v3317 = vsel %vm1535, %v3285, %v2815
      %v3318 = vsel %vm1535, %v3286, %v2817
      %v3319 = vsel %vm1535, %v3287, %v2819
      %v3320 = vsel %vm1535, %v3288, %v2821
      %v3321 = vsel %vm1535, %v3289, %v2823
      %v3322 = vsel %vm1535, %v3290, %v2825
      %v3323 = vsel %vm1535, %v3291, %v2827
      %v3324 = vsel %vm1535, %v3292, %v2829
      %v3325 = vsel %vm1535, %v3293, %v2831
      %v3326 = vsel %vm1535, %v3294, %v2833
      %v3327 = vsel %vm1535, %v3295, %v2835
      %v3328 = vsel %vm1535, %v3296, %v2837
      %v3329 = vsel %vm1535, %v3297, %v2839
      %v3330 = vsel %vm1535, %v3298, %v2841
      %v3331 = vsel %vm1535, %v3299, %v2843
      %v3332 = vsel %vm1535, %v3300, %v2845
      %v3333 = vsel %vm1535, %v3301, %v2847
      %v3334 = vsel %vm1535, %v3302, %v2849
      %v3335 = vsel %vm1535, %v3303, %v2851
      %v3336 = vsel %vm1535, %v3304, %v2853
      %v3337 = vsel %vm1535, %v3305, %v2855
      %v3338 = vsel %vm1535, %v3306, %v2857
      %v3339 = vsel %vm1535, %v3307, %v2859
      %v3340 = vsel %vm1568, %v3308, %v2893
      %v3341 = vsel %vm1568, %v3309, %v2895
      %v3342 = vsel %vm1568, %v3310, %v2897
      %v3343 = vsel %vm1568, %v3311, %v2899
      %v3344 = vsel %vm1568, %v3312, %v2901
      %v3345 = vsel %vm1568, %v3313, %v2903
      %v3346 = vsel %vm1568, %v3314, %v2905
      %v3347 = vsel %vm1568, %v3315, %v2907
      %v3348 = vsel %vm1568, %v3316, %v2909
      %v3349 = vsel %vm1568, %v3317, %v2911
      %v3350 = vsel %vm1568, %v3318, %v2913
      %v3351 = vsel %vm1568, %v3319, %v2915
      %v3352 = vsel %vm1568, %v3320, %v2917
      %v3353 = vsel %vm1568, %v3321, %v2919
      %v3354 = vsel %vm1568, %v3322, %v2921
      %v3355 = vsel %vm1568, %v3323, %v2923
      %v3356 = vsel %vm1568, %v3324, %v2925
      %v3357 = vsel %vm1568, %v3325, %v2927
      %v3358 = vsel %vm1568, %v3326, %v2929
      %v3359 = vsel %vm1568, %v3327, %v2931
      %v3360 = vsel %vm1568, %v3328, %v2933
      %v3361 = vsel %vm1568, %v3329, %v2935
      %v3362 = vsel %vm1568, %v3330, %v2937
      %v3363 = vsel %vm1568, %v3331, %v2939
      %v3364 = vsel %vm1568, %v3332, %v2941
      %v3365 = vsel %vm1568, %v3333, %v2943
      %v3366 = vsel %vm1568, %v3334, %v2945
      %v3367 = vsel %vm1568, %v3335, %v2947
      %v3368 = vsel %vm1568, %v3336, %v2949
      %v3369 = vsel %vm1568, %v3337, %v2951
      %v3370 = vsel %vm1568, %v3338, %v2953
      %v3371 = vsel %vm1568, %v3339, %v2955
      %v3372 = vsel %vm1601, %v3340, %v2989
      %v3373 = vsel %vm1601, %v3341, %v2991
      %v3374 = vsel %vm1601, %v3342, %v2993
      %v3375 = vsel %vm1601, %v3343, %v2995
      %v3376 = vsel %vm1601, %v3344, %v2997
      %v3377 = vsel %vm1601, %v3345, %v2999
      %v3378 = vsel %vm1601, %v3346, %v3001
      %v3379 = vsel %vm1601, %v3347, %v3003
      %v3380 = vsel %vm1601, %v3348, %v3005
      %v3381 = vsel %vm1601, %v3349, %v3007
      %v3382 = vsel %vm1601, %v3350, %v3009
      %v3383 = vsel %vm1601, %v3351, %v3011
      %v3384 = vsel %vm1601, %v3352, %v3013
      %v3385 = vsel %vm1601, %v3353, %v3015
      %v3386 = vsel %vm1601, %v3354, %v3017
      %v3387 = vsel %vm1601, %v3355, %v3019
      %v3388 = vsel %vm1601, %v3356, %v3021
      %v3389 = vsel %vm1601, %v3357, %v3023
      %v3390 = vsel %vm1601, %v3358, %v3025
      %v3391 = vsel %vm1601, %v3359, %v3027
      %v3392 = vsel %vm1601, %v3360, %v3029
      %v3393 = vsel %vm1601, %v3361, %v3031
      %v3394 = vsel %vm1601, %v3362, %v3033
      %v3395 = vsel %vm1601, %v3363, %v3035
      %v3396 = vsel %vm1601, %v3364, %v3037
      %v3397 = vsel %vm1601, %v3365, %v3039
      %v3398 = vsel %vm1601, %v3366, %v3041
      %v3399 = vsel %vm1601, %v3367, %v3043
      %v3400 = vsel %vm1601, %v3368, %v3045
      %v3401 = vsel %vm1601, %v3369, %v3047
      %v3402 = vsel %vm1601, %v3370, %v3049
      %v3403 = vsel %vm1601, %v3371, %v3051
      %v3404 = vsel %vm1634, %v3372, %v3085
      %v3405 = vsel %vm1634, %v3373, %v3087
      %v3406 = vsel %vm1634, %v3374, %v3089
      %v3407 = vsel %vm1634, %v3375, %v3091
      %v3408 = vsel %vm1634, %v3376, %v3093
      %v3409 = vsel %vm1634, %v3377, %v3095
      %v3410 = vsel %vm1634, %v3378, %v3097
      %v3411 = vsel %vm1634, %v3379, %v3099
      %v3412 = vsel %vm1634, %v3380, %v3101
      %v3413 = vsel %vm1634, %v3381, %v3103
      %v3414 = vsel %vm1634, %v3382, %v3105
      %v3415 = vsel %vm1634, %v3383, %v3107
      %v3416 = vsel %vm1634, %v3384, %v3109
      %v3417 = vsel %vm1634, %v3385, %v3111
      %v3418 = vsel %vm1634, %v3386, %v3113
      %v3419 = vsel %vm1634, %v3387, %v3115
      %v3420 = vsel %vm1634, %v3388, %v3117
      %v3421 = vsel %vm1634, %v3389, %v3119
      %v3422 = vsel %vm1634, %v3390, %v3121
      %v3423 = vsel %vm1634, %v3391, %v3123
      %v3424 = vsel %vm1634, %v3392, %v3125
      %v3425 = vsel %vm1634, %v3393, %v3127
      %v3426 = vsel %vm1634, %v3394, %v3129
      %v3427 = vsel %vm1634, %v3395, %v3131
      %v3428 = vsel %vm1634, %v3396, %v3133
      %v3429 = vsel %vm1634, %v3397, %v3135
      %v3430 = vsel %vm1634, %v3398, %v3137
      %v3431 = vsel %vm1634, %v3399, %v3139
      %v3432 = vsel %vm1634, %v3400, %v3141
      %v3433 = vsel %vm1634, %v3401, %v3143
      %v3434 = vsel %vm1634, %v3402, %v3145
      %v3435 = vsel %vm1634, %v3403, %v3147
      %v3436 = vld [vmem:[%s3] sm:$0xff]
      %v3437 = vld [vmem:[%s3 + $0x8] sm:$0xff]
      %v3438 = vld [vmem:[%s3 + $0x10] sm:$0xff]
      %v3439 = vld [vmem:[%s3 + $0x18] sm:$0xff]
      %v3440 = vld [vmem:[%s3 + $0x20] sm:$0xf]
      %v3441 = vld [vmem:[%s4] sm:$0x1]
      %v3443 = vlaneseq
      %v3444 = vshrl.u32 %v3443, 7
      %v3445 = vsub.s32 0, %v3444
      %v3446 = vrot.slane %v3441, %v3445
      %v3449 = vsel %vm1679, %v3404, 0
      %v3452 = vsel %vm1679, %v3405, 0
      %v3455 = vsel %vm1679, %v3406, 0
      %v3458 = vsel %vm1679, %v3407, 0
      %v3461 = vsel %vm1679, %v3408, 0
      %v3464 = vsel %vm1679, %v3409, 0
      %v3467 = vsel %vm1679, %v3410, 0
      %v3470 = vsel %vm1679, %v3411, 0
      %v3473 = vsel %vm1679, %v3412, 0
      %v3476 = vsel %vm1679, %v3413, 0
      %v3479 = vsel %vm1679, %v3414, 0
      %v3482 = vsel %vm1679, %v3415, 0
      %v3485 = vsel %vm1679, %v3416, 0
      %v3488 = vsel %vm1679, %v3417, 0
      %v3491 = vsel %vm1679, %v3418, 0
      %v3494 = vsel %vm1679, %v3419, 0
      %v3497 = vsel %vm1679, %v3420, 0
      %v3500 = vsel %vm1679, %v3421, 0
      %v3503 = vsel %vm1679, %v3422, 0
      %v3506 = vsel %vm1679, %v3423, 0
      %v3509 = vsel %vm1679, %v3424, 0
      %v3512 = vsel %vm1679, %v3425, 0
      %v3515 = vsel %vm1679, %v3426, 0
      %v3518 = vsel %vm1679, %v3427, 0
      %v3521 = vsel %vm1679, %v3428, 0
      %v3524 = vsel %vm1679, %v3429, 0
      %v3527 = vsel %vm1679, %v3430, 0
      %v3530 = vsel %vm1679, %v3431, 0
      %v3533 = vsel %vm1679, %v3432, 0
      %v3536 = vsel %vm1679, %v3433, 0
      %v3539 = vsel %vm1679, %v3434, 0
      %v3542 = vsel %vm1679, %v3435, 0
      %v3545 = vsel %vm1776, %v3440, 0
      %3547 = vmatprep.subr.mxu0 0.0
      %3548 = vmatpush1.msra.mxu0 %v3436
      %3549 = vmatprep.subr.mxu0 0.0
      %3550 = vmatpush1.msra.mxu0 %v3437
      %3551 = vmatprep.subr.mxu0 0.0
      %3552 = vmatpush1.msra.mxu0 %v3438
      %3553 = vmatprep.subr.mxu0 0.0
      %3554 = vmatpush1.msra.mxu0 %v3439
      %3555 = vmatprep.subr.mxu0 0.0
      %3556 = vmatpush1.msra.mxu0 %v3545
      %3557 = vmatprep.subr.mxu0 0.0
      %3558 = vmatpush1.msra.mxu0 0.0
      %3559 = vmatprep.subr.mxu0 0.0
      %3560 = vmatpush1.msra.mxu0 0.0
      %3561 = vmatprep.subr.mxu0 0.0
      %3562 = vmatpush1.msra.mxu0 0.0
      %3563 = vmatprep.subr.mxu0 0.0
      %3564 = vmatpush1.msra.mxu0 0.0
      %3565 = vmatprep.subr.mxu0 0.0
      %3566 = vmatpush1.msra.mxu0 0.0
      %3567 = vmatprep.subr.mxu0 0.0
      %3568 = vmatpush1.msra.mxu0 0.0
      %3569 = vmatprep.subr.mxu0 0.0
      %3570 = vmatpush1.msra.mxu0 0.0
      %3571 = vmatprep.subr.mxu0 0.0
      %3572 = vmatpush1.msra.mxu0 0.0
      %3573 = vmatprep.subr.mxu0 0.0
      %3574 = vmatpush1.msra.mxu0 0.0
      %3575 = vmatprep.subr.mxu0 0.0
      %3576 = vmatpush1.msra.mxu0 0.0
      %3577 = vmatprep.subr.mxu0 0.0
      %3578 = vmatpush1.msra.mxu0 0.0
      %3579 = vmatprep.subr.mxu0 0.0
      %3580 = vmatpush1.msra.mxu0 0.0
      %3581 = vmatprep.subr.mxu0 0.0
      %3582 = vmatpush1.msra.mxu0 0.0
      %3583 = vmatprep.subr.mxu0 0.0
      %3584 = vmatpush1.msra.mxu0 0.0
      %3585 = vmatprep.subr.mxu0 0.0
      %3586 = vmatpush1.msra.mxu0 0.0
      %3587 = vmatprep.subr.mxu0 0.0
      %3588 = vmatpush1.msra.mxu0 0.0
      %3589 = vmatprep.subr.mxu0 0.0
      %3590 = vmatpush1.msra.mxu0 0.0
      %3591 = vmatprep.subr.mxu0 0.0
      %3592 = vmatpush1.msra.mxu0 0.0
      %3593 = vmatprep.subr.mxu0 0.0
      %3594 = vmatpush1.msra.mxu0 0.0
      %3595 = vmatprep.subr.mxu0 0.0
      %3596 = vmatpush1.msra.mxu0 0.0
      %3597 = vmatprep.subr.mxu0 0.0
      %3598 = vmatpush1.msra.mxu0 0.0
      %3599 = vmatprep.subr.mxu0 0.0
      %3600 = vmatpush1.msra.mxu0 0.0
      %3601 = vmatprep.subr.mxu0 0.0
      %3602 = vmatpush1.msra.mxu0 0.0
      %3603 = vmatprep.subr.mxu0 0.0
      %3604 = vmatpush1.msra.mxu0 0.0
      %3605 = vmatprep.subr.mxu0 0.0
      %3606 = vmatpush1.msra.mxu0 0.0
      %3607 = vmatprep.subr.mxu0 0.0
      %3608 = vmatpush1.msra.mxu0 0.0
      %3609 = vmatprep.subr.mxu0 0.0
      %3610 = vmatpush1.msra.mxu0 0.0
      %3611 = vmatprep.mubr.f32.mxu0 0.0
      %3612 = vmatmul.mubr.f32.gmra.mrb[0].mxu0 %v3449
      %v3613 = vpop.f32.mrb[0].mxu0
      %v3614 = vadd.f32 %v3446, %v3613
      %v3615 = vpop.f32.mrb[0].mxu0
      %3616 = vmatprep.mubr.f32.mxu0 0.0
      %3617 = vmatmul.mubr.f32.gmra.mrb[0].mxu0 %v3452
      %v3618 = vpop.f32.mrb[0].mxu0
      %v3619 = vadd.f32 %v3446, %v3618
      %v3620 = vpop.f32.mrb[0].mxu0
      %3621 = vmatprep.mubr.f32.mxu0 0.0
      %3622 = vmatmul.mubr.f32.gmra.mrb[0].mxu0 %v3455
      %v3623 = vpop.f32.mrb[0].mxu0
      %v3624 = vadd.f32 %v3446, %v3623
      %v3625 = vpop.f32.mrb[0].mxu0
      %3626 = vmatprep.mubr.f32.mxu0 0.0
      %3627 = vmatmul.mubr.f32.gmra.mrb[0].mxu0 %v3458
      %v3628 = vpop.f32.mrb[0].mxu0
      %v3629 = vadd.f32 %v3446, %v3628
      %v3630 = vpop.f32.mrb[0].mxu0
      %3631 = vmatprep.mubr.f32.mxu0 0.0
      %3632 = vmatmul.mubr.f32.gmra.mrb[0].mxu0 %v3461
      %v3633 = vpop.f32.mrb[0].mxu0
      %v3634 = vadd.f32 %v3446, %v3633
      %v3635 = vpop.f32.mrb[0].mxu0
      %3636 = vmatprep.mubr.f32.mxu0 0.0
      %3637 = vmatmul.mubr.f32.gmra.mrb[0].mxu0 %v3464
      %v3638 = vpop.f32.mrb[0].mxu0
      %v3639 = vadd.f32 %v3446, %v3638
      %v3640 = vpop.f32.mrb[0].mxu0
      %3641 = vmatprep.mubr.f32.mxu0 0.0
      %3642 = vmatmul.mubr.f32.gmra.mrb[0].mxu0 %v3467
      %v3643 = vpop.f32.mrb[0].mxu0
      %v3644 = vadd.f32 %v3446, %v3643
      %v3645 = vpop.f32.mrb[0].mxu0
      %3646 = vmatprep.mubr.f32.mxu0 0.0
      %3647 = vmatmul.mubr.f32.gmra.mrb[0].mxu0 %v3470
      %v3648 = vpop.f32.mrb[0].mxu0
      %v3649 = vadd.f32 %v3446, %v3648
      %v3650 = vpop.f32.mrb[0].mxu0
      %3651 = vmatprep.mubr.f32.mxu0 0.0
      %3652 = vmatmul.mubr.f32.gmra.mrb[0].mxu0 %v3473
      %v3653 = vpop.f32.mrb[0].mxu0
      %v3654 = vadd.f32 %v3446, %v3653
      %v3655 = vpop.f32.mrb[0].mxu0
      %3656 = vmatprep.mubr.f32.mxu0 0.0
      %3657 = vmatmul.mubr.f32.gmra.mrb[0].mxu0 %v3476
      %v3658 = vpop.f32.mrb[0].mxu0
      %v3659 = vadd.f32 %v3446, %v3658
      %v3660 = vpop.f32.mrb[0].mxu0
      %3661 = vmatprep.mubr.f32.mxu0 0.0
      %3662 = vmatmul.mubr.f32.gmra.mrb[0].mxu0 %v3479
      %v3663 = vpop.f32.mrb[0].mxu0
      %v3664 = vadd.f32 %v3446, %v3663
      %v3665 = vpop.f32.mrb[0].mxu0
      %3666 = vmatprep.mubr.f32.mxu0 0.0
      %3667 = vmatmul.mubr.f32.gmra.mrb[0].mxu0 %v3482
      %v3668 = vpop.f32.mrb[0].mxu0
      %v3669 = vadd.f32 %v3446, %v3668
      %v3670 = vpop.f32.mrb[0].mxu0
      %3671 = vmatprep.mubr.f32.mxu0 0.0
      %3672 = vmatmul.mubr.f32.gmra.mrb[0].mxu0 %v3485
      %v3673 = vpop.f32.mrb[0].mxu0
      %v3674 = vadd.f32 %v3446, %v3673
      %v3675 = vpop.f32.mrb[0].mxu0
      %3676 = vmatprep.mubr.f32.mxu0 0.0
      %3677 = vmatmul.mubr.f32.gmra.mrb[0].mxu0 %v3488
      %v3678 = vpop.f32.mrb[0].mxu0
      %v3679 = vadd.f32 %v3446, %v3678
      %v3680 = vpop.f32.mrb[0].mxu0
      %3681 = vmatprep.mubr.f32.mxu0 0.0
      %3682 = vmatmul.mubr.f32.gmra.mrb[0].mxu0 %v3491
      %v3683 = vpop.f32.mrb[0].mxu0
      %v3684 = vadd.f32 %v3446, %v3683
      %v3685 = vpop.f32.mrb[0].mxu0
      %3686 = vmatprep.mubr.f32.mxu0 0.0
      %3687 = vmatmul.mubr.f32.gmra.mrb[0].mxu0 %v3494
      %v3688 = vpop.f32.mrb[0].mxu0
      %v3689 = vadd.f32 %v3446, %v3688
      %v3690 = vpop.f32.mrb[0].mxu0
      %3691 = vmatprep.mubr.f32.mxu0 0.0
      %3692 = vmatmul.mubr.f32.gmra.mrb[0].mxu0 %v3497
      %v3693 = vpop.f32.mrb[0].mxu0
      %v3694 = vadd.f32 %v3446, %v3693
      %v3695 = vpop.f32.mrb[0].mxu0
      %3696 = vmatprep.mubr.f32.mxu0 0.0
      %3697 = vmatmul.mubr.f32.gmra.mrb[0].mxu0 %v3500
      %v3698 = vpop.f32.mrb[0].mxu0
      %v3699 = vadd.f32 %v3446, %v3698
      %v3700 = vpop.f32.mrb[0].mxu0
      %3701 = vmatprep.mubr.f32.mxu0 0.0
      %3702 = vmatmul.mubr.f32.gmra.mrb[0].mxu0 %v3503
      %v3703 = vpop.f32.mrb[0].mxu0
      %v3704 = vadd.f32 %v3446, %v3703
      %v3705 = vpop.f32.mrb[0].mxu0
      %3706 = vmatprep.mubr.f32.mxu0 0.0
      %3707 = vmatmul.mubr.f32.gmra.mrb[0].mxu0 %v3506
      %v3708 = vpop.f32.mrb[0].mxu0
      %v3709 = vadd.f32 %v3446, %v3708
      %v3710 = vpop.f32.mrb[0].mxu0
      %3711 = vmatprep.mubr.f32.mxu0 0.0
      %3712 = vmatmul.mubr.f32.gmra.mrb[0].mxu0 %v3509
      %v3713 = vpop.f32.mrb[0].mxu0
      %v3714 = vadd.f32 %v3446, %v3713
      %v3715 = vpop.f32.mrb[0].mxu0
      %3716 = vmatprep.mubr.f32.mxu0 0.0
      %3717 = vmatmul.mubr.f32.gmra.mrb[0].mxu0 %v3512
      %v3718 = vpop.f32.mrb[0].mxu0
      %v3719 = vadd.f32 %v3446, %v3718
      %v3720 = vpop.f32.mrb[0].mxu0
      %3721 = vmatprep.mubr.f32.mxu0 0.0
      %3722 = vmatmul.mubr.f32.gmra.mrb[0].mxu0 %v3515
      %v3723 = vpop.f32.mrb[0].mxu0
      %v3724 = vadd.f32 %v3446, %v3723
      %v3725 = vpop.f32.mrb[0].mxu0
      %3726 = vmatprep.mubr.f32.mxu0 0.0
      %3727 = vmatmul.mubr.f32.gmra.mrb[0].mxu0 %v3518
      %v3728 = vpop.f32.mrb[0].mxu0
      %v3729 = vadd.f32 %v3446, %v3728
      %v3730 = vpop.f32.mrb[0].mxu0
      %3731 = vmatprep.mubr.f32.mxu0 0.0
      %3732 = vmatmul.mubr.f32.gmra.mrb[0].mxu0 %v3521
      %v3733 = vpop.f32.mrb[0].mxu0
      %v3734 = vadd.f32 %v3446, %v3733
      %v3735 = vpop.f32.mrb[0].mxu0
      %3736 = vmatprep.mubr.f32.mxu0 0.0
      %3737 = vmatmul.mubr.f32.gmra.mrb[0].mxu0 %v3524
      %v3738 = vpop.f32.mrb[0].mxu0
      %v3739 = vadd.f32 %v3446, %v3738
      %v3740 = vpop.f32.mrb[0].mxu0
      %3741 = vmatprep.mubr.f32.mxu0 0.0
      %3742 = vmatmul.mubr.f32.gmra.mrb[0].mxu0 %v3527
      %v3743 = vpop.f32.mrb[0].mxu0
      %v3744 = vadd.f32 %v3446, %v3743
      %v3745 = vpop.f32.mrb[0].mxu0
      %3746 = vmatprep.mubr.f32.mxu0 0.0
      %3747 = vmatmul.mubr.f32.gmra.mrb[0].mxu0 %v3530
      %v3748 = vpop.f32.mrb[0].mxu0
      %v3749 = vadd.f32 %v3446, %v3748
      %v3750 = vpop.f32.mrb[0].mxu0
      %3751 = vmatprep.mubr.f32.mxu0 0.0
      %3752 = vmatmul.mubr.f32.gmra.mrb[0].mxu0 %v3533
      %v3753 = vpop.f32.mrb[0].mxu0
      %v3754 = vadd.f32 %v3446, %v3753
      %v3755 = vpop.f32.mrb[0].mxu0
      %3756 = vmatprep.mubr.f32.mxu0 0.0
      %3757 = vmatmul.mubr.f32.gmra.mrb[0].mxu0 %v3536
      %v3758 = vpop.f32.mrb[0].mxu0
      %v3759 = vadd.f32 %v3446, %v3758
      %v3760 = vpop.f32.mrb[0].mxu0
      %3761 = vmatprep.mubr.f32.mxu0 0.0
      %3762 = vmatmul.mubr.f32.gmra.mrb[0].mxu0 %v3539
      %v3763 = vpop.f32.mrb[0].mxu0
      %v3764 = vadd.f32 %v3446, %v3763
      %v3765 = vpop.f32.mrb[0].mxu0
      %3766 = vmatprep.mubr.f32.mxu0 0.0
      %3767 = vmatmul.mubr.f32.gmra.mrb[0].mxu0 %v3542
      %v3768 = vpop.f32.mrb[0].mxu0
      %v3769 = vadd.f32 %v3446, %v3768
      %v3770 = vpop.f32.mrb[0].mxu0
      %3771 = vdwg.mxu0
      %v3772 = vadd.f32 %v3614, %v225
      %v3773 = vadd.f32 %v3619, %v226
      %v3774 = vadd.f32 %v3624, %v227
      %v3775 = vadd.f32 %v3629, %v228
      %v3776 = vadd.f32 %v3634, %v229
      %v3777 = vadd.f32 %v3639, %v230
      %v3778 = vadd.f32 %v3644, %v231
      %v3779 = vadd.f32 %v3649, %v232
      %v3780 = vadd.f32 %v3654, %v233
      %v3781 = vadd.f32 %v3659, %v234
      %v3782 = vadd.f32 %v3664, %v235
      %v3783 = vadd.f32 %v3669, %v236
      %v3784 = vadd.f32 %v3674, %v237
      %v3785 = vadd.f32 %v3679, %v238
      %v3786 = vadd.f32 %v3684, %v239
      %v3787 = vadd.f32 %v3689, %v240
      %v3788 = vadd.f32 %v3694, %v241
      %v3789 = vadd.f32 %v3699, %v242
      %v3790 = vadd.f32 %v3704, %v243
      %v3791 = vadd.f32 %v3709, %v244
      %v3792 = vadd.f32 %v3714, %v245
      %v3793 = vadd.f32 %v3719, %v246
      %v3794 = vadd.f32 %v3724, %v247
      %v3795 = vadd.f32 %v3729, %v248
      %v3796 = vadd.f32 %v3734, %v249
      %v3797 = vadd.f32 %v3739, %v250
      %v3798 = vadd.f32 %v3744, %v251
      %v3799 = vadd.f32 %v3749, %v252
      %v3800 = vadd.f32 %v3754, %v253
      %v3801 = vadd.f32 %v3759, %v254
      %v3802 = vadd.f32 %v3764, %v255
      %v3803 = vadd.f32 %v3769, %v256
      %v3804 = vmax.f32 %v3772, 0.0
      %v3805 = vmax.f32 %v3773, 0.0
      %v3806 = vmax.f32 %v3774, 0.0
      %v3807 = vmax.f32 %v3775, 0.0
      %v3808 = vmax.f32 %v3776, 0.0
      %v3809 = vmax.f32 %v3777, 0.0
      %v3810 = vmax.f32 %v3778, 0.0
      %v3811 = vmax.f32 %v3779, 0.0
      %v3812 = vmax.f32 %v3780, 0.0
      %v3813 = vmax.f32 %v3781, 0.0
      %v3814 = vmax.f32 %v3782, 0.0
      %v3815 = vmax.f32 %v3783, 0.0
      %v3816 = vmax.f32 %v3784, 0.0
      %v3817 = vmax.f32 %v3785, 0.0
      %v3818 = vmax.f32 %v3786, 0.0
      %v3819 = vmax.f32 %v3787, 0.0
      %v3820 = vmax.f32 %v3788, 0.0
      %v3821 = vmax.f32 %v3789, 0.0
      %v3822 = vmax.f32 %v3790, 0.0
      %v3823 = vmax.f32 %v3791, 0.0
      %v3824 = vmax.f32 %v3792, 0.0
      %v3825 = vmax.f32 %v3793, 0.0
      %v3826 = vmax.f32 %v3794, 0.0
      %v3827 = vmax.f32 %v3795, 0.0
      %v3828 = vmax.f32 %v3796, 0.0
      %v3829 = vmax.f32 %v3797, 0.0
      %v3830 = vmax.f32 %v3798, 0.0
      %v3831 = vmax.f32 %v3799, 0.0
      %v3832 = vmax.f32 %v3800, 0.0
      %v3833 = vmax.f32 %v3801, 0.0
      %v3834 = vmax.f32 %v3802, 0.0
      %v3835 = vmax.f32 %v3803, 0.0
      %3836 = vst.msk [vmem:[%s224] sm:$0xff] %vm257, %v3804
      %3837 = vst.msk [vmem:[%s224 + $0x8] sm:$0xff] %vm257, %v3805
      %3838 = vst.msk [vmem:[%s224 + $0x10] sm:$0xff] %vm257, %v3806
      %3839 = vst.msk [vmem:[%s224 + $0x18] sm:$0xff] %vm257, %v3807
      %3840 = vst.msk [vmem:[%s224 + $0x20] sm:$0xff] %vm257, %v3808
      %3841 = vst.msk [vmem:[%s224 + $0x28] sm:$0xff] %vm257, %v3809
      %3842 = vst.msk [vmem:[%s224 + $0x30] sm:$0xff] %vm257, %v3810
      %3843 = vst.msk [vmem:[%s224 + $0x38] sm:$0xff] %vm257, %v3811
      %3844 = vst.msk [vmem:[%s224 + $0x40] sm:$0xff] %vm257, %v3812
      %3845 = vst.msk [vmem:[%s224 + $0x48] sm:$0xff] %vm257, %v3813
      %3846 = vst.msk [vmem:[%s224 + $0x50] sm:$0xff] %vm257, %v3814
      %3847 = vst.msk [vmem:[%s224 + $0x58] sm:$0xff] %vm257, %v3815
      %3848 = vst.msk [vmem:[%s224 + $0x60] sm:$0xff] %vm257, %v3816
      %3849 = vst.msk [vmem:[%s224 + $0x68] sm:$0xff] %vm257, %v3817
      %3850 = vst.msk [vmem:[%s224 + $0x70] sm:$0xff] %vm257, %v3818
      %3851 = vst.msk [vmem:[%s224 + $0x78] sm:$0xff] %vm257, %v3819
      %3852 = vst.msk [vmem:[%s224 + $0x80] sm:$0xff] %vm257, %v3820
      %3853 = vst.msk [vmem:[%s224 + $0x88] sm:$0xff] %vm257, %v3821
      %3854 = vst.msk [vmem:[%s224 + $0x90] sm:$0xff] %vm257, %v3822
      %3855 = vst.msk [vmem:[%s224 + $0x98] sm:$0xff] %vm257, %v3823
      %3856 = vst.msk [vmem:[%s224 + $0xa0] sm:$0xff] %vm257, %v3824
      %3857 = vst.msk [vmem:[%s224 + $0xa8] sm:$0xff] %vm257, %v3825
      %3858 = vst.msk [vmem:[%s224 + $0xb0] sm:$0xff] %vm257, %v3826
      %3859 = vst.msk [vmem:[%s224 + $0xb8] sm:$0xff] %vm257, %v3827
      %3860 = vst.msk [vmem:[%s224 + $0xc0] sm:$0xff] %vm257, %v3828
      %3861 = vst.msk [vmem:[%s224 + $0xc8] sm:$0xff] %vm257, %v3829
      %3862 = vst.msk [vmem:[%s224 + $0xd0] sm:$0xff] %vm257, %v3830
      %3863 = vst.msk [vmem:[%s224 + $0xd8] sm:$0xff] %vm257, %v3831
      %3864 = vst.msk [vmem:[%s224 + $0xe0] sm:$0xff] %vm257, %v3832
      %3865 = vst.msk [vmem:[%s224 + $0xe8] sm:$0xff] %vm257, %v3833
      %3866 = vst.msk [vmem:[%s224 + $0xf0] sm:$0xff] %vm257, %v3834
      %3867 = vst.msk [vmem:[%s224 + $0xf8] sm:$0xff] %vm257, %v3835
      %p3868 = scmp.lt.s32.totalorder %s16, 1
      %s3869 = scalar_select %p3868, %s16, 1
      %s3870 = smul.addr %s3869, 32
      %s3871 = smul.addr %s3870, 8
      %s3872 = scalar_lea.vmem %s5, %s3871
      // Predicated region
      $region41: #{tpu_custom_call.1} parent=39 // pred_check
        %p3873 = pneg %p144
      $region42: #{tpu_custom_call.1} parent=39 // pred_check_branch
        %3875 = sbr.rel (%p3873) target = $region44
      $region43: #{tpu_custom_call.1} parent=39 // pred_region
        _
      $region44: #{tpu_custom_call.1} parent=39 // pred_fallthru
        _
    $region40: #{tpu_custom_call.1} parent=5 // pred_fallthru
      _
    %p3876 = scmp.le.s32.totalorder 2, %s11
    // Predicated region
    $region45: #{tpu_custom_call.1} parent=5 // pred_check
      %p3877 = pneg %p3876
    $region46: #{tpu_custom_call.1} parent=5 // pred_check_branch
      %3879 = sbr.rel (%p3877) target = $region48
    $region47: #{tpu_custom_call.1} parent=5 // pred_region
      %s3880 = ssub.s32 %s11, 2
      // Predicated region
      $region49: #{tpu_custom_call.1} parent=47 // pred_check
        %p3881 = pneg %p150
      $region50: #{tpu_custom_call.1} parent=47 // pred_check_branch
        %3883 = sbr.rel (%p3881) target = $region52
      $region51: #{tpu_custom_call.1} parent=47 // pred_region
        %p3884 = scmp.lt.s32.totalorder %s17, 1
        %s3885 = scalar_select %p3884, %s17, 1
        %s3886 = smul.addr %s3885, 32
        %s3887 = smul.addr %s3886, 8
        %s3888 = scalar_lea.vmem %s5, %s3887
      $region52: #{tpu_custom_call.1} parent=47 // pred_fallthru
        _
    $region48: #{tpu_custom_call.1} parent=5 // pred_fallthru
      _
  $region6: #{tpu_custom_call.1} parent=0 // loop_footer
    %s15 = sadd.s32 1, %s11
  $region7: #{tpu_custom_call.1} parent=0 // loop_footer_branch
    %10 = sbr.rel target = $region3
  $region8: #{tpu_custom_call.1} parent=0 // loop_exit
    _

</llo_original>
